<compile_context>
chip_gen: v6e
topology: v6e:2x2x1
jax: 0.10.0
libtpu: 0.0.40
codegen_flags: <defaults>
</compile_context>

<pallas_src>
import numpy as np
import jax
import jax.numpy as jnp
from jax.experimental import pallas as pl
from jax.experimental.pallas import tpu as pltpu


# --------------------------------------------------------------------------- #
# Compile-time constant selectors that turn the 5x5 conv weights into Toeplitz
# matmul weights.  The 4 leading variants p = ph*2 + pw are the 4 members of a
# 2x2 max-pool group (output row parity ph, output col parity pw).
# --------------------------------------------------------------------------- #
def _conv1_selector():
    # S1[p, d, j, u, a, b] = 1  iff  (d - ph == a) and (j - 2u - pw == b)
    #   d in 0..5 : row-shift block (kernel input row = 2t + d)
    #   j in 0..27: input column,  u in 0..11: pooled output column
    #   (a, b)    : 5x5 kernel tap
    ph = np.array([0, 0, 1, 1]); pw = np.array([0, 1, 0, 1])
    d = np.arange(6); j = np.arange(28); u = np.arange(12); k = np.arange(5)
    A = (d[None, :, None, None, None, None]
         - ph[:, None, None, None, None, None]
         == k[None, None, None, None, :, None])
    B = (j[None, None, :, None, None, None]
         - 2 * u[None, None, None, :, None, None]
         - pw[:, None, None, None, None, None]
         == k[None, None, None, None, None, :])
    return (A & B).astype(np.float32)                     # (4, 6, 28, 12, 5, 5)


def _conv2_selector():
    # S2[p, d, u, v, a, b] = 1 iff (d - ph == a) and (u - 2v - pw == b)
    #   u in 0..11: conv2 input column,  v in 0..3: pooled output column
    ph = np.array([0, 0, 1, 1]); pw = np.array([0, 1, 0, 1])
    d = np.arange(6); u = np.arange(12); v = np.arange(4); k = np.arange(5)
    A = (d[None, :, None, None, None, None]
         - ph[:, None, None, None, None, None]
         == k[None, None, None, None, :, None])
    B = (u[None, None, :, None, None, None]
         - 2 * v[None, None, None, :, None, None]
         - pw[:, None, None, None, None, None]
         == k[None, None, None, None, None, :])
    return (A & B).astype(np.float32)                     # (4, 6, 12, 4, 5, 5)


_S1 = _conv1_selector()
_S2 = _conv2_selector()


def _kernel_params(params):
    """Repack PyTorch-layout weights into MXU-friendly layouts (traceable)."""
    w1 = params["conv1_w"].reshape(6, 5, 5)                        # (c, a, b)
    w1t = jnp.einsum("pdjuab,cab->pdjuc", _S1, w1).reshape(4, 168, 72)
    b1t = jnp.tile(params["conv1_b"], 12).reshape(1, 72)           # lane = u*6+c
    w2 = params["conv2_w"]                                         # (o, ci, a, b)
    w2t = jnp.einsum("pduvab,ocab->pducvo", _S2, w2).reshape(4, 432, 64)
    b2t = jnp.tile(params["conv2_b"], 4).reshape(1, 64)            # lane = v*16+o
    # fc1 columns: PyTorch NCHW flatten index c*16 + h*4 + w  ->  kernel order
    # q = h*64 + w*16 + c (matches the kernel's flatten of the pooled conv2).
    fw1 = (params["fc1_w"].T.reshape(16, 4, 4, 120)
           .transpose(1, 2, 0, 3).reshape(256, 120))
    fb1 = params["fc1_b"].reshape(1, 120)
    fw2 = params["fc2_w"].T
    fb2 = params["fc2_b"].reshape(1, 84)
    fw3 = params["fc3_w"].T
    fb3 = params["fc3_b"].reshape(1, 10)
    return w1t, b1t, w2t, b2t, fw1, fb1, fw2, fb2, fw3, fb3


# --------------------------------------------------------------------------- #
# The fused kernel (one batch tile of TB samples per grid step).
#
# Row layouts (per sample):
#   x_ref : 32 rows  (28 real image rows + 4 zero pad)      lanes = W (28)
#   p1_ref: 16 rows  (t = 0..11 valid, 12..15 garbage)      lanes = u*6 + c (72)
#   p2_ref:  8 rows  (s = 0..3  valid,  4..7  garbage)      lanes = v*16 + o (64)
# Garbage rows are finite and provably never read by the valid-output paths.
# --------------------------------------------------------------------------- #
def _convnet_kernel(x_ref, w1t_ref, b1t_ref, w2t_ref, b2t_ref,
                    fw1_ref, fb1_ref, fw2_ref, fb2_ref, fw3_ref, fb3_ref,
                    out_ref, p1_ref, p2_ref):
    f32 = jnp.float32
    tb = x_ref.shape[0] // 32          # samples in this batch tile
    r1 = tb * 16                       # stage-1 rows (16-row period per sample)
    r2 = tb * 8                        # stage-2 rows ( 8-row period per sample)

    def shift_up(a, k):
        # result[r] = a[r + k]; wrapped rows only ever feed garbage output rows
        return jnp.concatenate([a[k:], a[:k]], axis=0)

    def pooled_conv(m, wt_ref, bias_ref):
        # conv + 2x2 max-pool + bias + ReLU.  Each wt_ref[p] is the Toeplitz
        # weight of one pool member; max(a_i + b) == max(a_i) + b.
        acc = jnp.maximum(
            jnp.dot(m, wt_ref[0], preferred_element_type=f32),
            jnp.dot(m, wt_ref[1], preferred_element_type=f32))
        acc = jnp.maximum(acc, jnp.dot(m, wt_ref[2], preferred_element_type=f32))
        acc = jnp.maximum(acc, jnp.dot(m, wt_ref[3], preferred_element_type=f32))
        return jnp.maximum(acc + bias_ref[...], 0.0)

    # ---- conv1 (1->6, 5x5) + maxpool 2x2 + relu ----------------------------
    xe = x_ref[pl.ds(0, r1, stride=2), :]          # rows 2t   of every sample
    xo = x_ref[pl.ds(1, r1, stride=2), :]          # rows 2t+1 of every sample
    m1 = jnp.concatenate(                          # block d holds rows 2t + d
        [xe, xo, shift_up(xe, 1), shift_up(xo, 1), shift_up(xe, 2), shift_up(xo, 2)],
        axis=1)                                    # (r1, 168)
    p1_ref[...] = pooled_conv(m1, w1t_ref, b1t_ref)            # (r1, 72)

    # ---- conv2 (6->16, 5x5) + maxpool 2x2 + relu ---------------------------
    pe = p1_ref[pl.ds(0, r2, stride=2), :]         # pooled rows 2s
    po = p1_ref[pl.ds(1, r2, stride=2), :]         # pooled rows 2s+1
    m2 = jnp.concatenate(                          # block d holds rows 2s + d
        [pe, po, shift_up(pe, 1), shift_up(po, 1), shift_up(pe, 2), shift_up(po, 2)],
        axis=1)                                    # (r2, 432)
    p2_ref[...] = pooled_conv(m2, w2t_ref, b2t_ref)            # (r2, 64)

    # ---- flatten to (tb, 256) and fc1 -> fc2 -> fc3 ------------------------
    flat = jnp.concatenate(                        # lane q = s*64 + v*16 + o
        [p2_ref[pl.ds(s, tb, stride=8), :] for s in range(4)], axis=1)
    h = jnp.maximum(jnp.dot(flat, fw1_ref[...], preferred_element_type=f32)
                    + fb1_ref[...], 0.0)
    h = jnp.maximum(jnp.dot(h, fw2_ref[...], preferred_element_type=f32)
                    + fb2_ref[...], 0.0)
    out_ref[...] = (jnp.dot(h, fw3_ref[...], preferred_element_type=f32)
                    + fb3_ref[...])


# --------------------------------------------------------------------------- #
# Wrapper
# --------------------------------------------------------------------------- #
def convnet_forward(params, x, *, max_batch_tile=64):
    B = x.shape[0]
    assert x.shape[1:] == (1, 28, 28), "convnet expects MNIST-shaped NCHW input"

    # Batch tile: a multiple of 8 dividing the padded batch.
    # TODO(synk): bf16 MXU-operand storage would allow a ~2x larger tile on v7x.
    b_pad = 8 * pl.cdiv(B, 8)
    tb = max_batch_tile
    while tb > 8 and b_pad % tb:
        tb //= 2
    grid = (b_pad // tb,)

    # (B,1,28,28) -> (B_pad*32, 28): W in lanes, 4 zero pad rows per sample so
    # all strided in-kernel row reads stay in bounds.
    x3 = x.reshape(B, 28, 28).astype(jnp.float32)
    xk = jnp.pad(x3, ((0, b_pad - B), (0, 4), (0, 0))).reshape(b_pad * 32, 28)

    ops = _kernel_params(params)
    # Weights: full blocks with constant index maps -> resident across steps.
    wspecs = [pl.BlockSpec(op.shape, lambda i, _nd=op.ndim: (0,) * _nd)
              for op in ops]

    out = pl.pallas_call(
        _convnet_kernel,
        out_shape=jax.ShapeDtypeStruct((b_pad, 10), jnp.float32),
        grid_spec=pltpu.PrefetchScalarGridSpec(
            num_scalar_prefetch=0,
            grid=grid,
            in_specs=[pl.BlockSpec((tb * 32, 28), lambda i: (i, 0))] + wspecs,
            out_specs=pl.BlockSpec((tb, 10), lambda i: (i, 0)),
            scratch_shapes=[
                pltpu.VMEM((tb * 16, 72), jnp.float32),   # pooled conv1
                pltpu.VMEM((tb * 8, 64), jnp.float32),    # pooled conv2
            ],
        ),
        compiler_params=pltpu.CompilerParams(
            dimension_semantics=("parallel",),
            vmem_limit_bytes=32 * 1024 * 1024),
    )(xk, *ops)
    return out[:B]


# ---------------------------- pure-JAX reference --------------------------- #
def convnet_reference(params, x):
    hi = jax.lax.Precision.HIGHEST

    def conv(x, w, b):
        y = jax.lax.conv_general_dilated(
            x, w, window_strides=(1, 1), padding="VALID",
            dimension_numbers=("NCHW", "OIHW", "NCHW"), precision=hi)
        return y + b.reshape(1, -1, 1, 1)

    def pool_relu(x):
        B, C, H, W = x.shape
        x = x.reshape(B, C, H // 2, 2, W // 2, 2).max(axis=(3, 5))
        return jnp.maximum(x, 0.0)

    x = pool_relu(conv(x, params["conv1_w"], params["conv1_b"]))
    x = pool_relu(conv(x, params["conv2_w"], params["conv2_b"]))
    x = x.reshape(x.shape[0], -1)
    x = jnp.maximum(jnp.dot(x, params["fc1_w"].T, precision=hi) + params["fc1_b"], 0.0)
    x = jnp.maximum(jnp.dot(x, params["fc2_w"].T, precision=hi) + params["fc2_b"], 0.0)
    return jnp.dot(x, params["fc3_w"].T, precision=hi) + params["fc3_b"]


# ------------------------------ param init --------------------------------- #
def init_params(key):
    def uinit(k, shape, fan_in):
        bound = 1.0 / np.sqrt(fan_in)
        return jax.random.uniform(k, shape, jnp.float32, -bound, bound)

    ks = jax.random.split(key, 10)
    return {
        "conv1_w": uinit(ks[0], (6, 1, 5, 5), 1 * 5 * 5),
        "conv1_b": uinit(ks[1], (6,), 1 * 5 * 5),
        "conv2_w": uinit(ks[2], (16, 6, 5, 5), 6 * 5 * 5),
        "conv2_b": uinit(ks[3], (16,), 6 * 5 * 5),
        "fc1_w": uinit(ks[4], (120, 256), 256),
        "fc1_b": uinit(ks[5], (120,), 256),
        "fc2_w": uinit(ks[6], (84, 120), 120),
        "fc2_b": uinit(ks[7], (84,), 120),
        "fc3_w": uinit(ks[8], (10, 84), 84),
        "fc3_b": uinit(ks[9], (10,), 84),
    }


if __name__ == "__main__":
    key = jax.random.PRNGKey(0)
    pkey, xkey = jax.random.split(key)
    params = init_params(pkey)
    # MNIST-shaped input (B, 1, 28, 28) so that 16*4*4 == 16*16 after the convs.
    x = jax.random.normal(xkey, (2, 1, 28, 28), jnp.float32)

    fwd = jax.jit(convnet_forward)
    out = jax.block_until_ready(fwd(params, x))
    assert out.shape == (2, 10)
    out_np = np.asarray(out)
    assert np.all(np.isfinite(out_np)), "kernel produced non-finite values"

    ref = np.asarray(convnet_reference(params, x))
    np.testing.assert_allclose(out_np, ref, rtol=2e-2, atol=2e-2)
    print("KERNEL_OK")
</pallas_src>

<mosaic_0001>
module attributes {stable_mosaic.version = 11 : i64} {
  func.func @_convnet_kernel(%arg0: i32, %arg1: memref<256x28xf32, #tpu.memory_space<vmem>>, %arg2: memref<4x168x72xf32, #tpu.memory_space<vmem>>, %arg3: memref<1x72xf32, #tpu.memory_space<vmem>>, %arg4: memref<4x432x64xf32, #tpu.memory_space<vmem>>, %arg5: memref<1x64xf32, #tpu.memory_space<vmem>>, %arg6: memref<256x120xf32, #tpu.memory_space<vmem>>, %arg7: memref<1x120xf32, #tpu.memory_space<vmem>>, %arg8: memref<120x84xf32, #tpu.memory_space<vmem>>, %arg9: memref<1x84xf32, #tpu.memory_space<vmem>>, %arg10: memref<84x10xf32, #tpu.memory_space<vmem>>, %arg11: memref<1x10xf32, #tpu.memory_space<vmem>>, %arg12: memref<8x10xf32, #tpu.memory_space<vmem>>, %arg13: memref<128x72xf32, #tpu.memory_space<vmem>>, %arg14: memref<64x64xf32, #tpu.memory_space<vmem>>) attributes {dimension_semantics = [#tpu.dimension_semantics<parallel>], iteration_bounds = array<i64: 1>, scalar_prefetch = 0 : i64, scratch_operands = 2 : i64, tpu.core_type = #tpu.core_type<tc>, window_params = [{transform_indices = @transform_0, window_bounds = array<i64: 256, 28>}, {pipeline_mode = #tpu.pipeline_mode<synchronous>, transform_indices = @transform_1, window_bounds = array<i64: 4, 168, 72>}, {pipeline_mode = #tpu.pipeline_mode<synchronous>, transform_indices = @transform_2, window_bounds = array<i64: 1, 72>}, {pipeline_mode = #tpu.pipeline_mode<synchronous>, transform_indices = @transform_3, window_bounds = array<i64: 4, 432, 64>}, {pipeline_mode = #tpu.pipeline_mode<synchronous>, transform_indices = @transform_4, window_bounds = array<i64: 1, 64>}, {pipeline_mode = #tpu.pipeline_mode<synchronous>, transform_indices = @transform_5, window_bounds = array<i64: 256, 120>}, {pipeline_mode = #tpu.pipeline_mode<synchronous>, transform_indices = @transform_6, window_bounds = array<i64: 1, 120>}, {pipeline_mode = #tpu.pipeline_mode<synchronous>, transform_indices = @transform_7, window_bounds = array<i64: 120, 84>}, {pipeline_mode = #tpu.pipeline_mode<synchronous>, transform_indices = @transform_8, window_bounds = array<i64: 1, 84>}, {pipeline_mode = #tpu.pipeline_mode<synchronous>, transform_indices = @transform_9, window_bounds = array<i64: 84, 10>}, {pipeline_mode = #tpu.pipeline_mode<synchronous>, transform_indices = @transform_10, window_bounds = array<i64: 1, 10>}, {transform_indices = @transform_11, window_bounds = array<i64: 8, 10>}]} {
    %c0 = arith.constant 0 : index
    %c0_0 = arith.constant 0 : index
    %0 = tpu.strided_load %arg1[%c0, %c0_0] {strides = array<i32: 2, 1>} : memref<256x28xf32, #tpu.memory_space<vmem>>, vector<128x28xf32>
    %c1 = arith.constant 1 : index
    %c0_1 = arith.constant 0 : index
    %1 = tpu.strided_load %arg1[%c1, %c0_1] {strides = array<i32: 2, 1>} : memref<256x28xf32, #tpu.memory_space<vmem>>, vector<128x28xf32>
    %2 = vector.extract_strided_slice %0 {offsets = [1, 0], sizes = [127, 28], strides = [1, 1]} : vector<128x28xf32> to vector<127x28xf32>
    %3 = vector.extract_strided_slice %0 {offsets = [0, 0], sizes = [1, 28], strides = [1, 1]} : vector<128x28xf32> to vector<1x28xf32>
    %4 = tpu.concatenate %2, %3 in 0 : vector<127x28xf32>, vector<1x28xf32> -> vector<128x28xf32>
    %5 = vector.extract_strided_slice %1 {offsets = [1, 0], sizes = [127, 28], strides = [1, 1]} : vector<128x28xf32> to vector<127x28xf32>
    %6 = vector.extract_strided_slice %1 {offsets = [0, 0], sizes = [1, 28], strides = [1, 1]} : vector<128x28xf32> to vector<1x28xf32>
    %7 = tpu.concatenate %5, %6 in 0 : vector<127x28xf32>, vector<1x28xf32> -> vector<128x28xf32>
    %8 = vector.extract_strided_slice %0 {offsets = [2, 0], sizes = [126, 28], strides = [1, 1]} : vector<128x28xf32> to vector<126x28xf32>
    %9 = vector.extract_strided_slice %0 {offsets = [0, 0], sizes = [2, 28], strides = [1, 1]} : vector<128x28xf32> to vector<2x28xf32>
    %10 = tpu.concatenate %8, %9 in 0 : vector<126x28xf32>, vector<2x28xf32> -> vector<128x28xf32>
    %11 = vector.extract_strided_slice %1 {offsets = [2, 0], sizes = [126, 28], strides = [1, 1]} : vector<128x28xf32> to vector<126x28xf32>
    %12 = vector.extract_strided_slice %1 {offsets = [0, 0], sizes = [2, 28], strides = [1, 1]} : vector<128x28xf32> to vector<2x28xf32>
    %13 = tpu.concatenate %11, %12 in 0 : vector<126x28xf32>, vector<2x28xf32> -> vector<128x28xf32>
    %14 = tpu.concatenate %0, %1, %4, %7, %10, %13 in 1 : vector<128x28xf32>, vector<128x28xf32>, vector<128x28xf32>, vector<128x28xf32>, vector<128x28xf32>, vector<128x28xf32> -> vector<128x168xf32>
    %c0_2 = arith.constant 0 : index
    %c0_3 = arith.constant 0 : index
    %c0_4 = arith.constant 0 : index
    %15 = vector.load %arg2[%c0_2, %c0_3, %c0_4] : memref<4x168x72xf32, #tpu.memory_space<vmem>>, vector<1x168x72xf32>
    %16 = vector.shape_cast %15 : vector<1x168x72xf32> to vector<168x72xf32>
    %cst = arith.constant dense<0.000000e+00> : vector<128x72xf32>
    %17 = tpu.matmul %14, %16, %cst {dimension_numbers = #tpu.dot_dimension_numbers<[1], [0], [0], [1], [0, 0, 1, 1], [], []>} : vector<128x168xf32>, vector<168x72xf32>, vector<128x72xf32> -> vector<128x72xf32>
    %c1_5 = arith.constant 1 : index
    %c0_6 = arith.constant 0 : index
    %c0_7 = arith.constant 0 : index
    %18 = vector.load %arg2[%c1_5, %c0_6, %c0_7] : memref<4x168x72xf32, #tpu.memory_space<vmem>>, vector<1x168x72xf32>
    %19 = vector.shape_cast %18 : vector<1x168x72xf32> to vector<168x72xf32>
    %cst_8 = arith.constant dense<0.000000e+00> : vector<128x72xf32>
    %20 = tpu.matmul %14, %19, %cst_8 {dimension_numbers = #tpu.dot_dimension_numbers<[1], [0], [0], [1], [0, 0, 1, 1], [], []>} : vector<128x168xf32>, vector<168x72xf32>, vector<128x72xf32> -> vector<128x72xf32>
    %21 = arith.maximumf %17, %20 : vector<128x72xf32>
    %c2 = arith.constant 2 : index
    %c0_9 = arith.constant 0 : index
    %c0_10 = arith.constant 0 : index
    %22 = vector.load %arg2[%c2, %c0_9, %c0_10] : memref<4x168x72xf32, #tpu.memory_space<vmem>>, vector<1x168x72xf32>
    %23 = vector.shape_cast %22 : vector<1x168x72xf32> to vector<168x72xf32>
    %cst_11 = arith.constant dense<0.000000e+00> : vector<128x72xf32>
    %24 = tpu.matmul %14, %23, %cst_11 {dimension_numbers = #tpu.dot_dimension_numbers<[1], [0], [0], [1], [0, 0, 1, 1], [], []>} : vector<128x168xf32>, vector<168x72xf32>, vector<128x72xf32> -> vector<128x72xf32>
    %25 = arith.maximumf %21, %24 : vector<128x72xf32>
    %c3 = arith.constant 3 : index
    %c0_12 = arith.constant 0 : index
    %c0_13 = arith.constant 0 : index
    %26 = vector.load %arg2[%c3, %c0_12, %c0_13] : memref<4x168x72xf32, #tpu.memory_space<vmem>>, vector<1x168x72xf32>
    %27 = vector.shape_cast %26 : vector<1x168x72xf32> to vector<168x72xf32>
    %cst_14 = arith.constant dense<0.000000e+00> : vector<128x72xf32>
    %28 = tpu.matmul %14, %27, %cst_14 {dimension_numbers = #tpu.dot_dimension_numbers<[1], [0], [0], [1], [0, 0, 1, 1], [], []>} : vector<128x168xf32>, vector<168x72xf32>, vector<128x72xf32> -> vector<128x72xf32>
    %29 = arith.maximumf %25, %28 : vector<128x72xf32>
    %c0_15 = arith.constant 0 : index
    %c0_16 = arith.constant 0 : index
    %30 = vector.load %arg3[%c0_15, %c0_16] : memref<1x72xf32, #tpu.memory_space<vmem>>, vector<1x72xf32>
    %31 = vector.broadcast %30 : vector<1x72xf32> to vector<128x72xf32>
    %32 = arith.addf %29, %31 : vector<128x72xf32>
    %cst_17 = arith.constant 0.000000e+00 : f32
    %33 = vector.broadcast %cst_17 : f32 to vector<128x72xf32>
    %34 = arith.maximumf %32, %33 : vector<128x72xf32>
    %c0_18 = arith.constant 0 : index
    %c0_19 = arith.constant 0 : index
    %35 = vector.load %arg13[%c0_18, %c0_19] : memref<128x72xf32, #tpu.memory_space<vmem>>, vector<128x72xf32>
    tpu.vector_store %arg13[%c0_18, %c0_19], %34 {strides = array<i32>} : memref<128x72xf32, #tpu.memory_space<vmem>>, vector<128x72xf32>,
    %c0_20 = arith.constant 0 : index
    %c0_21 = arith.constant 0 : index
    %36 = tpu.strided_load %arg13[%c0_20, %c0_21] {strides = array<i32: 2, 1>} : memref<128x72xf32, #tpu.memory_space<vmem>>, vector<64x72xf32>
    %c1_22 = arith.constant 1 : index
    %c0_23 = arith.constant 0 : index
    %37 = tpu.strided_load %arg13[%c1_22, %c0_23] {strides = array<i32: 2, 1>} : memref<128x72xf32, #tpu.memory_space<vmem>>, vector<64x72xf32>
    %38 = vector.extract_strided_slice %36 {offsets = [1, 0], sizes = [63, 72], strides = [1, 1]} : vector<64x72xf32> to vector<63x72xf32>
    %39 = vector.extract_strided_slice %36 {offsets = [0, 0], sizes = [1, 72], strides = [1, 1]} : vector<64x72xf32> to vector<1x72xf32>
    %40 = tpu.concatenate %38, %39 in 0 : vector<63x72xf32>, vector<1x72xf32> -> vector<64x72xf32>
    %41 = vector.extract_strided_slice %37 {offsets = [1, 0], sizes = [63, 72], strides = [1, 1]} : vector<64x72xf32> to vector<63x72xf32>
    %42 = vector.extract_strided_slice %37 {offsets = [0, 0], sizes = [1, 72], strides = [1, 1]} : vector<64x72xf32> to vector<1x72xf32>
    %43 = tpu.concatenate %41, %42 in 0 : vector<63x72xf32>, vector<1x72xf32> -> vector<64x72xf32>
    %44 = vector.extract_strided_slice %36 {offsets = [2, 0], sizes = [62, 72], strides = [1, 1]} : vector<64x72xf32> to vector<62x72xf32>
    %45 = vector.extract_strided_slice %36 {offsets = [0, 0], sizes = [2, 72], strides = [1, 1]} : vector<64x72xf32> to vector<2x72xf32>
    %46 = tpu.concatenate %44, %45 in 0 : vector<62x72xf32>, vector<2x72xf32> -> vector<64x72xf32>
    %47 = vector.extract_strided_slice %37 {offsets = [2, 0], sizes = [62, 72], strides = [1, 1]} : vector<64x72xf32> to vector<62x72xf32>
    %48 = vector.extract_strided_slice %37 {offsets = [0, 0], sizes = [2, 72], strides = [1, 1]} : vector<64x72xf32> to vector<2x72xf32>
    %49 = tpu.concatenate %47, %48 in 0 : vector<62x72xf32>, vector<2x72xf32> -> vector<64x72xf32>
    %50 = tpu.concatenate %36, %37, %40, %43, %46, %49 in 1 : vector<64x72xf32>, vector<64x72xf32>, vector<64x72xf32>, vector<64x72xf32>, vector<64x72xf32>, vector<64x72xf32> -> vector<64x432xf32>
    %c0_24 = arith.constant 0 : index
    %c0_25 = arith.constant 0 : index
    %c0_26 = arith.constant 0 : index
    %51 = vector.load %arg4[%c0_24, %c0_25, %c0_26] : memref<4x432x64xf32, #tpu.memory_space<vmem>>, vector<1x432x64xf32>
    %52 = vector.shape_cast %51 : vector<1x432x64xf32> to vector<432x64xf32>
    %cst_27 = arith.constant dense<0.000000e+00> : vector<64x64xf32>
    %53 = tpu.matmul %50, %52, %cst_27 {dimension_numbers = #tpu.dot_dimension_numbers<[1], [0], [0], [1], [0, 0, 1, 1], [], []>} : vector<64x432xf32>, vector<432x64xf32>, vector<64x64xf32> -> vector<64x64xf32>
    %c1_28 = arith.constant 1 : index
    %c0_29 = arith.constant 0 : index
    %c0_30 = arith.constant 0 : index
    %54 = vector.load %arg4[%c1_28, %c0_29, %c0_30] : memref<4x432x64xf32, #tpu.memory_space<vmem>>, vector<1x432x64xf32>
    %55 = vector.shape_cast %54 : vector<1x432x64xf32> to vector<432x64xf32>
    %cst_31 = arith.constant dense<0.000000e+00> : vector<64x64xf32>
    %56 = tpu.matmul %50, %55, %cst_31 {dimension_numbers = #tpu.dot_dimension_numbers<[1], [0], [0], [1], [0, 0, 1, 1], [], []>} : vector<64x432xf32>, vector<432x64xf32>, vector<64x64xf32> -> vector<64x64xf32>
    %57 = arith.maximumf %53, %56 : vector<64x64xf32>
    %c2_32 = arith.constant 2 : index
    %c0_33 = arith.constant 0 : index
    %c0_34 = arith.constant 0 : index
    %58 = vector.load %arg4[%c2_32, %c0_33, %c0_34] : memref<4x432x64xf32, #tpu.memory_space<vmem>>, vector<1x432x64xf32>
    %59 = vector.shape_cast %58 : vector<1x432x64xf32> to vector<432x64xf32>
    %cst_35 = arith.constant dense<0.000000e+00> : vector<64x64xf32>
    %60 = tpu.matmul %50, %59, %cst_35 {dimension_numbers = #tpu.dot_dimension_numbers<[1], [0], [0], [1], [0, 0, 1, 1], [], []>} : vector<64x432xf32>, vector<432x64xf32>, vector<64x64xf32> -> vector<64x64xf32>
    %61 = arith.maximumf %57, %60 : vector<64x64xf32>
    %c3_36 = arith.constant 3 : index
    %c0_37 = arith.constant 0 : index
    %c0_38 = arith.constant 0 : index
    %62 = vector.load %arg4[%c3_36, %c0_37, %c0_38] : memref<4x432x64xf32, #tpu.memory_space<vmem>>, vector<1x432x64xf32>
    %63 = vector.shape_cast %62 : vector<1x432x64xf32> to vector<432x64xf32>
    %cst_39 = arith.constant dense<0.000000e+00> : vector<64x64xf32>
    %64 = tpu.matmul %50, %63, %cst_39 {dimension_numbers = #tpu.dot_dimension_numbers<[1], [0], [0], [1], [0, 0, 1, 1], [], []>} : vector<64x432xf32>, vector<432x64xf32>, vector<64x64xf32> -> vector<64x64xf32>
    %65 = arith.maximumf %61, %64 : vector<64x64xf32>
    %c0_40 = arith.constant 0 : index
    %c0_41 = arith.constant 0 : index
    %66 = vector.load %arg5[%c0_40, %c0_41] : memref<1x64xf32, #tpu.memory_space<vmem>>, vector<1x64xf32>
    %67 = vector.broadcast %66 : vector<1x64xf32> to vector<64x64xf32>
    %68 = arith.addf %65, %67 : vector<64x64xf32>
    %cst_42 = arith.constant 0.000000e+00 : f32
    %69 = vector.broadcast %cst_42 : f32 to vector<64x64xf32>
    %70 = arith.maximumf %68, %69 : vector<64x64xf32>
    %c0_43 = arith.constant 0 : index
    %c0_44 = arith.constant 0 : index
    %71 = vector.load %arg14[%c0_43, %c0_44] : memref<64x64xf32, #tpu.memory_space<vmem>>, vector<64x64xf32>
    tpu.vector_store %arg14[%c0_43, %c0_44], %70 {strides = array<i32>} : memref<64x64xf32, #tpu.memory_space<vmem>>, vector<64x64xf32>,
    %c0_45 = arith.constant 0 : index
    %c0_46 = arith.constant 0 : index
    %72 = tpu.strided_load %arg14[%c0_45, %c0_46] {strides = array<i32: 8, 1>} : memref<64x64xf32, #tpu.memory_space<vmem>>, vector<8x64xf32>
    %c1_47 = arith.constant 1 : index
    %c0_48 = arith.constant 0 : index
    %73 = tpu.strided_load %arg14[%c1_47, %c0_48] {strides = array<i32: 8, 1>} : memref<64x64xf32, #tpu.memory_space<vmem>>, vector<8x64xf32>
    %c2_49 = arith.constant 2 : index
    %c0_50 = arith.constant 0 : index
    %74 = tpu.strided_load %arg14[%c2_49, %c0_50] {strides = array<i32: 8, 1>} : memref<64x64xf32, #tpu.memory_space<vmem>>, vector<8x64xf32>
    %c3_51 = arith.constant 3 : index
    %c0_52 = arith.constant 0 : index
    %75 = tpu.strided_load %arg14[%c3_51, %c0_52] {strides = array<i32: 8, 1>} : memref<64x64xf32, #tpu.memory_space<vmem>>, vector<8x64xf32>
    %76 = tpu.concatenate %72, %73, %74, %75 in 1 : vector<8x64xf32>, vector<8x64xf32>, vector<8x64xf32>, vector<8x64xf32> -> vector<8x256xf32>
    %c0_53 = arith.constant 0 : index
    %c0_54 = arith.constant 0 : index
    %77 = vector.load %arg6[%c0_53, %c0_54] : memref<256x120xf32, #tpu.memory_space<vmem>>, vector<256x120xf32>
    %cst_55 = arith.constant dense<0.000000e+00> : vector<8x120xf32>
    %78 = tpu.matmul %76, %77, %cst_55 {dimension_numbers = #tpu.dot_dimension_numbers<[1], [0], [0], [1], [0, 0, 1, 1], [], []>} : vector<8x256xf32>, vector<256x120xf32>, vector<8x120xf32> -> vector<8x120xf32>
    %c0_56 = arith.constant 0 : index
    %c0_57 = arith.constant 0 : index
    %79 = vector.load %arg7[%c0_56, %c0_57] : memref<1x120xf32, #tpu.memory_space<vmem>>, vector<1x120xf32>
    %80 = vector.broadcast %79 : vector<1x120xf32> to vector<8x120xf32>
    %81 = arith.addf %78, %80 : vector<8x120xf32>
    %cst_58 = arith.constant 0.000000e+00 : f32
    %82 = vector.broadcast %cst_58 : f32 to vector<8x120xf32>
    %83 = arith.maximumf %81, %82 : vector<8x120xf32>
    %c0_59 = arith.constant 0 : index
    %c0_60 = arith.constant 0 : index
    %84 = vector.load %arg8[%c0_59, %c0_60] : memref<120x84xf32, #tpu.memory_space<vmem>>, vector<120x84xf32>
    %cst_61 = arith.constant dense<0.000000e+00> : vector<8x84xf32>
    %85 = tpu.matmul %83, %84, %cst_61 {dimension_numbers = #tpu.dot_dimension_numbers<[1], [0], [0], [1], [0, 0, 1, 1], [], []>} : vector<8x120xf32>, vector<120x84xf32>, vector<8x84xf32> -> vector<8x84xf32>
    %c0_62 = arith.constant 0 : index
    %c0_63 = arith.constant 0 : index
    %86 = vector.load %arg9[%c0_62, %c0_63] : memref<1x84xf32, #tpu.memory_space<vmem>>, vector<1x84xf32>
    %87 = vector.broadcast %86 : vector<1x84xf32> to vector<8x84xf32>
    %88 = arith.addf %85, %87 : vector<8x84xf32>
    %cst_64 = arith.constant 0.000000e+00 : f32
    %89 = vector.broadcast %cst_64 : f32 to vector<8x84xf32>
    %90 = arith.maximumf %88, %89 : vector<8x84xf32>
    %c0_65 = arith.constant 0 : index
    %c0_66 = arith.constant 0 : index
    %91 = vector.load %arg10[%c0_65, %c0_66] : memref<84x10xf32, #tpu.memory_space<vmem>>, vector<84x10xf32>
    %cst_67 = arith.constant dense<0.000000e+00> : vector<8x10xf32>
    %92 = tpu.matmul %90, %91, %cst_67 {dimension_numbers = #tpu.dot_dimension_numbers<[1], [0], [0], [1], [0, 0, 1, 1], [], []>} : vector<8x84xf32>, vector<84x10xf32>, vector<8x10xf32> -> vector<8x10xf32>
    %c0_68 = arith.constant 0 : index
    %c0_69 = arith.constant 0 : index
    %93 = vector.load %arg11[%c0_68, %c0_69] : memref<1x10xf32, #tpu.memory_space<vmem>>, vector<1x10xf32>
    %94 = vector.broadcast %93 : vector<1x10xf32> to vector<8x10xf32>
    %95 = arith.addf %92, %94 : vector<8x10xf32>
    %c0_70 = arith.constant 0 : index
    %c0_71 = arith.constant 0 : index
    %96 = vector.load %arg12[%c0_70, %c0_71] : memref<8x10xf32, #tpu.memory_space<vmem>>, vector<8x10xf32>
    tpu.vector_store %arg12[%c0_70, %c0_71], %95 {strides = array<i32>} : memref<8x10xf32, #tpu.memory_space<vmem>>, vector<8x10xf32>,
    return
  }
  func.func @transform_0(%arg0: i32) -> (i32, i32) {
    %c0_i32 = arith.constant 0 : i32
    %c0_i32_0 = arith.constant 0 : i32
    return %arg0, %c0_i32 : i32, i32
  }
  func.func @transform_1(%arg0: i32) -> (i32, i32, i32) {
    %c0_i32 = arith.constant 0 : i32
    %c0_i32_0 = arith.constant 0 : i32
    %c0_i32_1 = arith.constant 0 : i32
    %c0_i32_2 = arith.constant 0 : i32
    return %c0_i32, %c0_i32_0, %c0_i32_1 : i32, i32, i32
  }
  func.func @transform_2(%arg0: i32) -> (i32, i32) {
    %c0_i32 = arith.constant 0 : i32
    %c0_i32_0 = arith.constant 0 : i32
    %c0_i32_1 = arith.constant 0 : i32
    return %c0_i32, %c0_i32_0 : i32, i32
  }
  func.func @transform_3(%arg0: i32) -> (i32, i32, i32) {
    %c0_i32 = arith.constant 0 : i32
    %c0_i32_0 = arith.constant 0 : i32
    %c0_i32_1 = arith.constant 0 : i32
    %c0_i32_2 = arith.constant 0 : i32
    return %c0_i32, %c0_i32_0, %c0_i32_1 : i32, i32, i32
  }
  func.func @transform_4(%arg0: i32) -> (i32, i32) {
    %c0_i32 = arith.constant 0 : i32
    %c0_i32_0 = arith.constant 0 : i32
    %c0_i32_1 = arith.constant 0 : i32
    return %c0_i32, %c0_i32_0 : i32, i32
  }
  func.func @transform_5(%arg0: i32) -> (i32, i32) {
    %c0_i32 = arith.constant 0 : i32
    %c0_i32_0 = arith.constant 0 : i32
    %c0_i32_1 = arith.constant 0 : i32
    return %c0_i32, %c0_i32_0 : i32, i32
  }
  func.func @transform_6(%arg0: i32) -> (i32, i32) {
    %c0_i32 = arith.constant 0 : i32
    %c0_i32_0 = arith.constant 0 : i32
    %c0_i32_1 = arith.constant 0 : i32
    return %c0_i32, %c0_i32_0 : i32, i32
  }
  func.func @transform_7(%arg0: i32) -> (i32, i32) {
    %c0_i32 = arith.constant 0 : i32
    %c0_i32_0 = arith.constant 0 : i32
    %c0_i32_1 = arith.constant 0 : i32
    return %c0_i32, %c0_i32_0 : i32, i32
  }
  func.func @transform_8(%arg0: i32) -> (i32, i32) {
    %c0_i32 = arith.constant 0 : i32
    %c0_i32_0 = arith.constant 0 : i32
    %c0_i32_1 = arith.constant 0 : i32
    return %c0_i32, %c0_i32_0 : i32, i32
  }
  func.func @transform_9(%arg0: i32) -> (i32, i32) {
    %c0_i32 = arith.constant 0 : i32
    %c0_i32_0 = arith.constant 0 : i32
    %c0_i32_1 = arith.constant 0 : i32
    return %c0_i32, %c0_i32_0 : i32, i32
  }
  func.func @transform_10(%arg0: i32) -> (i32, i32) {
    %c0_i32 = arith.constant 0 : i32
    %c0_i32_0 = arith.constant 0 : i32
    %c0_i32_1 = arith.constant 0 : i32
    return %c0_i32, %c0_i32_0 : i32, i32
  }
  func.func @transform_11(%arg0: i32) -> (i32, i32) {
    %c0_i32 = arith.constant 0 : i32
    %c0_i32_0 = arith.constant 0 : i32
    return %arg0, %c0_i32 : i32, i32
  }
}

</mosaic_0001>

<llo_original>
// kernel: tile.13
$region0: #{tile.13}
  #allocation0 [shape = 's32[1]{0}', space=sflag, size = 0x4, scoped, tag = 'scoped memory for tile.13']
  %s0 = inlined_call_operand.vmem [shape: f32[6], index: 0, kind: input, shape index: {}]
  %s1 = inlined_call_operand.vmem [shape: f32[12,6], index: 1, kind: output, shape index: {}]
  // Predicated region
  $region2: #{tile.13} parent=0 // pred_check
    _
  $region3: #{tile.13} parent=0 // pred_check_branch
    %3 = sbr.rel (0) target = $region5
  $region4: #{tile.13} parent=0 // pred_region
    _
  $region5: #{tile.13} parent=0 // pred_fallthru
    _
  %v4 = vld [vmem:[%s0] ss:$0 sm:$0xff]
  %5 = vst [vmem:[%s1] sm:$0xff] %v4
  %s6 = scalar_lea.vmem %s1, 8
  %7 = vst [vmem:[%s6] sm:$0xff] %v4

// kernel: tile.14
$region0: #{tile.14}
  %s0 = inlined_call_operand.vmem [shape: f32[12,6], index: 0, kind: input, shape index: {}]
  %s1 = inlined_call_operand.vmem [shape: f32[1,72], index: 1, kind: output, shape index: {}]
  $region1: #{tile.14} parent=0
    #allocation0 [shape = 'u8[4096]{0}', space=vmem, size = 0x1000, scoped, tag = 'scoped mem for output reshape']
    %v2 = vld [vmem:[%s0] sm:$0x1]
    %vm3 = vcmask 48128
    %4 = vst.msk [vmem:[#allocation0] sm:$0x1] %vm3, %v2
    %s5 = scalar_lea.vmem %s0, 11
    %v6 = vld [vmem:[%s5] sm:$0x1]
    %7 = vrot.lane.b32.xlu0 %v6, 66
    %v8 = vpop.permute.xlu0 %7
    %vm9 = vcmask 589328
    %10 = vst.msk [vmem:[#allocation0] sm:$0x1] %vm9, %v8
    %s11 = scalar_lea.vmem %s0, 10
    %v12 = vld [vmem:[%s11] sm:$0x1]
    %13 = vrot.lane.b32.xlu0 %v12, 60
    %v14 = vpop.permute.xlu0 %13
    %vm15 = vcmask 540128
    %16 = vst.msk [vmem:[#allocation0] sm:$0x1] %vm15, %v14
    %s17 = scalar_lea.vmem %s0, 9
    %v18 = vld [vmem:[%s17] sm:$0x1]
    %19 = vrot.lane.b32.xlu0 %v18, 54
    %v20 = vpop.permute.xlu0 %19
    %vm21 = vcmask 490928
    %22 = vst.msk [vmem:[#allocation0] sm:$0x1] %vm21, %v20
    %s23 = scalar_lea.vmem %s0, 8
    %v24 = vld [vmem:[%s23] sm:$0x1]
    %25 = vrot.lane.b32.xlu0 %v24, 48
    %v26 = vpop.permute.xlu0 %25
    %vm27 = vcmask 441728
    %28 = vst.msk [vmem:[#allocation0] sm:$0x1] %vm27, %v26
    %s29 = scalar_lea.vmem %s0, 7
    %v30 = vld [vmem:[%s29] sm:$0x1]
    %31 = vrot.lane.b32.xlu0 %v30, 42
    %v32 = vpop.permute.xlu0 %31
    %vm33 = vcmask 392528
    %34 = vst.msk [vmem:[#allocation0] sm:$0x1] %vm33, %v32
    %s35 = scalar_lea.vmem %s0, 6
    %v36 = vld [vmem:[%s35] sm:$0x1]
    %37 = vrot.lane.b32.xlu0 %v36, 36
    %v38 = vpop.permute.xlu0 %37
    %vm39 = vcmask 343328
    %40 = vst.msk [vmem:[#allocation0] sm:$0x1] %vm39, %v38
    %s41 = scalar_lea.vmem %s0, 5
    %v42 = vld [vmem:[%s41] sm:$0x1]
    %43 = vrot.lane.b32.xlu0 %v42, 30
    %v44 = vpop.permute.xlu0 %43
    %vm45 = vcmask 294128
    %46 = vst.msk [vmem:[#allocation0] sm:$0x1] %vm45, %v44
    %s47 = scalar_lea.vmem %s0, 4
    %v48 = vld [vmem:[%s47] sm:$0x1]
    %49 = vrot.lane.b32.xlu0 %v48, 24
    %v50 = vpop.permute.xlu0 %49
    %vm51 = vcmask 244928
    %52 = vst.msk [vmem:[#allocation0] sm:$0x1] %vm51, %v50
    %s53 = scalar_lea.vmem %s0, 3
    %v54 = vld [vmem:[%s53] sm:$0x1]
    %55 = vrot.lane.b32.xlu0 %v54, 18
    %v56 = vpop.permute.xlu0 %55
    %vm57 = vcmask 195728
    %58 = vst.msk [vmem:[#allocation0] sm:$0x1] %vm57, %v56
    %s59 = scalar_lea.vmem %s0, 2
    %v60 = vld [vmem:[%s59] sm:$0x1]
    %61 = vrot.lane.b32.xlu0 %v60, 12
    %v62 = vpop.permute.xlu0 %61
    %vm63 = vcmask 146528
    %64 = vst.msk [vmem:[#allocation0] sm:$0x1] %vm63, %v62
    %s65 = scalar_lea.vmem %s0, 1
    %v66 = vld [vmem:[%s65] sm:$0x1]
    %67 = vrot.lane.b32.xlu0 %v66, 6
    %v68 = vpop.permute.xlu0 %67
    %vm69 = vcmask 97328
    %70 = vst.msk [vmem:[#allocation0] sm:$0x1] %vm69, %v68
    %s72 = sshll.u32 1, 1
    %s73 = ssub.s32 %s72, 1
    %v75 = vld [vmem:[#allocation0] sm:%s73]
    %s76 = sshll.u32 1, 1
    %s77 = ssub.s32 %s76, 1
    %78 = vst [vmem:[%s1] sm:%s77] %v75

// kernel: tile.18
$region0: #{tile.18}
  #allocation0 [shape = 's32[1]{0}', space=sflag, size = 0x4, scoped, tag = 'scoped memory for tile.18']
  %s0 = inlined_call_operand.vmem [shape: f32[16], index: 0, kind: input, shape index: {}]
  %s1 = inlined_call_operand.vmem [shape: f32[4,16], index: 1, kind: output, shape index: {}]
  // Predicated region
  $region2: #{tile.18} parent=0 // pred_check
    _
  $region3: #{tile.18} parent=0 // pred_check_branch
    %3 = sbr.rel (0) target = $region5
  $region4: #{tile.18} parent=0 // pred_region
    _
  $region5: #{tile.18} parent=0 // pred_fallthru
    _
  %v4 = vld [vmem:[%s0] ss:$0 sm:$0xff]
  %5 = vst [vmem:[%s1] sm:$0xf] %v4

// kernel: tile.19
$region0: #{tile.19}
  %s0 = inlined_call_operand.vmem [shape: f32[4,16], index: 0, kind: input, shape index: {}]
  %s1 = inlined_call_operand.vmem [shape: f32[1,64], index: 1, kind: output, shape index: {}]
  $region1: #{tile.19} parent=0
    #allocation0 [shape = 'u8[4096]{0}', space=vmem, size = 0x1000, scoped, tag = 'scoped mem for output reshape']
    #allocation1 [shape = 'u8[4096]{0}', space=vmem, size = 0x1000, scoped, tag = 'scoped mem for input reshape']
    %s3 = sshll.u32 1, 4
    %s4 = ssub.s32 %s3, 1
    %v5 = vld [vmem:[%s0] sm:%s4]
    %6 = vst [vmem:[#allocation1] sm:%s4] %v5
    %v7 = vld [vmem:[#allocation1] sm:$0x1]
    %vm8 = vcmask 130048
    %9 = vst.msk [vmem:[#allocation0] sm:$0x1] %vm8, %v7
    %s10 = scalar_lea.vmem [#allocation1], 3
    %v11 = vld [vmem:[%s10] sm:$0x1]
    %12 = vrot.lane.b32.xlu0 %v11, 48
    %v13 = vpop.permute.xlu0 %12
    %vm14 = vcmask 523648
    %15 = vst.msk [vmem:[#allocation0] sm:$0x1] %vm14, %v13
    %s16 = scalar_lea.vmem [#allocation1], 2
    %v17 = vld [vmem:[%s16] sm:$0x1]
    %18 = vrot.lane.b32.xlu0 %v17, 32
    %v19 = vpop.permute.xlu0 %18
    %vm20 = vcmask 392448
    %21 = vst.msk [vmem:[#allocation0] sm:$0x1] %vm20, %v19
    %s22 = scalar_lea.vmem [#allocation1], 1
    %v23 = vld [vmem:[%s22] sm:$0x1]
    %24 = vrot.lane.b32.xlu0 %v23, 16
    %v25 = vpop.permute.xlu0 %24
    %vm26 = vcmask 261248
    %27 = vst.msk [vmem:[#allocation0] sm:$0x1] %vm26, %v25
    %s29 = sshll.u32 1, 1
    %s30 = ssub.s32 %s29, 1
    %v32 = vld [vmem:[#allocation0] sm:%s30]
    %s33 = sshll.u32 1, 1
    %s34 = ssub.s32 %s33, 1
    %35 = vst [vmem:[%s1] sm:%s34] %v32

// kernel: convnet_forward.1
$region0: #{convnet_forward.1}
  #allocation0 [shape = 'u32[]', space=smem, size = 0x4, offset = 0x4, fixed_abs, tag = 'smem constant byte address 0x4 - core index']
  #allocation1 [shape = 'u32[144,128]{1,0:T(1,128)}', space=vmem, size = 0x12000, scoped, tag = 'internal scratch']
  #allocation2 [shape = 'f32[128,72]{1,0:T(8,128)}', space=vmem, size = 0x10000, scoped, tag = 'scratch operand']
  #allocation3 [shape = 'f32[64,64]{1,0:T(8,128)}', space=vmem, size = 0x8000, scoped, tag = 'scratch operand']
  %s0 = inlined_call_operand.vmem [shape: f32[256,28], index: 0, kind: input, shape index: {}]
  %s1 = inlined_call_operand.vmem [shape: f32[4,168,72], index: 1, kind: input, shape index: {}]
  %s2 = inlined_call_operand.vmem [shape: f32[1,72], index: 2, kind: input, shape index: {}]
  %s3 = inlined_call_operand.vmem [shape: f32[4,432,64], index: 3, kind: input, shape index: {}]
  %s4 = inlined_call_operand.vmem [shape: f32[1,64], index: 4, kind: input, shape index: {}]
  %s5 = inlined_call_operand.vmem [shape: f32[256,120], index: 5, kind: input, shape index: {}]
  %s6 = inlined_call_operand.vmem [shape: f32[1,120], index: 6, kind: input, shape index: {}]
  %s7 = inlined_call_operand.vmem [shape: f32[120,84], index: 7, kind: input, shape index: {}]
  %s8 = inlined_call_operand.vmem [shape: f32[1,84], index: 8, kind: input, shape index: {}]
  %s9 = inlined_call_operand.vmem [shape: f32[84,10], index: 9, kind: input, shape index: {}]
  %s10 = inlined_call_operand.vmem [shape: f32[1,10], index: 10, kind: input, shape index: {}]
  %s11 = inlined_call_operand.vmem [shape: f32[8,10], index: 11, kind: output, shape index: {}]
  %s12 = sld [smem:[#allocation0]]
  $region54: #{convnet_forward.1} parent=0
    _
  %s14 = ssub.s32 1, %s12
  %s15 = scalar_select 0, %s14, %s12
  // Predicated region
  $region2: #{convnet_forward.1} parent=0 // pred_check
    _
  $region3: #{convnet_forward.1} parent=0 // pred_check_branch
    %17 = sbr.rel (0) target = $region5
  $region4: #{convnet_forward.1} parent=0 // pred_region
    _
  $region5: #{convnet_forward.1} parent=0 // pred_fallthru
    _
  // Predicated region
  $region6: #{convnet_forward.1} parent=0 // pred_check
    _
  $region7: #{convnet_forward.1} parent=0 // pred_check_branch
    %19 = sbr.rel (0) target = $region9
  $region8: #{convnet_forward.1} parent=0 // pred_region
    _
  $region9: #{convnet_forward.1} parent=0 // pred_fallthru
    _
  // Predicated region
  $region10: #{convnet_forward.1} parent=0 // pred_check
    _
  $region11: #{convnet_forward.1} parent=0 // pred_check_branch
    %21 = sbr.rel (0) target = $region13
  $region12: #{convnet_forward.1} parent=0 // pred_region
    _
  $region13: #{convnet_forward.1} parent=0 // pred_fallthru
    _
  // Predicated region
  $region14: #{convnet_forward.1} parent=0 // pred_check
    _
  $region15: #{convnet_forward.1} parent=0 // pred_check_branch
    %23 = sbr.rel (0) target = $region17
  $region16: #{convnet_forward.1} parent=0 // pred_region
    _
  $region17: #{convnet_forward.1} parent=0 // pred_fallthru
    _
  // Predicated region
  $region18: #{convnet_forward.1} parent=0 // pred_check
    _
  $region19: #{convnet_forward.1} parent=0 // pred_check_branch
    %25 = sbr.rel (0) target = $region21
  $region20: #{convnet_forward.1} parent=0 // pred_region
    _
  $region21: #{convnet_forward.1} parent=0 // pred_fallthru
    _
  // Predicated region
  $region22: #{convnet_forward.1} parent=0 // pred_check
    _
  $region23: #{convnet_forward.1} parent=0 // pred_check_branch
    %27 = sbr.rel (0) target = $region25
  $region24: #{convnet_forward.1} parent=0 // pred_region
    _
  $region25: #{convnet_forward.1} parent=0 // pred_fallthru
    _
  // Predicated region
  $region26: #{convnet_forward.1} parent=0 // pred_check
    _
  $region27: #{convnet_forward.1} parent=0 // pred_check_branch
    %29 = sbr.rel (0) target = $region29
  $region28: #{convnet_forward.1} parent=0 // pred_region
    _
  $region29: #{convnet_forward.1} parent=0 // pred_fallthru
    _
  // Predicated region
  $region30: #{convnet_forward.1} parent=0 // pred_check
    _
  $region31: #{convnet_forward.1} parent=0 // pred_check_branch
    %31 = sbr.rel (0) target = $region33
  $region32: #{convnet_forward.1} parent=0 // pred_region
    _
  $region33: #{convnet_forward.1} parent=0 // pred_fallthru
    _
  // Predicated region
  $region34: #{convnet_forward.1} parent=0 // pred_check
    _
  $region35: #{convnet_forward.1} parent=0 // pred_check_branch
    %33 = sbr.rel (0) target = $region37
  $region36: #{convnet_forward.1} parent=0 // pred_region
    _
  $region37: #{convnet_forward.1} parent=0 // pred_fallthru
    _
  // Predicated region
  $region38: #{convnet_forward.1} parent=0 // pred_check
    _
  $region39: #{convnet_forward.1} parent=0 // pred_check_branch
    %35 = sbr.rel (0) target = $region41
  $region40: #{convnet_forward.1} parent=0 // pred_region
    _
  $region41: #{convnet_forward.1} parent=0 // pred_fallthru
    _
  // Predicated region
  $region42: #{convnet_forward.1} parent=0 // pred_check
    _
  $region43: #{convnet_forward.1} parent=0 // pred_check_branch
    %37 = sbr.rel (0) target = $region45
  $region44: #{convnet_forward.1} parent=0 // pred_region
    _
  $region45: #{convnet_forward.1} parent=0 // pred_fallthru
    _
  %v38 = vld [vmem:[%s0] ss:$2 sm:$0xff]
  %s39 = scalar_lea.vmem %s0, 16
  %v40 = vld [vmem:[%s39] ss:$2 sm:$0xff]
  %s41 = scalar_lea.vmem %s0, 32
  %v42 = vld [vmem:[%s41] ss:$2 sm:$0xff]
  %s43 = scalar_lea.vmem %s0, 48
  %v44 = vld [vmem:[%s43] ss:$2 sm:$0xff]
  %s45 = scalar_lea.vmem %s0, 64
  %v46 = vld [vmem:[%s45] ss:$2 sm:$0xff]
  %s47 = scalar_lea.vmem %s0, 80
  %v48 = vld [vmem:[%s47] ss:$2 sm:$0xff]
  %s49 = scalar_lea.vmem %s0, 96
  %v50 = vld [vmem:[%s49] ss:$2 sm:$0xff]
  %s51 = scalar_lea.vmem %s0, 112
  %v52 = vld [vmem:[%s51] ss:$2 sm:$0xff]
  %s53 = scalar_lea.vmem %s0, 128
  %v54 = vld [vmem:[%s53] ss:$2 sm:$0xff]
  %s55 = scalar_lea.vmem %s0, 144
  %v56 = vld [vmem:[%s55] ss:$2 sm:$0xff]
  %s57 = scalar_lea.vmem %s0, 160
  %v58 = vld [vmem:[%s57] ss:$2 sm:$0xff]
  %s59 = scalar_lea.vmem %s0, 176
  %v60 = vld [vmem:[%s59] ss:$2 sm:$0xff]
  %s61 = scalar_lea.vmem %s0, 192
  %v62 = vld [vmem:[%s61] ss:$2 sm:$0xff]
  %s63 = scalar_lea.vmem %s0, 208
  %v64 = vld [vmem:[%s63] ss:$2 sm:$0xff]
  %s65 = scalar_lea.vmem %s0, 224
  %v66 = vld [vmem:[%s65] ss:$2 sm:$0xff]
  %s67 = scalar_lea.vmem %s0, 240
  %v68 = vld [vmem:[%s67] ss:$2 sm:$0xff]
  %s69 = scalar_lea.vmem %s0, 1
  %v70 = vld [vmem:[%s69] ss:$2 sm:$0xff]
  %s71 = scalar_lea.vmem %s0, 17
  %v72 = vld [vmem:[%s71] ss:$2 sm:$0xff]
  %s73 = scalar_lea.vmem %s0, 33
  %v74 = vld [vmem:[%s73] ss:$2 sm:$0xff]
  %s75 = scalar_lea.vmem %s0, 49
  %v76 = vld [vmem:[%s75] ss:$2 sm:$0xff]
  %s77 = scalar_lea.vmem %s0, 65
  %v78 = vld [vmem:[%s77] ss:$2 sm:$0xff]
  %s79 = scalar_lea.vmem %s0, 81
  %v80 = vld [vmem:[%s79] ss:$2 sm:$0xff]
  %s81 = scalar_lea.vmem %s0, 97
  %v82 = vld [vmem:[%s81] ss:$2 sm:$0xff]
  %s83 = scalar_lea.vmem %s0, 113
  %v84 = vld [vmem:[%s83] ss:$2 sm:$0xff]
  %s85 = scalar_lea.vmem %s0, 129
  %v86 = vld [vmem:[%s85] ss:$2 sm:$0xff]
  %s87 = scalar_lea.vmem %s0, 145
  %v88 = vld [vmem:[%s87] ss:$2 sm:$0xff]
  %s89 = scalar_lea.vmem %s0, 161
  %v90 = vld [vmem:[%s89] ss:$2 sm:$0xff]
  %s91 = scalar_lea.vmem %s0, 177
  %v92 = vld [vmem:[%s91] ss:$2 sm:$0xff]
  %s93 = scalar_lea.vmem %s0, 193
  %v94 = vld [vmem:[%s93] ss:$2 sm:$0xff]
  %s95 = scalar_lea.vmem %s0, 209
  %v96 = vld [vmem:[%s95] ss:$2 sm:$0xff]
  %s97 = scalar_lea.vmem %s0, 225
  %v98 = vld [vmem:[%s97] ss:$2 sm:$0xff]
  %s99 = scalar_lea.vmem %s0, 241
  %v100 = vld [vmem:[%s99] ss:$2 sm:$0xff]
  %vm117 = vcmask 1046528
  %v118 = vrot.slane %v38, 1
  %v119 = vrot.slane %v40, 1
  %v120 = vsel %vm117, %v118, %v119
  %v121 = vrot.slane %v42, 1
  %v122 = vsel %vm117, %v119, %v121
  %v123 = vrot.slane %v44, 1
  %v124 = vsel %vm117, %v121, %v123
  %v125 = vrot.slane %v46, 1
  %v126 = vsel %vm117, %v123, %v125
  %v127 = vrot.slane %v48, 1
  %v128 = vsel %vm117, %v125, %v127
  %v129 = vrot.slane %v50, 1
  %v130 = vsel %vm117, %v127, %v129
  %v131 = vrot.slane %v52, 1
  %v132 = vsel %vm117, %v129, %v131
  %v133 = vrot.slane %v54, 1
  %v134 = vsel %vm117, %v131, %v133
  %v135 = vrot.slane %v56, 1
  %v136 = vsel %vm117, %v133, %v135
  %v137 = vrot.slane %v58, 1
  %v138 = vsel %vm117, %v135, %v137
  %v139 = vrot.slane %v60, 1
  %v140 = vsel %vm117, %v137, %v139
  %v141 = vrot.slane %v62, 1
  %v142 = vsel %vm117, %v139, %v141
  %v143 = vrot.slane %v64, 1
  %v144 = vsel %vm117, %v141, %v143
  %v145 = vrot.slane %v66, 1
  %v146 = vsel %vm117, %v143, %v145
  %v147 = vrot.slane %v68, 1
  %v148 = vsel %vm117, %v145, %v147
  %v151 = vsel %vm117, %v147, %v118
  %v168 = vrot.slane %v70, 1
  %v169 = vrot.slane %v72, 1
  %v170 = vsel %vm117, %v168, %v169
  %v171 = vrot.slane %v74, 1
  %v172 = vsel %vm117, %v169, %v171
  %v173 = vrot.slane %v76, 1
  %v174 = vsel %vm117, %v171, %v173
  %v175 = vrot.slane %v78, 1
  %v176 = vsel %vm117, %v173, %v175
  %v177 = vrot.slane %v80, 1
  %v178 = vsel %vm117, %v175, %v177
  %v179 = vrot.slane %v82, 1
  %v180 = vsel %vm117, %v177, %v179
  %v181 = vrot.slane %v84, 1
  %v182 = vsel %vm117, %v179, %v181
  %v183 = vrot.slane %v86, 1
  %v184 = vsel %vm117, %v181, %v183
  %v185 = vrot.slane %v88, 1
  %v186 = vsel %vm117, %v183, %v185
  %v187 = vrot.slane %v90, 1
  %v188 = vsel %vm117, %v185, %v187
  %v189 = vrot.slane %v92, 1
  %v190 = vsel %vm117, %v187, %v189
  %v191 = vrot.slane %v94, 1
  %v192 = vsel %vm117, %v189, %v191
  %v193 = vrot.slane %v96, 1
  %v194 = vsel %vm117, %v191, %v193
  %v195 = vrot.slane %v98, 1
  %v196 = vsel %vm117, %v193, %v195
  %v197 = vrot.slane %v100, 1
  %v198 = vsel %vm117, %v195, %v197
  %v201 = vsel %vm117, %v197, %v168
  %vm202 = vcmask 1045504
  %v203 = vrot.slane %v38, 2
  %v204 = vrot.slane %v40, 2
  %v205 = vsel %vm202, %v203, %v204
  %v206 = vrot.slane %v42, 2
  %v207 = vsel %vm202, %v204, %v206
  %v208 = vrot.slane %v44, 2
  %v209 = vsel %vm202, %v206, %v208
  %v210 = vrot.slane %v46, 2
  %v211 = vsel %vm202, %v208, %v210
  %v212 = vrot.slane %v48, 2
  %v213 = vsel %vm202, %v210, %v212
  %v214 = vrot.slane %v50, 2
  %v215 = vsel %vm202, %v212, %v214
  %v216 = vrot.slane %v52, 2
  %v217 = vsel %vm202, %v214, %v216
  %v218 = vrot.slane %v54, 2
  %v219 = vsel %vm202, %v216, %v218
  %v220 = vrot.slane %v56, 2
  %v221 = vsel %vm202, %v218, %v220
  %v222 = vrot.slane %v58, 2
  %v223 = vsel %vm202, %v220, %v222
  %v224 = vrot.slane %v60, 2
  %v225 = vsel %vm202, %v222, %v224
  %v226 = vrot.slane %v62, 2
  %v227 = vsel %vm202, %v224, %v226
  %v228 = vrot.slane %v64, 2
  %v229 = vsel %vm202, %v226, %v228
  %v230 = vrot.slane %v66, 2
  %v231 = vsel %vm202, %v228, %v230
  %v232 = vrot.slane %v68, 2
  %v233 = vsel %vm202, %v230, %v232
  %v236 = vsel %vm202, %v232, %v203
  %v237 = vrot.slane %v70, 2
  %v238 = vrot.slane %v72, 2
  %v239 = vsel %vm202, %v237, %v238
  %v240 = vrot.slane %v74, 2
  %v241 = vsel %vm202, %v238, %v240
  %v242 = vrot.slane %v76, 2
  %v243 = vsel %vm202, %v240, %v242
  %v244 = vrot.slane %v78, 2
  %v245 = vsel %vm202, %v242, %v244
  %v246 = vrot.slane %v80, 2
  %v247 = vsel %vm202, %v244, %v246
  %v248 = vrot.slane %v82, 2
  %v249 = vsel %vm202, %v246, %v248
  %v250 = vrot.slane %v84, 2
  %v251 = vsel %vm202, %v248, %v250
  %v252 = vrot.slane %v86, 2
  %v253 = vsel %vm202, %v250, %v252
  %v254 = vrot.slane %v88, 2
  %v255 = vsel %vm202, %v252, %v254
  %v256 = vrot.slane %v90, 2
  %v257 = vsel %vm202, %v254, %v256
  %v258 = vrot.slane %v92, 2
  %v259 = vsel %vm202, %v256, %v258
  %v260 = vrot.slane %v94, 2
  %v261 = vsel %vm202, %v258, %v260
  %v262 = vrot.slane %v96, 2
  %v263 = vsel %vm202, %v260, %v262
  %v264 = vrot.slane %v98, 2
  %v265 = vsel %vm202, %v262, %v264
  %v266 = vrot.slane %v100, 2
  %v267 = vsel %vm202, %v264, %v266
  %v270 = vsel %vm202, %v266, %v237
  %271 = vrot.lane.b32.xlu0 %v70, 28
  %v272 = vpop.permute.xlu0 %271
  %273 = vrot.lane.b32.xlu0 %v72, 28
  %v274 = vpop.permute.xlu0 %273
  %275 = vrot.lane.b32.xlu0 %v74, 28
  %v276 = vpop.permute.xlu0 %275
  %277 = vrot.lane.b32.xlu0 %v76, 28
  %v278 = vpop.permute.xlu0 %277
  %279 = vrot.lane.b32.xlu0 %v78, 28
  %v280 = vpop.permute.xlu0 %279
  %281 = vrot.lane.b32.xlu0 %v80, 28
  %v282 = vpop.permute.xlu0 %281
  %283 = vrot.lane.b32.xlu0 %v82, 28
  %v284 = vpop.permute.xlu0 %283
  %285 = vrot.lane.b32.xlu0 %v84, 28
  %v286 = vpop.permute.xlu0 %285
  %287 = vrot.lane.b32.xlu0 %v86, 28
  %v288 = vpop.permute.xlu0 %287
  %289 = vrot.lane.b32.xlu0 %v88, 28
  %v290 = vpop.permute.xlu0 %289
  %291 = vrot.lane.b32.xlu0 %v90, 28
  %v292 = vpop.permute.xlu0 %291
  %293 = vrot.lane.b32.xlu0 %v92, 28
  %v294 = vpop.permute.xlu0 %293
  %295 = vrot.lane.b32.xlu0 %v94, 28
  %v296 = vpop.permute.xlu0 %295
  %297 = vrot.lane.b32.xlu0 %v96, 28
  %v298 = vpop.permute.xlu0 %297
  %299 = vrot.lane.b32.xlu0 %v98, 28
  %v300 = vpop.permute.xlu0 %299
  %301 = vrot.lane.b32.xlu0 %v100, 28
  %v302 = vpop.permute.xlu0 %301
  %320 = vrot.lane.b32.xlu0 %v120, 56
  %v321 = vpop.permute.xlu0 %320
  %322 = vrot.lane.b32.xlu0 %v122, 56
  %v323 = vpop.permute.xlu0 %322
  %324 = vrot.lane.b32.xlu0 %v124, 56
  %v325 = vpop.permute.xlu0 %324
  %326 = vrot.lane.b32.xlu0 %v126, 56
  %v327 = vpop.permute.xlu0 %326
  %328 = vrot.lane.b32.xlu0 %v128, 56
  %v329 = vpop.permute.xlu0 %328
  %330 = vrot.lane.b32.xlu0 %v130, 56
  %v331 = vpop.permute.xlu0 %330
  %332 = vrot.lane.b32.xlu0 %v132, 56
  %v333 = vpop.permute.xlu0 %332
  %334 = vrot.lane.b32.xlu0 %v134, 56
  %v335 = vpop.permute.xlu0 %334
  %336 = vrot.lane.b32.xlu0 %v136, 56
  %v337 = vpop.permute.xlu0 %336
  %338 = vrot.lane.b32.xlu0 %v138, 56
  %v339 = vpop.permute.xlu0 %338
  %340 = vrot.lane.b32.xlu0 %v140, 56
  %v341 = vpop.permute.xlu0 %340
  %342 = vrot.lane.b32.xlu0 %v142, 56
  %v343 = vpop.permute.xlu0 %342
  %344 = vrot.lane.b32.xlu0 %v144, 56
  %v345 = vpop.permute.xlu0 %344
  %346 = vrot.lane.b32.xlu0 %v146, 56
  %v347 = vpop.permute.xlu0 %346
  %348 = vrot.lane.b32.xlu0 %v148, 56
  %v349 = vpop.permute.xlu0 %348
  %350 = vrot.lane.b32.xlu0 %v151, 56
  %v351 = vpop.permute.xlu0 %350
  %369 = vrot.lane.b32.xlu0 %v170, 84
  %v370 = vpop.permute.xlu0 %369
  %371 = vrot.lane.b32.xlu0 %v172, 84
  %v372 = vpop.permute.xlu0 %371
  %373 = vrot.lane.b32.xlu0 %v174, 84
  %v374 = vpop.permute.xlu0 %373
  %375 = vrot.lane.b32.xlu0 %v176, 84
  %v376 = vpop.permute.xlu0 %375
  %377 = vrot.lane.b32.xlu0 %v178, 84
  %v378 = vpop.permute.xlu0 %377
  %379 = vrot.lane.b32.xlu0 %v180, 84
  %v380 = vpop.permute.xlu0 %379
  %381 = vrot.lane.b32.xlu0 %v182, 84
  %v382 = vpop.permute.xlu0 %381
  %383 = vrot.lane.b32.xlu0 %v184, 84
  %v384 = vpop.permute.xlu0 %383
  %385 = vrot.lane.b32.xlu0 %v186, 84
  %v386 = vpop.permute.xlu0 %385
  %387 = vrot.lane.b32.xlu0 %v188, 84
  %v388 = vpop.permute.xlu0 %387
  %389 = vrot.lane.b32.xlu0 %v190, 84
  %v390 = vpop.permute.xlu0 %389
  %391 = vrot.lane.b32.xlu0 %v192, 84
  %v392 = vpop.permute.xlu0 %391
  %393 = vrot.lane.b32.xlu0 %v194, 84
  %v394 = vpop.permute.xlu0 %393
  %395 = vrot.lane.b32.xlu0 %v196, 84
  %v396 = vpop.permute.xlu0 %395
  %397 = vrot.lane.b32.xlu0 %v198, 84
  %v398 = vpop.permute.xlu0 %397
  %399 = vrot.lane.b32.xlu0 %v201, 84
  %v400 = vpop.permute.xlu0 %399
  %418 = vrot.lane.b32.xlu0 %v205, 112
  %v419 = vpop.permute.xlu0 %418
  %420 = vrot.lane.b32.xlu0 %v207, 112
  %v421 = vpop.permute.xlu0 %420
  %422 = vrot.lane.b32.xlu0 %v209, 112
  %v423 = vpop.permute.xlu0 %422
  %424 = vrot.lane.b32.xlu0 %v211, 112
  %v425 = vpop.permute.xlu0 %424
  %426 = vrot.lane.b32.xlu0 %v213, 112
  %v427 = vpop.permute.xlu0 %426
  %428 = vrot.lane.b32.xlu0 %v215, 112
  %v429 = vpop.permute.xlu0 %428
  %430 = vrot.lane.b32.xlu0 %v217, 112
  %v431 = vpop.permute.xlu0 %430
  %432 = vrot.lane.b32.xlu0 %v219, 112
  %v433 = vpop.permute.xlu0 %432
  %434 = vrot.lane.b32.xlu0 %v221, 112
  %v435 = vpop.permute.xlu0 %434
  %436 = vrot.lane.b32.xlu0 %v223, 112
  %v437 = vpop.permute.xlu0 %436
  %438 = vrot.lane.b32.xlu0 %v225, 112
  %v439 = vpop.permute.xlu0 %438
  %440 = vrot.lane.b32.xlu0 %v227, 112
  %v441 = vpop.permute.xlu0 %440
  %442 = vrot.lane.b32.xlu0 %v229, 112
  %v443 = vpop.permute.xlu0 %442
  %444 = vrot.lane.b32.xlu0 %v231, 112
  %v445 = vpop.permute.xlu0 %444
  %446 = vrot.lane.b32.xlu0 %v233, 112
  %v447 = vpop.permute.xlu0 %446
  %448 = vrot.lane.b32.xlu0 %v236, 112
  %v449 = vpop.permute.xlu0 %448
  %467 = vrot.lane.b32.xlu0 %v239, 12
  %v468 = vpop.permute.xlu0 %467
  %469 = vrot.lane.b32.xlu0 %v241, 12
  %v470 = vpop.permute.xlu0 %469
  %471 = vrot.lane.b32.xlu0 %v243, 12
  %v472 = vpop.permute.xlu0 %471
  %473 = vrot.lane.b32.xlu0 %v245, 12
  %v474 = vpop.permute.xlu0 %473
  %475 = vrot.lane.b32.xlu0 %v247, 12
  %v476 = vpop.permute.xlu0 %475
  %477 = vrot.lane.b32.xlu0 %v249, 12
  %v478 = vpop.permute.xlu0 %477
  %479 = vrot.lane.b32.xlu0 %v251, 12
  %v480 = vpop.permute.xlu0 %479
  %481 = vrot.lane.b32.xlu0 %v253, 12
  %v482 = vpop.permute.xlu0 %481
  %483 = vrot.lane.b32.xlu0 %v255, 12
  %v484 = vpop.permute.xlu0 %483
  %485 = vrot.lane.b32.xlu0 %v257, 12
  %v486 = vpop.permute.xlu0 %485
  %487 = vrot.lane.b32.xlu0 %v259, 12
  %v488 = vpop.permute.xlu0 %487
  %489 = vrot.lane.b32.xlu0 %v261, 12
  %v490 = vpop.permute.xlu0 %489
  %491 = vrot.lane.b32.xlu0 %v263, 12
  %v492 = vpop.permute.xlu0 %491
  %493 = vrot.lane.b32.xlu0 %v265, 12
  %v494 = vpop.permute.xlu0 %493
  %495 = vrot.lane.b32.xlu0 %v267, 12
  %v496 = vpop.permute.xlu0 %495
  %497 = vrot.lane.b32.xlu0 %v270, 12
  %v498 = vpop.permute.xlu0 %497
  %vm515 = vcmask 228352
  %v516 = vsel %vm515, %v38, %v272
  %v517 = vsel %vm515, %v40, %v274
  %v518 = vsel %vm515, %v42, %v276
  %v519 = vsel %vm515, %v44, %v278
  %v520 = vsel %vm515, %v46, %v280
  %v521 = vsel %vm515, %v48, %v282
  %v522 = vsel %vm515, %v50, %v284
  %v523 = vsel %vm515, %v52, %v286
  %v524 = vsel %vm515, %v54, %v288
  %v525 = vsel %vm515, %v56, %v290
  %v526 = vsel %vm515, %v58, %v292
  %v527 = vsel %vm515, %v60, %v294
  %v528 = vsel %vm515, %v62, %v296
  %v529 = vsel %vm515, %v64, %v298
  %v530 = vsel %vm515, %v66, %v300
  %v531 = vsel %vm515, %v68, %v302
  %vm532 = vcmask 457728
  %v533 = vsel %vm532, %v516, %v321
  %v534 = vsel %vm532, %v517, %v323
  %v535 = vsel %vm532, %v518, %v325
  %v536 = vsel %vm532, %v519, %v327
  %v537 = vsel %vm532, %v520, %v329
  %v538 = vsel %vm532, %v521, %v331
  %v539 = vsel %vm532, %v522, %v333
  %v540 = vsel %vm532, %v523, %v335
  %v541 = vsel %vm532, %v524, %v337
  %v542 = vsel %vm532, %v525, %v339
  %v543 = vsel %vm532, %v526, %v341
  %v544 = vsel %vm532, %v527, %v343
  %v545 = vsel %vm532, %v528, %v345
  %v546 = vsel %vm532, %v529, %v347
  %v547 = vsel %vm532, %v530, %v349
  %v548 = vsel %vm532, %v531, %v351
  %vm549 = vcmask 687104
  %v550 = vsel %vm549, %v533, %v370
  %v551 = vsel %vm549, %v534, %v372
  %v552 = vsel %vm549, %v535, %v374
  %v553 = vsel %vm549, %v536, %v376
  %v554 = vsel %vm549, %v537, %v378
  %v555 = vsel %vm549, %v538, %v380
  %v556 = vsel %vm549, %v539, %v382
  %v557 = vsel %vm549, %v540, %v384
  %v558 = vsel %vm549, %v541, %v386
  %v559 = vsel %vm549, %v542, %v388
  %v560 = vsel %vm549, %v543, %v390
  %v561 = vsel %vm549, %v544, %v392
  %v562 = vsel %vm549, %v545, %v394
  %v563 = vsel %vm549, %v546, %v396
  %v564 = vsel %vm549, %v547, %v398
  %v565 = vsel %vm549, %v548, %v400
  %vm566 = vcmask 916480
  %v567 = vsel %vm566, %v550, %v419
  %v568 = vsel %vm566, %v551, %v421
  %v569 = vsel %vm566, %v552, %v423
  %v570 = vsel %vm566, %v553, %v425
  %v571 = vsel %vm566, %v554, %v427
  %v572 = vsel %vm566, %v555, %v429
  %v573 = vsel %vm566, %v556, %v431
  %v574 = vsel %vm566, %v557, %v433
  %v575 = vsel %vm566, %v558, %v435
  %v576 = vsel %vm566, %v559, %v437
  %v577 = vsel %vm566, %v560, %v439
  %v578 = vsel %vm566, %v561, %v441
  %v579 = vsel %vm566, %v562, %v443
  %v580 = vsel %vm566, %v563, %v445
  %v581 = vsel %vm566, %v564, %v447
  %v582 = vsel %vm566, %v565, %v449
  %vm583 = vcmask 97280
  %v584 = vsel %vm583, %v419, %v468
  %v585 = vsel %vm583, %v421, %v470
  %v586 = vsel %vm583, %v423, %v472
  %v587 = vsel %vm583, %v425, %v474
  %v588 = vsel %vm583, %v427, %v476
  %v589 = vsel %vm583, %v429, %v478
  %v590 = vsel %vm583, %v431, %v480
  %v591 = vsel %vm583, %v433, %v482
  %v592 = vsel %vm583, %v435, %v484
  %v593 = vsel %vm583, %v437, %v486
  %v594 = vsel %vm583, %v439, %v488
  %v595 = vsel %vm583, %v441, %v490
  %v596 = vsel %vm583, %v443, %v492
  %v597 = vsel %vm583, %v445, %v494
  %v598 = vsel %vm583, %v447, %v496
  %v599 = vsel %vm583, %v449, %v498
  %v600 = vld [vmem:[%s1] sm:$0xff]
  %v601 = vld [vmem:[%s1 + $0x8] sm:$0xff]
  %v602 = vld [vmem:[%s1 + $0x10] sm:$0xff]
  %v603 = vld [vmem:[%s1 + $0x18] sm:$0xff]
  %v604 = vld [vmem:[%s1 + $0x20] sm:$0xff]
  %v605 = vld [vmem:[%s1 + $0x28] sm:$0xff]
  %v606 = vld [vmem:[%s1 + $0x30] sm:$0xff]
  %v607 = vld [vmem:[%s1 + $0x38] sm:$0xff]
  %v608 = vld [vmem:[%s1 + $0x40] sm:$0xff]
  %v609 = vld [vmem:[%s1 + $0x48] sm:$0xff]
  %v610 = vld [vmem:[%s1 + $0x50] sm:$0xff]
  %v611 = vld [vmem:[%s1 + $0x58] sm:$0xff]
  %v612 = vld [vmem:[%s1 + $0x60] sm:$0xff]
  %v613 = vld [vmem:[%s1 + $0x68] sm:$0xff]
  %v614 = vld [vmem:[%s1 + $0x70] sm:$0xff]
  %v615 = vld [vmem:[%s1 + $0x78] sm:$0xff]
  %v616 = vld [vmem:[%s1 + $0x80] sm:$0xff]
  %v617 = vld [vmem:[%s1 + $0x88] sm:$0xff]
  %v618 = vld [vmem:[%s1 + $0x90] sm:$0xff]
  %v619 = vld [vmem:[%s1 + $0x98] sm:$0xff]
  %v620 = vld [vmem:[%s1 + $0xa0] sm:$0xff]
  %vm621 = vcmask 326656
  %v623 = vsel %vm621, %v584, 0
  %v626 = vsel %vm621, %v585, 0
  %v629 = vsel %vm621, %v586, 0
  %v632 = vsel %vm621, %v587, 0
  %v635 = vsel %vm621, %v588, 0
  %v638 = vsel %vm621, %v589, 0
  %v641 = vsel %vm621, %v590, 0
  %v644 = vsel %vm621, %v591, 0
  %v647 = vsel %vm621, %v592, 0
  %v650 = vsel %vm621, %v593, 0
  %v653 = vsel %vm621, %v594, 0
  %v656 = vsel %vm621, %v595, 0
  %v659 = vsel %vm621, %v596, 0
  %v662 = vsel %vm621, %v597, 0
  %v665 = vsel %vm621, %v598, 0
  %v668 = vsel %vm621, %v599, 0
  %670 = vmatprep.subr.mxu0 0.0
  %671 = vmatpush1.msra.mxu0 %v615
  %672 = vmatprep.subr.mxu0 0.0
  %673 = vmatpush1.msra.mxu0 %v614
  %674 = vmatprep.subr.mxu0 0.0
  %675 = vmatpush1.msra.mxu0 %v613
  %676 = vmatprep.subr.mxu0 0.0
  %677 = vmatpush1.msra.mxu0 %v612
  %678 = vmatprep.subr.mxu0 0.0
  %679 = vmatpush1.msra.mxu0 %v611
  %680 = vmatprep.subr.mxu0 0.0
  %681 = vmatpush1.msra.mxu0 %v610
  %682 = vmatprep.subr.mxu0 0.0
  %683 = vmatpush1.msra.mxu0 %v609
  %684 = vmatprep.subr.mxu0 0.0
  %685 = vmatpush1.msra.mxu0 %v608
  %686 = vmatprep.subr.mxu0 0.0
  %687 = vmatpush1.msra.mxu0 %v607
  %688 = vmatprep.subr.mxu0 0.0
  %689 = vmatpush1.msra.mxu0 %v606
  %690 = vmatprep.subr.mxu0 0.0
  %691 = vmatpush1.msra.mxu0 %v605
  %692 = vmatprep.subr.mxu0 0.0
  %693 = vmatpush1.msra.mxu0 %v604
  %694 = vmatprep.subr.mxu0 0.0
  %695 = vmatpush1.msra.mxu0 %v603
  %696 = vmatprep.subr.mxu0 0.0
  %697 = vmatpush1.msra.mxu0 %v602
  %698 = vmatprep.subr.mxu0 0.0
  %699 = vmatpush1.msra.mxu0 %v601
  %700 = vmatprep.subr.mxu0 0.0
  %701 = vmatpush1.msra.mxu0 %v600
  %702 = vmatprep.subr.mxu0 0.0
  %703 = vmatpush2.msra.mxu0 0.0
  %704 = vmatprep.subr.mxu0 0.0
  %705 = vmatpush2.msra.mxu0 0.0
  %706 = vmatprep.subr.mxu0 0.0
  %707 = vmatpush2.msra.mxu0 0.0
  %708 = vmatprep.subr.mxu0 0.0
  %709 = vmatpush2.msra.mxu0 0.0
  %710 = vmatprep.subr.mxu0 0.0
  %711 = vmatpush2.msra.mxu0 0.0
  %712 = vmatprep.subr.mxu0 0.0
  %713 = vmatpush2.msra.mxu0 0.0
  %714 = vmatprep.subr.mxu0 0.0
  %715 = vmatpush2.msra.mxu0 0.0
  %716 = vmatprep.subr.mxu0 0.0
  %717 = vmatpush2.msra.mxu0 0.0
  %718 = vmatprep.subr.mxu0 0.0
  %719 = vmatpush2.msra.mxu0 0.0
  %720 = vmatprep.subr.mxu0 0.0
  %721 = vmatpush2.msra.mxu0 0.0
  %722 = vmatprep.subr.mxu0 0.0
  %723 = vmatpush2.msra.mxu0 0.0
  %724 = vmatprep.subr.mxu0 0.0
  %725 = vmatpush2.msra.mxu0 %v620
  %726 = vmatprep.subr.mxu0 0.0
  %727 = vmatpush2.msra.mxu0 %v619
  %728 = vmatprep.subr.mxu0 0.0
  %729 = vmatpush2.msra.mxu0 %v618
  %730 = vmatprep.subr.mxu0 0.0
  %731 = vmatpush2.msra.mxu0 %v617
  %732 = vmatprep.subr.mxu0 0.0
  %733 = vmatpush2.msra.mxu0 %v616
  %734 = vmatprep.mubr.f32.mxu0 %v623
  %735 = vmatmul.mubr.f32.gmra.mxu0 %v567
  %v736 = vpop.f32.mrf.mxu0
  %v737 = vadd.f32 0.0, %v736
  %v738 = vpop.f32.mrf.mxu0
  %739 = vmatprep.mubr.f32.mxu0 %v626
  %740 = vmatmul.mubr.f32.gmra.mxu0 %v568
  %v741 = vpop.f32.mrf.mxu0
  %v742 = vadd.f32 0.0, %v741
  %v743 = vpop.f32.mrf.mxu0
  %744 = vmatprep.mubr.f32.mxu0 %v629
  %745 = vmatmul.mubr.f32.gmra.mxu0 %v569
  %v746 = vpop.f32.mrf.mxu0
  %v747 = vadd.f32 0.0, %v746
  %v748 = vpop.f32.mrf.mxu0
  %749 = vmatprep.mubr.f32.mxu0 %v632
  %750 = vmatmul.mubr.f32.gmra.mxu0 %v570
  %v751 = vpop.f32.mrf.mxu0
  %v752 = vadd.f32 0.0, %v751
  %v753 = vpop.f32.mrf.mxu0
  %754 = vmatprep.mubr.f32.mxu0 %v635
  %755 = vmatmul.mubr.f32.gmra.mxu0 %v571
  %v756 = vpop.f32.mrf.mxu0
  %v757 = vadd.f32 0.0, %v756
  %v758 = vpop.f32.mrf.mxu0
  %759 = vmatprep.mubr.f32.mxu0 %v638
  %760 = vmatmul.mubr.f32.gmra.mxu0 %v572
  %v761 = vpop.f32.mrf.mxu0
  %v762 = vadd.f32 0.0, %v761
  %v763 = vpop.f32.mrf.mxu0
  %764 = vmatprep.mubr.f32.mxu0 %v641
  %765 = vmatmul.mubr.f32.gmra.mxu0 %v573
  %v766 = vpop.f32.mrf.mxu0
  %v767 = vadd.f32 0.0, %v766
  %v768 = vpop.f32.mrf.mxu0
  %769 = vmatprep.mubr.f32.mxu0 %v644
  %770 = vmatmul.mubr.f32.gmra.mxu0 %v574
  %v771 = vpop.f32.mrf.mxu0
  %v772 = vadd.f32 0.0, %v771
  %v773 = vpop.f32.mrf.mxu0
  %774 = vmatprep.mubr.f32.mxu0 %v647
  %775 = vmatmul.mubr.f32.gmra.mxu0 %v575
  %v776 = vpop.f32.mrf.mxu0
  %v777 = vadd.f32 0.0, %v776
  %v778 = vpop.f32.mrf.mxu0
  %779 = vmatprep.mubr.f32.mxu0 %v650
  %780 = vmatmul.mubr.f32.gmra.mxu0 %v576
  %v781 = vpop.f32.mrf.mxu0
  %v782 = vadd.f32 0.0, %v781
  %v783 = vpop.f32.mrf.mxu0
  %784 = vmatprep.mubr.f32.mxu0 %v653
  %785 = vmatmul.mubr.f32.gmra.mxu0 %v577
  %v786 = vpop.f32.mrf.mxu0
  %v787 = vadd.f32 0.0, %v786
  %v788 = vpop.f32.mrf.mxu0
  %789 = vmatprep.mubr.f32.mxu0 %v656
  %790 = vmatmul.mubr.f32.gmra.mxu0 %v578
  %v791 = vpop.f32.mrf.mxu0
  %v792 = vadd.f32 0.0, %v791
  %v793 = vpop.f32.mrf.mxu0
  %794 = vmatprep.mubr.f32.mxu0 %v659
  %795 = vmatmul.mubr.f32.gmra.mxu0 %v579
  %v796 = vpop.f32.mrf.mxu0
  %v797 = vadd.f32 0.0, %v796
  %v798 = vpop.f32.mrf.mxu0
  %799 = vmatprep.mubr.f32.mxu0 %v662
  %800 = vmatmul.mubr.f32.gmra.mxu0 %v580
  %v801 = vpop.f32.mrf.mxu0
  %v802 = vadd.f32 0.0, %v801
  %v803 = vpop.f32.mrf.mxu0
  %804 = vmatprep.mubr.f32.mxu0 %v665
  %805 = vmatmul.mubr.f32.gmra.mxu0 %v581
  %v806 = vpop.f32.mrf.mxu0
  %v807 = vadd.f32 0.0, %v806
  %v808 = vpop.f32.mrf.mxu0
  %809 = vmatprep.mubr.f32.mxu0 %v668
  %810 = vmatmul.mubr.f32.gmra.mxu0 %v582
  %v811 = vpop.f32.mrf.mxu0
  %v812 = vadd.f32 0.0, %v811
  %v813 = vpop.f32.mrf.mxu0
  %814 = vdwg.mxu0
  %s815 = scalar_lea.vmem %s1, 168
  %v816 = vld [vmem:[%s815] sm:$0xff]
  %v817 = vld [vmem:[%s815 + $0x8] sm:$0xff]
  %v818 = vld [vmem:[%s815 + $0x10] sm:$0xff]
  %v819 = vld [vmem:[%s815 + $0x18] sm:$0xff]
  %v820 = vld [vmem:[%s815 + $0x20] sm:$0xff]
  %v821 = vld [vmem:[%s815 + $0x28] sm:$0xff]
  %v822 = vld [vmem:[%s815 + $0x30] sm:$0xff]
  %v823 = vld [vmem:[%s815 + $0x38] sm:$0xff]
  %v824 = vld [vmem:[%s815 + $0x40] sm:$0xff]
  %v825 = vld [vmem:[%s815 + $0x48] sm:$0xff]
  %v826 = vld [vmem:[%s815 + $0x50] sm:$0xff]
  %v827 = vld [vmem:[%s815 + $0x58] sm:$0xff]
  %v828 = vld [vmem:[%s815 + $0x60] sm:$0xff]
  %v829 = vld [vmem:[%s815 + $0x68] sm:$0xff]
  %v830 = vld [vmem:[%s815 + $0x70] sm:$0xff]
  %v831 = vld [vmem:[%s815 + $0x78] sm:$0xff]
  %v832 = vld [vmem:[%s815 + $0x80] sm:$0xff]
  %v833 = vld [vmem:[%s815 + $0x88] sm:$0xff]
  %v834 = vld [vmem:[%s815 + $0x90] sm:$0xff]
  %v835 = vld [vmem:[%s815 + $0x98] sm:$0xff]
  %v836 = vld [vmem:[%s815 + $0xa0] sm:$0xff]
  %837 = vmatprep.subr.mxu0 0.0
  %838 = vmatpush1.msra.mxu0 %v831
  %839 = vmatprep.subr.mxu0 0.0
  %840 = vmatpush1.msra.mxu0 %v830
  %841 = vmatprep.subr.mxu0 0.0
  %842 = vmatpush1.msra.mxu0 %v829
  %843 = vmatprep.subr.mxu0 0.0
  %844 = vmatpush1.msra.mxu0 %v828
  %845 = vmatprep.subr.mxu0 0.0
  %846 = vmatpush1.msra.mxu0 %v827
  %847 = vmatprep.subr.mxu0 0.0
  %848 = vmatpush1.msra.mxu0 %v826
  %849 = vmatprep.subr.mxu0 0.0
  %850 = vmatpush1.msra.mxu0 %v825
  %851 = vmatprep.subr.mxu0 0.0
  %852 = vmatpush1.msra.mxu0 %v824
  %853 = vmatprep.subr.mxu0 0.0
  %854 = vmatpush1.msra.mxu0 %v823
  %855 = vmatprep.subr.mxu0 0.0
  %856 = vmatpush1.msra.mxu0 %v822
  %857 = vmatprep.subr.mxu0 0.0
  %858 = vmatpush1.msra.mxu0 %v821
  %859 = vmatprep.subr.mxu0 0.0
  %860 = vmatpush1.msra.mxu0 %v820
  %861 = vmatprep.subr.mxu0 0.0
  %862 = vmatpush1.msra.mxu0 %v819
  %863 = vmatprep.subr.mxu0 0.0
  %864 = vmatpush1.msra.mxu0 %v818
  %865 = vmatprep.subr.mxu0 0.0
  %866 = vmatpush1.msra.mxu0 %v817
  %867 = vmatprep.subr.mxu0 0.0
  %868 = vmatpush1.msra.mxu0 %v816
  %869 = vmatprep.subr.mxu0 0.0
  %870 = vmatpush2.msra.mxu0 0.0
  %871 = vmatprep.subr.mxu0 0.0
  %872 = vmatpush2.msra.mxu0 0.0
  %873 = vmatprep.subr.mxu0 0.0
  %874 = vmatpush2.msra.mxu0 0.0
  %875 = vmatprep.subr.mxu0 0.0
  %876 = vmatpush2.msra.mxu0 0.0
  %877 = vmatprep.subr.mxu0 0.0
  %878 = vmatpush2.msra.mxu0 0.0
  %879 = vmatprep.subr.mxu0 0.0
  %880 = vmatpush2.msra.mxu0 0.0
  %881 = vmatprep.subr.mxu0 0.0
  %882 = vmatpush2.msra.mxu0 0.0
  %883 = vmatprep.subr.mxu0 0.0
  %884 = vmatpush2.msra.mxu0 0.0
  %885 = vmatprep.subr.mxu0 0.0
  %886 = vmatpush2.msra.mxu0 0.0
  %887 = vmatprep.subr.mxu0 0.0
  %888 = vmatpush2.msra.mxu0 0.0
  %889 = vmatprep.subr.mxu0 0.0
  %890 = vmatpush2.msra.mxu0 0.0
  %891 = vmatprep.subr.mxu0 0.0
  %892 = vmatpush2.msra.mxu0 %v836
  %893 = vmatprep.subr.mxu0 0.0
  %894 = vmatpush2.msra.mxu0 %v835
  %895 = vmatprep.subr.mxu0 0.0
  %896 = vmatpush2.msra.mxu0 %v834
  %897 = vmatprep.subr.mxu0 0.0
  %898 = vmatpush2.msra.mxu0 %v833
  %899 = vmatprep.subr.mxu0 0.0
  %900 = vmatpush2.msra.mxu0 %v832
  %901 = vmatprep.mubr.f32.mxu0 %v623
  %902 = vmatmul.mubr.f32.gmra.mxu0 %v567
  %v903 = vpop.f32.mrf.mxu0
  %v904 = vadd.f32 0.0, %v903
  %v905 = vpop.f32.mrf.mxu0
  %906 = vmatprep.mubr.f32.mxu0 %v626
  %907 = vmatmul.mubr.f32.gmra.mxu0 %v568
  %v908 = vpop.f32.mrf.mxu0
  %v909 = vadd.f32 0.0, %v908
  %v910 = vpop.f32.mrf.mxu0
  %911 = vmatprep.mubr.f32.mxu0 %v629
  %912 = vmatmul.mubr.f32.gmra.mxu0 %v569
  %v913 = vpop.f32.mrf.mxu0
  %v914 = vadd.f32 0.0, %v913
  %v915 = vpop.f32.mrf.mxu0
  %916 = vmatprep.mubr.f32.mxu0 %v632
  %917 = vmatmul.mubr.f32.gmra.mxu0 %v570
  %v918 = vpop.f32.mrf.mxu0
  %v919 = vadd.f32 0.0, %v918
  %v920 = vpop.f32.mrf.mxu0
  %921 = vmatprep.mubr.f32.mxu0 %v635
  %922 = vmatmul.mubr.f32.gmra.mxu0 %v571
  %v923 = vpop.f32.mrf.mxu0
  %v924 = vadd.f32 0.0, %v923
  %v925 = vpop.f32.mrf.mxu0
  %926 = vmatprep.mubr.f32.mxu0 %v638
  %927 = vmatmul.mubr.f32.gmra.mxu0 %v572
  %v928 = vpop.f32.mrf.mxu0
  %v929 = vadd.f32 0.0, %v928
  %v930 = vpop.f32.mrf.mxu0
  %931 = vmatprep.mubr.f32.mxu0 %v641
  %932 = vmatmul.mubr.f32.gmra.mxu0 %v573
  %v933 = vpop.f32.mrf.mxu0
  %v934 = vadd.f32 0.0, %v933
  %v935 = vpop.f32.mrf.mxu0
  %936 = vmatprep.mubr.f32.mxu0 %v644
  %937 = vmatmul.mubr.f32.gmra.mxu0 %v574
  %v938 = vpop.f32.mrf.mxu0
  %v939 = vadd.f32 0.0, %v938
  %v940 = vpop.f32.mrf.mxu0
  %941 = vmatprep.mubr.f32.mxu0 %v647
  %942 = vmatmul.mubr.f32.gmra.mxu0 %v575
  %v943 = vpop.f32.mrf.mxu0
  %v944 = vadd.f32 0.0, %v943
  %v945 = vpop.f32.mrf.mxu0
  %946 = vmatprep.mubr.f32.mxu0 %v650
  %947 = vmatmul.mubr.f32.gmra.mxu0 %v576
  %v948 = vpop.f32.mrf.mxu0
  %v949 = vadd.f32 0.0, %v948
  %v950 = vpop.f32.mrf.mxu0
  %951 = vmatprep.mubr.f32.mxu0 %v653
  %952 = vmatmul.mubr.f32.gmra.mxu0 %v577
  %v953 = vpop.f32.mrf.mxu0
  %v954 = vadd.f32 0.0, %v953
  %v955 = vpop.f32.mrf.mxu0
  %956 = vmatprep.mubr.f32.mxu0 %v656
  %957 = vmatmul.mubr.f32.gmra.mxu0 %v578
  %v958 = vpop.f32.mrf.mxu0
  %v959 = vadd.f32 0.0, %v958
  %v960 = vpop.f32.mrf.mxu0
  %961 = vmatprep.mubr.f32.mxu0 %v659
  %962 = vmatmul.mubr.f32.gmra.mxu0 %v579
  %v963 = vpop.f32.mrf.mxu0
  %v964 = vadd.f32 0.0, %v963
  %v965 = vpop.f32.mrf.mxu0
  %966 = vmatprep.mubr.f32.mxu0 %v662
  %967 = vmatmul.mubr.f32.gmra.mxu0 %v580
  %v968 = vpop.f32.mrf.mxu0
  %v969 = vadd.f32 0.0, %v968
  %v970 = vpop.f32.mrf.mxu0
  %971 = vmatprep.mubr.f32.mxu0 %v665
  %972 = vmatmul.mubr.f32.gmra.mxu0 %v581
  %v973 = vpop.f32.mrf.mxu0
  %v974 = vadd.f32 0.0, %v973
  %v975 = vpop.f32.mrf.mxu0
  %976 = vmatprep.mubr.f32.mxu0 %v668
  %977 = vmatmul.mubr.f32.gmra.mxu0 %v582
  %v978 = vpop.f32.mrf.mxu0
  %v979 = vadd.f32 0.0, %v978
  %v980 = vpop.f32.mrf.mxu0
  %981 = vdwg.mxu0
  %v982 = vmax.f32 %v737, %v904
  %v983 = vmax.f32 %v742, %v909
  %v984 = vmax.f32 %v747, %v914
  %v985 = vmax.f32 %v752, %v919
  %v986 = vmax.f32 %v757, %v924
  %v987 = vmax.f32 %v762, %v929
  %v988 = vmax.f32 %v767, %v934
  %v989 = vmax.f32 %v772, %v939
  %v990 = vmax.f32 %v777, %v944
  %v991 = vmax.f32 %v782, %v949
  %v992 = vmax.f32 %v787, %v954
  %v993 = vmax.f32 %v792, %v959
  %v994 = vmax.f32 %v797, %v964
  %v995 = vmax.f32 %v802, %v969
  %v996 = vmax.f32 %v807, %v974
  %v997 = vmax.f32 %v812, %v979
  %s998 = scalar_lea.vmem %s1, 336
  %v999 = vld [vmem:[%s998] sm:$0xff]
  %v1000 = vld [vmem:[%s998 + $0x8] sm:$0xff]
  %v1001 = vld [vmem:[%s998 + $0x10] sm:$0xff]
  %v1002 = vld [vmem:[%s998 + $0x18] sm:$0xff]
  %v1003 = vld [vmem:[%s998 + $0x20] sm:$0xff]
  %v1004 = vld [vmem:[%s998 + $0x28] sm:$0xff]
  %v1005 = vld [vmem:[%s998 + $0x30] sm:$0xff]
  %v1006 = vld [vmem:[%s998 + $0x38] sm:$0xff]
  %v1007 = vld [vmem:[%s998 + $0x40] sm:$0xff]
  %v1008 = vld [vmem:[%s998 + $0x48] sm:$0xff]
  %v1009 = vld [vmem:[%s998 + $0x50] sm:$0xff]
  %v1010 = vld [vmem:[%s998 + $0x58] sm:$0xff]
  %v1011 = vld [vmem:[%s998 + $0x60] sm:$0xff]
  %v1012 = vld [vmem:[%s998 + $0x68] sm:$0xff]
  %v1013 = vld [vmem:[%s998 + $0x70] sm:$0xff]
  %v1014 = vld [vmem:[%s998 + $0x78] sm:$0xff]
  %v1015 = vld [vmem:[%s998 + $0x80] sm:$0xff]
  %v1016 = vld [vmem:[%s998 + $0x88] sm:$0xff]
  %v1017 = vld [vmem:[%s998 + $0x90] sm:$0xff]
  %v1018 = vld [vmem:[%s998 + $0x98] sm:$0xff]
  %v1019 = vld [vmem:[%s998 + $0xa0] sm:$0xff]
  %1020 = vmatprep.subr.mxu0 0.0
  %1021 = vmatpush1.msra.mxu0 %v1014
  %1022 = vmatprep.subr.mxu0 0.0
  %1023 = vmatpush1.msra.mxu0 %v1013
  %1024 = vmatprep.subr.mxu0 0.0
  %1025 = vmatpush1.msra.mxu0 %v1012
  %1026 = vmatprep.subr.mxu0 0.0
  %1027 = vmatpush1.msra.mxu0 %v1011
  %1028 = vmatprep.subr.mxu0 0.0
  %1029 = vmatpush1.msra.mxu0 %v1010
  %1030 = vmatprep.subr.mxu0 0.0
  %1031 = vmatpush1.msra.mxu0 %v1009
  %1032 = vmatprep.subr.mxu0 0.0
  %1033 = vmatpush1.msra.mxu0 %v1008
  %1034 = vmatprep.subr.mxu0 0.0
  %1035 = vmatpush1.msra.mxu0 %v1007
  %1036 = vmatprep.subr.mxu0 0.0
  %1037 = vmatpush1.msra.mxu0 %v1006
  %1038 = vmatprep.subr.mxu0 0.0
  %1039 = vmatpush1.msra.mxu0 %v1005
  %1040 = vmatprep.subr.mxu0 0.0
  %1041 = vmatpush1.msra.mxu0 %v1004
  %1042 = vmatprep.subr.mxu0 0.0
  %1043 = vmatpush1.msra.mxu0 %v1003
  %1044 = vmatprep.subr.mxu0 0.0
  %1045 = vmatpush1.msra.mxu0 %v1002
  %1046 = vmatprep.subr.mxu0 0.0
  %1047 = vmatpush1.msra.mxu0 %v1001
  %1048 = vmatprep.subr.mxu0 0.0
  %1049 = vmatpush1.msra.mxu0 %v1000
  %1050 = vmatprep.subr.mxu0 0.0
  %1051 = vmatpush1.msra.mxu0 %v999
  %1052 = vmatprep.subr.mxu0 0.0
  %1053 = vmatpush2.msra.mxu0 0.0
  %1054 = vmatprep.subr.mxu0 0.0
  %1055 = vmatpush2.msra.mxu0 0.0
  %1056 = vmatprep.subr.mxu0 0.0
  %1057 = vmatpush2.msra.mxu0 0.0
  %1058 = vmatprep.subr.mxu0 0.0
  %1059 = vmatpush2.msra.mxu0 0.0
  %1060 = vmatprep.subr.mxu0 0.0
  %1061 = vmatpush2.msra.mxu0 0.0
  %1062 = vmatprep.subr.mxu0 0.0
  %1063 = vmatpush2.msra.mxu0 0.0
  %1064 = vmatprep.subr.mxu0 0.0
  %1065 = vmatpush2.msra.mxu0 0.0
  %1066 = vmatprep.subr.mxu0 0.0
  %1067 = vmatpush2.msra.mxu0 0.0
  %1068 = vmatprep.subr.mxu0 0.0
  %1069 = vmatpush2.msra.mxu0 0.0
  %1070 = vmatprep.subr.mxu0 0.0
  %1071 = vmatpush2.msra.mxu0 0.0
  %1072 = vmatprep.subr.mxu0 0.0
  %1073 = vmatpush2.msra.mxu0 0.0
  %1074 = vmatprep.subr.mxu0 0.0
  %1075 = vmatpush2.msra.mxu0 %v1019
  %1076 = vmatprep.subr.mxu0 0.0
  %1077 = vmatpush2.msra.mxu0 %v1018
  %1078 = vmatprep.subr.mxu0 0.0
  %1079 = vmatpush2.msra.mxu0 %v1017
  %1080 = vmatprep.subr.mxu0 0.0
  %1081 = vmatpush2.msra.mxu0 %v1016
  %1082 = vmatprep.subr.mxu0 0.0
  %1083 = vmatpush2.msra.mxu0 %v1015
  %1084 = vmatprep.mubr.f32.mxu0 %v623
  %1085 = vmatmul.mubr.f32.gmra.mxu0 %v567
  %v1086 = vpop.f32.mrf.mxu0
  %v1087 = vadd.f32 0.0, %v1086
  %v1088 = vpop.f32.mrf.mxu0
  %1089 = vmatprep.mubr.f32.mxu0 %v626
  %1090 = vmatmul.mubr.f32.gmra.mxu0 %v568
  %v1091 = vpop.f32.mrf.mxu0
  %v1092 = vadd.f32 0.0, %v1091
  %v1093 = vpop.f32.mrf.mxu0
  %1094 = vmatprep.mubr.f32.mxu0 %v629
  %1095 = vmatmul.mubr.f32.gmra.mxu0 %v569
  %v1096 = vpop.f32.mrf.mxu0
  %v1097 = vadd.f32 0.0, %v1096
  %v1098 = vpop.f32.mrf.mxu0
  %1099 = vmatprep.mubr.f32.mxu0 %v632
  %1100 = vmatmul.mubr.f32.gmra.mxu0 %v570
  %v1101 = vpop.f32.mrf.mxu0
  %v1102 = vadd.f32 0.0, %v1101
  %v1103 = vpop.f32.mrf.mxu0
  %1104 = vmatprep.mubr.f32.mxu0 %v635
  %1105 = vmatmul.mubr.f32.gmra.mxu0 %v571
  %v1106 = vpop.f32.mrf.mxu0
  %v1107 = vadd.f32 0.0, %v1106
  %v1108 = vpop.f32.mrf.mxu0
  %1109 = vmatprep.mubr.f32.mxu0 %v638
  %1110 = vmatmul.mubr.f32.gmra.mxu0 %v572
  %v1111 = vpop.f32.mrf.mxu0
  %v1112 = vadd.f32 0.0, %v1111
  %v1113 = vpop.f32.mrf.mxu0
  %1114 = vmatprep.mubr.f32.mxu0 %v641
  %1115 = vmatmul.mubr.f32.gmra.mxu0 %v573
  %v1116 = vpop.f32.mrf.mxu0
  %v1117 = vadd.f32 0.0, %v1116
  %v1118 = vpop.f32.mrf.mxu0
  %1119 = vmatprep.mubr.f32.mxu0 %v644
  %1120 = vmatmul.mubr.f32.gmra.mxu0 %v574
  %v1121 = vpop.f32.mrf.mxu0
  %v1122 = vadd.f32 0.0, %v1121
  %v1123 = vpop.f32.mrf.mxu0
  %1124 = vmatprep.mubr.f32.mxu0 %v647
  %1125 = vmatmul.mubr.f32.gmra.mxu0 %v575
  %v1126 = vpop.f32.mrf.mxu0
  %v1127 = vadd.f32 0.0, %v1126
  %v1128 = vpop.f32.mrf.mxu0
  %1129 = vmatprep.mubr.f32.mxu0 %v650
  %1130 = vmatmul.mubr.f32.gmra.mxu0 %v576
  %v1131 = vpop.f32.mrf.mxu0
  %v1132 = vadd.f32 0.0, %v1131
  %v1133 = vpop.f32.mrf.mxu0
  %1134 = vmatprep.mubr.f32.mxu0 %v653
  %1135 = vmatmul.mubr.f32.gmra.mxu0 %v577
  %v1136 = vpop.f32.mrf.mxu0
  %v1137 = vadd.f32 0.0, %v1136
  %v1138 = vpop.f32.mrf.mxu0
  %1139 = vmatprep.mubr.f32.mxu0 %v656
  %1140 = vmatmul.mubr.f32.gmra.mxu0 %v578
  %v1141 = vpop.f32.mrf.mxu0
  %v1142 = vadd.f32 0.0, %v1141
  %v1143 = vpop.f32.mrf.mxu0
  %1144 = vmatprep.mubr.f32.mxu0 %v659
  %1145 = vmatmul.mubr.f32.gmra.mxu0 %v579
  %v1146 = vpop.f32.mrf.mxu0
  %v1147 = vadd.f32 0.0, %v1146
  %v1148 = vpop.f32.mrf.mxu0
  %1149 = vmatprep.mubr.f32.mxu0 %v662
  %1150 = vmatmul.mubr.f32.gmra.mxu0 %v580
  %v1151 = vpop.f32.mrf.mxu0
  %v1152 = vadd.f32 0.0, %v1151
  %v1153 = vpop.f32.mrf.mxu0
  %1154 = vmatprep.mubr.f32.mxu0 %v665
  %1155 = vmatmul.mubr.f32.gmra.mxu0 %v581
  %v1156 = vpop.f32.mrf.mxu0
  %v1157 = vadd.f32 0.0, %v1156
  %v1158 = vpop.f32.mrf.mxu0
  %1159 = vmatprep.mubr.f32.mxu0 %v668
  %1160 = vmatmul.mubr.f32.gmra.mxu0 %v582
  %v1161 = vpop.f32.mrf.mxu0
  %v1162 = vadd.f32 0.0, %v1161
  %v1163 = vpop.f32.mrf.mxu0
  %1164 = vdwg.mxu0
  %v1165 = vmax.f32 %v982, %v1087
  %v1166 = vmax.f32 %v983, %v1092
  %v1167 = vmax.f32 %v984, %v1097
  %v1168 = vmax.f32 %v985, %v1102
  %v1169 = vmax.f32 %v986, %v1107
  %v1170 = vmax.f32 %v987, %v1112
  %v1171 = vmax.f32 %v988, %v1117
  %v1172 = vmax.f32 %v989, %v1122
  %v1173 = vmax.f32 %v990, %v1127
  %v1174 = vmax.f32 %v991, %v1132
  %v1175 = vmax.f32 %v992, %v1137
  %v1176 = vmax.f32 %v993, %v1142
  %v1177 = vmax.f32 %v994, %v1147
  %v1178 = vmax.f32 %v995, %v1152
  %v1179 = vmax.f32 %v996, %v1157
  %v1180 = vmax.f32 %v997, %v1162
  %s1181 = scalar_lea.vmem %s1, 504
  %v1182 = vld [vmem:[%s1181] sm:$0xff]
  %v1183 = vld [vmem:[%s1181 + $0x8] sm:$0xff]
  %v1184 = vld [vmem:[%s1181 + $0x10] sm:$0xff]
  %v1185 = vld [vmem:[%s1181 + $0x18] sm:$0xff]
  %v1186 = vld [vmem:[%s1181 + $0x20] sm:$0xff]
  %v1187 = vld [vmem:[%s1181 + $0x28] sm:$0xff]
  %v1188 = vld [vmem:[%s1181 + $0x30] sm:$0xff]
  %v1189 = vld [vmem:[%s1181 + $0x38] sm:$0xff]
  %v1190 = vld [vmem:[%s1181 + $0x40] sm:$0xff]
  %v1191 = vld [vmem:[%s1181 + $0x48] sm:$0xff]
  %v1192 = vld [vmem:[%s1181 + $0x50] sm:$0xff]
  %v1193 = vld [vmem:[%s1181 + $0x58] sm:$0xff]
  %v1194 = vld [vmem:[%s1181 + $0x60] sm:$0xff]
  %v1195 = vld [vmem:[%s1181 + $0x68] sm:$0xff]
  %v1196 = vld [vmem:[%s1181 + $0x70] sm:$0xff]
  %v1197 = vld [vmem:[%s1181 + $0x78] sm:$0xff]
  %v1198 = vld [vmem:[%s1181 + $0x80] sm:$0xff]
  %v1199 = vld [vmem:[%s1181 + $0x88] sm:$0xff]
  %v1200 = vld [vmem:[%s1181 + $0x90] sm:$0xff]
  %v1201 = vld [vmem:[%s1181 + $0x98] sm:$0xff]
  %v1202 = vld [vmem:[%s1181 + $0xa0] sm:$0xff]
  %1203 = vmatprep.subr.mxu0 0.0
  %1204 = vmatpush1.msra.mxu0 %v1197
  %1205 = vmatprep.subr.mxu0 0.0
  %1206 = vmatpush1.msra.mxu0 %v1196
  %1207 = vmatprep.subr.mxu0 0.0
  %1208 = vmatpush1.msra.mxu0 %v1195
  %1209 = vmatprep.subr.mxu0 0.0
  %1210 = vmatpush1.msra.mxu0 %v1194
  %1211 = vmatprep.subr.mxu0 0.0
  %1212 = vmatpush1.msra.mxu0 %v1193
  %1213 = vmatprep.subr.mxu0 0.0
  %1214 = vmatpush1.msra.mxu0 %v1192
  %1215 = vmatprep.subr.mxu0 0.0
  %1216 = vmatpush1.msra.mxu0 %v1191
  %1217 = vmatprep.subr.mxu0 0.0
  %1218 = vmatpush1.msra.mxu0 %v1190
  %1219 = vmatprep.subr.mxu0 0.0
  %1220 = vmatpush1.msra.mxu0 %v1189
  %1221 = vmatprep.subr.mxu0 0.0
  %1222 = vmatpush1.msra.mxu0 %v1188
  %1223 = vmatprep.subr.mxu0 0.0
  %1224 = vmatpush1.msra.mxu0 %v1187
  %1225 = vmatprep.subr.mxu0 0.0
  %1226 = vmatpush1.msra.mxu0 %v1186
  %1227 = vmatprep.subr.mxu0 0.0
  %1228 = vmatpush1.msra.mxu0 %v1185
  %1229 = vmatprep.subr.mxu0 0.0
  %1230 = vmatpush1.msra.mxu0 %v1184
  %1231 = vmatprep.subr.mxu0 0.0
  %1232 = vmatpush1.msra.mxu0 %v1183
  %1233 = vmatprep.subr.mxu0 0.0
  %1234 = vmatpush1.msra.mxu0 %v1182
  %1235 = vmatprep.subr.mxu0 0.0
  %1236 = vmatpush2.msra.mxu0 0.0
  %1237 = vmatprep.subr.mxu0 0.0
  %1238 = vmatpush2.msra.mxu0 0.0
  %1239 = vmatprep.subr.mxu0 0.0
  %1240 = vmatpush2.msra.mxu0 0.0
  %1241 = vmatprep.subr.mxu0 0.0
  %1242 = vmatpush2.msra.mxu0 0.0
  %1243 = vmatprep.subr.mxu0 0.0
  %1244 = vmatpush2.msra.mxu0 0.0
  %1245 = vmatprep.subr.mxu0 0.0
  %1246 = vmatpush2.msra.mxu0 0.0
  %1247 = vmatprep.subr.mxu0 0.0
  %1248 = vmatpush2.msra.mxu0 0.0
  %1249 = vmatprep.subr.mxu0 0.0
  %1250 = vmatpush2.msra.mxu0 0.0
  %1251 = vmatprep.subr.mxu0 0.0
  %1252 = vmatpush2.msra.mxu0 0.0
  %1253 = vmatprep.subr.mxu0 0.0
  %1254 = vmatpush2.msra.mxu0 0.0
  %1255 = vmatprep.subr.mxu0 0.0
  %1256 = vmatpush2.msra.mxu0 0.0
  %1257 = vmatprep.subr.mxu0 0.0
  %1258 = vmatpush2.msra.mxu0 %v1202
  %1259 = vmatprep.subr.mxu0 0.0
  %1260 = vmatpush2.msra.mxu0 %v1201
  %1261 = vmatprep.subr.mxu0 0.0
  %1262 = vmatpush2.msra.mxu0 %v1200
  %1263 = vmatprep.subr.mxu0 0.0
  %1264 = vmatpush2.msra.mxu0 %v1199
  %1265 = vmatprep.subr.mxu0 0.0
  %1266 = vmatpush2.msra.mxu0 %v1198
  %1267 = vmatprep.mubr.f32.mxu0 %v623
  %1268 = vmatmul.mubr.f32.gmra.mxu0 %v567
  %v1269 = vpop.f32.mrf.mxu0
  %v1270 = vadd.f32 0.0, %v1269
  %v1271 = vpop.f32.mrf.mxu0
  %1272 = vmatprep.mubr.f32.mxu0 %v626
  %1273 = vmatmul.mubr.f32.gmra.mxu0 %v568
  %v1274 = vpop.f32.mrf.mxu0
  %v1275 = vadd.f32 0.0, %v1274
  %v1276 = vpop.f32.mrf.mxu0
  %1277 = vmatprep.mubr.f32.mxu0 %v629
  %1278 = vmatmul.mubr.f32.gmra.mxu0 %v569
  %v1279 = vpop.f32.mrf.mxu0
  %v1280 = vadd.f32 0.0, %v1279
  %v1281 = vpop.f32.mrf.mxu0
  %1282 = vmatprep.mubr.f32.mxu0 %v632
  %1283 = vmatmul.mubr.f32.gmra.mxu0 %v570
  %v1284 = vpop.f32.mrf.mxu0
  %v1285 = vadd.f32 0.0, %v1284
  %v1286 = vpop.f32.mrf.mxu0
  %1287 = vmatprep.mubr.f32.mxu0 %v635
  %1288 = vmatmul.mubr.f32.gmra.mxu0 %v571
  %v1289 = vpop.f32.mrf.mxu0
  %v1290 = vadd.f32 0.0, %v1289
  %v1291 = vpop.f32.mrf.mxu0
  %1292 = vmatprep.mubr.f32.mxu0 %v638
  %1293 = vmatmul.mubr.f32.gmra.mxu0 %v572
  %v1294 = vpop.f32.mrf.mxu0
  %v1295 = vadd.f32 0.0, %v1294
  %v1296 = vpop.f32.mrf.mxu0
  %1297 = vmatprep.mubr.f32.mxu0 %v641
  %1298 = vmatmul.mubr.f32.gmra.mxu0 %v573
  %v1299 = vpop.f32.mrf.mxu0
  %v1300 = vadd.f32 0.0, %v1299
  %v1301 = vpop.f32.mrf.mxu0
  %1302 = vmatprep.mubr.f32.mxu0 %v644
  %1303 = vmatmul.mubr.f32.gmra.mxu0 %v574
  %v1304 = vpop.f32.mrf.mxu0
  %v1305 = vadd.f32 0.0, %v1304
  %v1306 = vpop.f32.mrf.mxu0
  %1307 = vmatprep.mubr.f32.mxu0 %v647
  %1308 = vmatmul.mubr.f32.gmra.mxu0 %v575
  %v1309 = vpop.f32.mrf.mxu0
  %v1310 = vadd.f32 0.0, %v1309
  %v1311 = vpop.f32.mrf.mxu0
  %1312 = vmatprep.mubr.f32.mxu0 %v650
  %1313 = vmatmul.mubr.f32.gmra.mxu0 %v576
  %v1314 = vpop.f32.mrf.mxu0
  %v1315 = vadd.f32 0.0, %v1314
  %v1316 = vpop.f32.mrf.mxu0
  %1317 = vmatprep.mubr.f32.mxu0 %v653
  %1318 = vmatmul.mubr.f32.gmra.mxu0 %v577
  %v1319 = vpop.f32.mrf.mxu0
  %v1320 = vadd.f32 0.0, %v1319
  %v1321 = vpop.f32.mrf.mxu0
  %1322 = vmatprep.mubr.f32.mxu0 %v656
  %1323 = vmatmul.mubr.f32.gmra.mxu0 %v578
  %v1324 = vpop.f32.mrf.mxu0
  %v1325 = vadd.f32 0.0, %v1324
  %v1326 = vpop.f32.mrf.mxu0
  %1327 = vmatprep.mubr.f32.mxu0 %v659
  %1328 = vmatmul.mubr.f32.gmra.mxu0 %v579
  %v1329 = vpop.f32.mrf.mxu0
  %v1330 = vadd.f32 0.0, %v1329
  %v1331 = vpop.f32.mrf.mxu0
  %1332 = vmatprep.mubr.f32.mxu0 %v662
  %1333 = vmatmul.mubr.f32.gmra.mxu0 %v580
  %v1334 = vpop.f32.mrf.mxu0
  %v1335 = vadd.f32 0.0, %v1334
  %v1336 = vpop.f32.mrf.mxu0
  %1337 = vmatprep.mubr.f32.mxu0 %v665
  %1338 = vmatmul.mubr.f32.gmra.mxu0 %v581
  %v1339 = vpop.f32.mrf.mxu0
  %v1340 = vadd.f32 0.0, %v1339
  %v1341 = vpop.f32.mrf.mxu0
  %1342 = vmatprep.mubr.f32.mxu0 %v668
  %1343 = vmatmul.mubr.f32.gmra.mxu0 %v582
  %v1344 = vpop.f32.mrf.mxu0
  %v1345 = vadd.f32 0.0, %v1344
  %v1346 = vpop.f32.mrf.mxu0
  %1347 = vdwg.mxu0
  %v1348 = vmax.f32 %v1165, %v1270
  %v1349 = vmax.f32 %v1166, %v1275
  %v1350 = vmax.f32 %v1167, %v1280
  %v1351 = vmax.f32 %v1168, %v1285
  %v1352 = vmax.f32 %v1169, %v1290
  %v1353 = vmax.f32 %v1170, %v1295
  %v1354 = vmax.f32 %v1171, %v1300
  %v1355 = vmax.f32 %v1172, %v1305
  %v1356 = vmax.f32 %v1173, %v1310
  %v1357 = vmax.f32 %v1174, %v1315
  %v1358 = vmax.f32 %v1175, %v1320
  %v1359 = vmax.f32 %v1176, %v1325
  %v1360 = vmax.f32 %v1177, %v1330
  %v1361 = vmax.f32 %v1178, %v1335
  %v1362 = vmax.f32 %v1179, %v1340
  %v1363 = vmax.f32 %v1180, %v1345
  %v1364 = vld [vmem:[%s2] sm:$0x1]
  %v1366 = vlaneseq
  %v1367 = vshrl.u32 %v1366, 7
  %v1368 = vsub.s32 0, %v1367
  %v1369 = vrot.slane %v1364, %v1368
  %v1371 = vadd.f32 %v1348, %v1369
  %v1372 = vadd.f32 %v1349, %v1369
  %v1373 = vadd.f32 %v1350, %v1369
  %v1374 = vadd.f32 %v1351, %v1369
  %v1375 = vadd.f32 %v1352, %v1369
  %v1376 = vadd.f32 %v1353, %v1369
  %v1377 = vadd.f32 %v1354, %v1369
  %v1378 = vadd.f32 %v1355, %v1369
  %v1379 = vadd.f32 %v1356, %v1369
  %v1380 = vadd.f32 %v1357, %v1369
  %v1381 = vadd.f32 %v1358, %v1369
  %v1382 = vadd.f32 %v1359, %v1369
  %v1383 = vadd.f32 %v1360, %v1369
  %v1384 = vadd.f32 %v1361, %v1369
  %v1385 = vadd.f32 %v1362, %v1369
  %v1386 = vadd.f32 %v1363, %v1369
  %v1387 = vmax.f32 %v1371, 0.0
  %v1388 = vmax.f32 %v1372, 0.0
  %v1389 = vmax.f32 %v1373, 0.0
  %v1390 = vmax.f32 %v1374, 0.0
  %v1391 = vmax.f32 %v1375, 0.0
  %v1392 = vmax.f32 %v1376, 0.0
  %v1393 = vmax.f32 %v1377, 0.0
  %v1394 = vmax.f32 %v1378, 0.0
  %v1395 = vmax.f32 %v1379, 0.0
  %v1396 = vmax.f32 %v1380, 0.0
  %v1397 = vmax.f32 %v1381, 0.0
  %v1398 = vmax.f32 %v1382, 0.0
  %v1399 = vmax.f32 %v1383, 0.0
  %v1400 = vmax.f32 %v1384, 0.0
  %v1401 = vmax.f32 %v1385, 0.0
  %v1402 = vmax.f32 %v1386, 0.0
  %vm1403 = vcmask 588800
  %1404 = vst.msk [vmem:[#allocation2] sm:$0xff] %vm1403, %v1387
  %1405 = vst.msk [vmem:[#allocation2 + $0x8] sm:$0xff] %vm1403, %v1388
  %1406 = vst.msk [vmem:[#allocation2 + $0x10] sm:$0xff] %vm1403, %v1389
  %1407 = vst.msk [vmem:[#allocation2 + $0x18] sm:$0xff] %vm1403, %v1390
  %1408 = vst.msk [vmem:[#allocation2 + $0x20] sm:$0xff] %vm1403, %v1391
  %1409 = vst.msk [vmem:[#allocation2 + $0x28] sm:$0xff] %vm1403, %v1392
  %1410 = vst.msk [vmem:[#allocation2 + $0x30] sm:$0xff] %vm1403, %v1393
  %1411 = vst.msk [vmem:[#allocation2 + $0x38] sm:$0xff] %vm1403, %v1394
  %1412 = vst.msk [vmem:[#allocation2 + $0x40] sm:$0xff] %vm1403, %v1395
  %1413 = vst.msk [vmem:[#allocation2 + $0x48] sm:$0xff] %vm1403, %v1396
  %1414 = vst.msk [vmem:[#allocation2 + $0x50] sm:$0xff] %vm1403, %v1397
  %1415 = vst.msk [vmem:[#allocation2 + $0x58] sm:$0xff] %vm1403, %v1398
  %1416 = vst.msk [vmem:[#allocation2 + $0x60] sm:$0xff] %vm1403, %v1399
  %1417 = vst.msk [vmem:[#allocation2 + $0x68] sm:$0xff] %vm1403, %v1400
  %1418 = vst.msk [vmem:[#allocation2 + $0x70] sm:$0xff] %vm1403, %v1401
  %1419 = vst.msk [vmem:[#allocation2 + $0x78] sm:$0xff] %vm1403, %v1402
  %v1420 = vld [vmem:[#allocation2] ss:$2 sm:$0xff]
  %s1421 = scalar_lea.vmem [#allocation2], 16
  %v1422 = vld [vmem:[%s1421] ss:$2 sm:$0xff]
  %s1423 = scalar_lea.vmem [#allocation2], 32
  %v1424 = vld [vmem:[%s1423] ss:$2 sm:$0xff]
  %s1425 = scalar_lea.vmem [#allocation2], 48
  %v1426 = vld [vmem:[%s1425] ss:$2 sm:$0xff]
  %s1427 = scalar_lea.vmem [#allocation2], 64
  %v1428 = vld [vmem:[%s1427] ss:$2 sm:$0xff]
  %s1429 = scalar_lea.vmem [#allocation2], 80
  %v1430 = vld [vmem:[%s1429] ss:$2 sm:$0xff]
  %s1431 = scalar_lea.vmem [#allocation2], 96
  %v1432 = vld [vmem:[%s1431] ss:$2 sm:$0xff]
  %s1433 = scalar_lea.vmem [#allocation2], 112
  %v1434 = vld [vmem:[%s1433] ss:$2 sm:$0xff]
  %s1435 = scalar_lea.vmem [#allocation2], 1
  %v1436 = vld [vmem:[%s1435] ss:$2 sm:$0xff]
  %s1437 = scalar_lea.vmem [#allocation2], 17
  %v1438 = vld [vmem:[%s1437] ss:$2 sm:$0xff]
  %s1439 = scalar_lea.vmem [#allocation2], 33
  %v1440 = vld [vmem:[%s1439] ss:$2 sm:$0xff]
  %s1441 = scalar_lea.vmem [#allocation2], 49
  %v1442 = vld [vmem:[%s1441] ss:$2 sm:$0xff]
  %s1443 = scalar_lea.vmem [#allocation2], 65
  %v1444 = vld [vmem:[%s1443] ss:$2 sm:$0xff]
  %s1445 = scalar_lea.vmem [#allocation2], 81
  %v1446 = vld [vmem:[%s1445] ss:$2 sm:$0xff]
  %s1447 = scalar_lea.vmem [#allocation2], 97
  %v1448 = vld [vmem:[%s1447] ss:$2 sm:$0xff]
  %s1449 = scalar_lea.vmem [#allocation2], 113
  %v1450 = vld [vmem:[%s1449] ss:$2 sm:$0xff]
  %v1459 = vrot.slane %v1420, 1
  %v1460 = vrot.slane %v1422, 1
  %v1461 = vsel %vm117, %v1459, %v1460
  %v1462 = vrot.slane %v1424, 1
  %v1463 = vsel %vm117, %v1460, %v1462
  %v1464 = vrot.slane %v1426, 1
  %v1465 = vsel %vm117, %v1462, %v1464
  %v1466 = vrot.slane %v1428, 1
  %v1467 = vsel %vm117, %v1464, %v1466
  %v1468 = vrot.slane %v1430, 1
  %v1469 = vsel %vm117, %v1466, %v1468
  %v1470 = vrot.slane %v1432, 1
  %v1471 = vsel %vm117, %v1468, %v1470
  %v1472 = vrot.slane %v1434, 1
  %v1473 = vsel %vm117, %v1470, %v1472
  %v1476 = vsel %vm117, %v1472, %v1459
  %v1485 = vrot.slane %v1436, 1
  %v1486 = vrot.slane %v1438, 1
  %v1487 = vsel %vm117, %v1485, %v1486
  %v1488 = vrot.slane %v1440, 1
  %v1489 = vsel %vm117, %v1486, %v1488
  %v1490 = vrot.slane %v1442, 1
  %v1491 = vsel %vm117, %v1488, %v1490
  %v1492 = vrot.slane %v1444, 1
  %v1493 = vsel %vm117, %v1490, %v1492
  %v1494 = vrot.slane %v1446, 1
  %v1495 = vsel %vm117, %v1492, %v1494
  %v1496 = vrot.slane %v1448, 1
  %v1497 = vsel %vm117, %v1494, %v1496
  %v1498 = vrot.slane %v1450, 1
  %v1499 = vsel %vm117, %v1496, %v1498
  %v1502 = vsel %vm117, %v1498, %v1485
  %v1503 = vrot.slane %v1420, 2
  %v1504 = vrot.slane %v1422, 2
  %v1505 = vsel %vm202, %v1503, %v1504
  %v1506 = vrot.slane %v1424, 2
  %v1507 = vsel %vm202, %v1504, %v1506
  %v1508 = vrot.slane %v1426, 2
  %v1509 = vsel %vm202, %v1506, %v1508
  %v1510 = vrot.slane %v1428, 2
  %v1511 = vsel %vm202, %v1508, %v1510
  %v1512 = vrot.slane %v1430, 2
  %v1513 = vsel %vm202, %v1510, %v1512
  %v1514 = vrot.slane %v1432, 2
  %v1515 = vsel %vm202, %v1512, %v1514
  %v1516 = vrot.slane %v1434, 2
  %v1517 = vsel %vm202, %v1514, %v1516
  %v1520 = vsel %vm202, %v1516, %v1503
  %v1521 = vrot.slane %v1436, 2
  %v1522 = vrot.slane %v1438, 2
  %v1523 = vsel %vm202, %v1521, %v1522
  %v1524 = vrot.slane %v1440, 2
  %v1525 = vsel %vm202, %v1522, %v1524
  %v1526 = vrot.slane %v1442, 2
  %v1527 = vsel %vm202, %v1524, %v1526
  %v1528 = vrot.slane %v1444, 2
  %v1529 = vsel %vm202, %v1526, %v1528
  %v1530 = vrot.slane %v1446, 2
  %v1531 = vsel %vm202, %v1528, %v1530
  %v1532 = vrot.slane %v1448, 2
  %v1533 = vsel %vm202, %v1530, %v1532
  %v1534 = vrot.slane %v1450, 2
  %v1535 = vsel %vm202, %v1532, %v1534
  %v1538 = vsel %vm202, %v1534, %v1521
  %1539 = vrot.lane.b32.xlu0 %v1436, 72
  %v1540 = vpop.permute.xlu0 %1539
  %1541 = vrot.lane.b32.xlu0 %v1438, 72
  %v1542 = vpop.permute.xlu0 %1541
  %1543 = vrot.lane.b32.xlu0 %v1440, 72
  %v1544 = vpop.permute.xlu0 %1543
  %1545 = vrot.lane.b32.xlu0 %v1442, 72
  %v1546 = vpop.permute.xlu0 %1545
  %1547 = vrot.lane.b32.xlu0 %v1444, 72
  %v1548 = vpop.permute.xlu0 %1547
  %1549 = vrot.lane.b32.xlu0 %v1446, 72
  %v1550 = vpop.permute.xlu0 %1549
  %1551 = vrot.lane.b32.xlu0 %v1448, 72
  %v1552 = vpop.permute.xlu0 %1551
  %1553 = vrot.lane.b32.xlu0 %v1450, 72
  %v1554 = vpop.permute.xlu0 %1553
  %1564 = vrot.lane.b32.xlu0 %v1461, 16
  %v1565 = vpop.permute.xlu0 %1564
  %1566 = vrot.lane.b32.xlu0 %v1463, 16
  %v1567 = vpop.permute.xlu0 %1566
  %1568 = vrot.lane.b32.xlu0 %v1465, 16
  %v1569 = vpop.permute.xlu0 %1568
  %1570 = vrot.lane.b32.xlu0 %v1467, 16
  %v1571 = vpop.permute.xlu0 %1570
  %1572 = vrot.lane.b32.xlu0 %v1469, 16
  %v1573 = vpop.permute.xlu0 %1572
  %1574 = vrot.lane.b32.xlu0 %v1471, 16
  %v1575 = vpop.permute.xlu0 %1574
  %1576 = vrot.lane.b32.xlu0 %v1473, 16
  %v1577 = vpop.permute.xlu0 %1576
  %1578 = vrot.lane.b32.xlu0 %v1476, 16
  %v1579 = vpop.permute.xlu0 %1578
  %1589 = vrot.lane.b32.xlu0 %v1487, 88
  %v1590 = vpop.permute.xlu0 %1589
  %1591 = vrot.lane.b32.xlu0 %v1489, 88
  %v1592 = vpop.permute.xlu0 %1591
  %1593 = vrot.lane.b32.xlu0 %v1491, 88
  %v1594 = vpop.permute.xlu0 %1593
  %1595 = vrot.lane.b32.xlu0 %v1493, 88
  %v1596 = vpop.permute.xlu0 %1595
  %1597 = vrot.lane.b32.xlu0 %v1495, 88
  %v1598 = vpop.permute.xlu0 %1597
  %1599 = vrot.lane.b32.xlu0 %v1497, 88
  %v1600 = vpop.permute.xlu0 %1599
  %1601 = vrot.lane.b32.xlu0 %v1499, 88
  %v1602 = vpop.permute.xlu0 %1601
  %1603 = vrot.lane.b32.xlu0 %v1502, 88
  %v1604 = vpop.permute.xlu0 %1603
  %1614 = vrot.lane.b32.xlu0 %v1505, 32
  %v1615 = vpop.permute.xlu0 %1614
  %1616 = vrot.lane.b32.xlu0 %v1507, 32
  %v1617 = vpop.permute.xlu0 %1616
  %1618 = vrot.lane.b32.xlu0 %v1509, 32
  %v1619 = vpop.permute.xlu0 %1618
  %1620 = vrot.lane.b32.xlu0 %v1511, 32
  %v1621 = vpop.permute.xlu0 %1620
  %1622 = vrot.lane.b32.xlu0 %v1513, 32
  %v1623 = vpop.permute.xlu0 %1622
  %1624 = vrot.lane.b32.xlu0 %v1515, 32
  %v1625 = vpop.permute.xlu0 %1624
  %1626 = vrot.lane.b32.xlu0 %v1517, 32
  %v1627 = vpop.permute.xlu0 %1626
  %1628 = vrot.lane.b32.xlu0 %v1520, 32
  %v1629 = vpop.permute.xlu0 %1628
  %1639 = vrot.lane.b32.xlu0 %v1523, 104
  %v1640 = vpop.permute.xlu0 %1639
  %1641 = vrot.lane.b32.xlu0 %v1525, 104
  %v1642 = vpop.permute.xlu0 %1641
  %1643 = vrot.lane.b32.xlu0 %v1527, 104
  %v1644 = vpop.permute.xlu0 %1643
  %1645 = vrot.lane.b32.xlu0 %v1529, 104
  %v1646 = vpop.permute.xlu0 %1645
  %1647 = vrot.lane.b32.xlu0 %v1531, 104
  %v1648 = vpop.permute.xlu0 %1647
  %1649 = vrot.lane.b32.xlu0 %v1533, 104
  %v1650 = vpop.permute.xlu0 %1649
  %1651 = vrot.lane.b32.xlu0 %v1535, 104
  %v1652 = vpop.permute.xlu0 %1651
  %1653 = vrot.lane.b32.xlu0 %v1538, 104
  %v1654 = vpop.permute.xlu0 %1653
  %v1663 = vsel %vm1403, %v1420, %v1540
  %v1664 = vsel %vm1403, %v1422, %v1542
  %v1665 = vsel %vm1403, %v1424, %v1544
  %v1666 = vsel %vm1403, %v1426, %v1546
  %v1667 = vsel %vm1403, %v1428, %v1548
  %v1668 = vsel %vm1403, %v1430, %v1550
  %v1669 = vsel %vm1403, %v1432, %v1552
  %v1670 = vsel %vm1403, %v1434, %v1554
  %vm1671 = vcmask 130048
  %v1672 = vsel %vm1671, %v1540, %v1565
  %v1673 = vsel %vm1671, %v1542, %v1567
  %v1674 = vsel %vm1671, %v1544, %v1569
  %v1675 = vsel %vm1671, %v1546, %v1571
  %v1676 = vsel %vm1671, %v1548, %v1573
  %v1677 = vsel %vm1671, %v1550, %v1575
  %v1678 = vsel %vm1671, %v1552, %v1577
  %v1679 = vsel %vm1671, %v1554, %v1579
  %vm1680 = vcmask 719872
  %v1681 = vsel %vm1680, %v1672, %v1590
  %v1682 = vsel %vm1680, %v1673, %v1592
  %v1683 = vsel %vm1680, %v1674, %v1594
  %v1684 = vsel %vm1680, %v1675, %v1596
  %v1685 = vsel %vm1680, %v1676, %v1598
  %v1686 = vsel %vm1680, %v1677, %v1600
  %v1687 = vsel %vm1680, %v1678, %v1602
  %v1688 = vsel %vm1680, %v1679, %v1604
  %vm1689 = vcmask 261120
  %v1690 = vsel %vm1689, %v1590, %v1615
  %v1691 = vsel %vm1689, %v1592, %v1617
  %v1692 = vsel %vm1689, %v1594, %v1619
  %v1693 = vsel %vm1689, %v1596, %v1621
  %v1694 = vsel %vm1689, %v1598, %v1623
  %v1695 = vsel %vm1689, %v1600, %v1625
  %v1696 = vsel %vm1689, %v1602, %v1627
  %v1697 = vsel %vm1689, %v1604, %v1629
  %vm1698 = vcmask 850944
  %v1699 = vsel %vm1698, %v1690, %v1640
  %v1700 = vsel %vm1698, %v1691, %v1642
  %v1701 = vsel %vm1698, %v1692, %v1644
  %v1702 = vsel %vm1698, %v1693, %v1646
  %v1703 = vsel %vm1698, %v1694, %v1648
  %v1704 = vsel %vm1698, %v1695, %v1650
  %v1705 = vsel %vm1698, %v1696, %v1652
  %v1706 = vsel %vm1698, %v1697, %v1654
  %v1707 = vld [vmem:[%s3] sm:$0xff]
  %v1708 = vld [vmem:[%s3 + $0x8] sm:$0xff]
  %v1709 = vld [vmem:[%s3 + $0x10] sm:$0xff]
  %v1710 = vld [vmem:[%s3 + $0x18] sm:$0xff]
  %v1711 = vld [vmem:[%s3 + $0x20] sm:$0xff]
  %v1712 = vld [vmem:[%s3 + $0x28] sm:$0xff]
  %v1713 = vld [vmem:[%s3 + $0x30] sm:$0xff]
  %v1714 = vld [vmem:[%s3 + $0x38] sm:$0xff]
  %v1715 = vld [vmem:[%s3 + $0x40] sm:$0xff]
  %v1716 = vld [vmem:[%s3 + $0x48] sm:$0xff]
  %v1717 = vld [vmem:[%s3 + $0x50] sm:$0xff]
  %v1718 = vld [vmem:[%s3 + $0x58] sm:$0xff]
  %v1719 = vld [vmem:[%s3 + $0x60] sm:$0xff]
  %v1720 = vld [vmem:[%s3 + $0x68] sm:$0xff]
  %v1721 = vld [vmem:[%s3 + $0x70] sm:$0xff]
  %v1722 = vld [vmem:[%s3 + $0x78] sm:$0xff]
  %v1723 = vld [vmem:[%s3 + $0x80] sm:$0xff]
  %v1724 = vld [vmem:[%s3 + $0x88] sm:$0xff]
  %v1725 = vld [vmem:[%s3 + $0x90] sm:$0xff]
  %v1726 = vld [vmem:[%s3 + $0x98] sm:$0xff]
  %v1727 = vld [vmem:[%s3 + $0xa0] sm:$0xff]
  %v1728 = vld [vmem:[%s3 + $0xa8] sm:$0xff]
  %v1729 = vld [vmem:[%s3 + $0xb0] sm:$0xff]
  %v1730 = vld [vmem:[%s3 + $0xb8] sm:$0xff]
  %v1731 = vld [vmem:[%s3 + $0xc0] sm:$0xff]
  %v1732 = vld [vmem:[%s3 + $0xc8] sm:$0xff]
  %v1733 = vld [vmem:[%s3 + $0xd0] sm:$0xff]
  %v1734 = vld [vmem:[%s3 + $0xd8] sm:$0xff]
  %v1735 = vld [vmem:[%s3 + $0xe0] sm:$0xff]
  %v1736 = vld [vmem:[%s3 + $0xe8] sm:$0xff]
  %v1737 = vld [vmem:[%s3 + $0xf0] sm:$0xff]
  %v1738 = vld [vmem:[%s3 + $0xf8] sm:$0xff]
  %v1739 = vld [vmem:[%s3 + $0x100] sm:$0xff]
  %v1740 = vld [vmem:[%s3 + $0x108] sm:$0xff]
  %v1741 = vld [vmem:[%s3 + $0x110] sm:$0xff]
  %v1742 = vld [vmem:[%s3 + $0x118] sm:$0xff]
  %v1743 = vld [vmem:[%s3 + $0x120] sm:$0xff]
  %v1744 = vld [vmem:[%s3 + $0x128] sm:$0xff]
  %v1745 = vld [vmem:[%s3 + $0x130] sm:$0xff]
  %v1746 = vld [vmem:[%s3 + $0x138] sm:$0xff]
  %v1747 = vld [vmem:[%s3 + $0x140] sm:$0xff]
  %v1748 = vld [vmem:[%s3 + $0x148] sm:$0xff]
  %v1749 = vld [vmem:[%s3 + $0x150] sm:$0xff]
  %v1750 = vld [vmem:[%s3 + $0x158] sm:$0xff]
  %v1751 = vld [vmem:[%s3 + $0x160] sm:$0xff]
  %v1752 = vld [vmem:[%s3 + $0x168] sm:$0xff]
  %v1753 = vld [vmem:[%s3 + $0x170] sm:$0xff]
  %v1754 = vld [vmem:[%s3 + $0x178] sm:$0xff]
  %v1755 = vld [vmem:[%s3 + $0x180] sm:$0xff]
  %v1756 = vld [vmem:[%s3 + $0x188] sm:$0xff]
  %v1757 = vld [vmem:[%s3 + $0x190] sm:$0xff]
  %v1758 = vld [vmem:[%s3 + $0x198] sm:$0xff]
  %v1759 = vld [vmem:[%s3 + $0x1a0] sm:$0xff]
  %v1760 = vld [vmem:[%s3 + $0x1a8] sm:$0xff]
  %vm1761 = vcmask 392192
  %v1762 = vsel %vm1761, %v1640, 0
  %v1764 = vsel %vm1761, %v1642, 0
  %v1766 = vsel %vm1761, %v1644, 0
  %v1768 = vsel %vm1761, %v1646, 0
  %v1770 = vsel %vm1761, %v1648, 0
  %v1772 = vsel %vm1761, %v1650, 0
  %v1774 = vsel %vm1761, %v1652, 0
  %v1776 = vsel %vm1761, %v1654, 0
  %1778 = vmatprep.subr.mxu0 0.0
  %1779 = vmatpush1.msra.mxu0 %v1722
  %1780 = vmatprep.subr.mxu0 0.0
  %1781 = vmatpush1.msra.mxu0 %v1721
  %1782 = vmatprep.subr.mxu0 0.0
  %1783 = vmatpush1.msra.mxu0 %v1720
  %1784 = vmatprep.subr.mxu0 0.0
  %1785 = vmatpush1.msra.mxu0 %v1719
  %1786 = vmatprep.subr.mxu0 0.0
  %1787 = vmatpush1.msra.mxu0 %v1718
  %1788 = vmatprep.subr.mxu0 0.0
  %1789 = vmatpush1.msra.mxu0 %v1717
  %1790 = vmatprep.subr.mxu0 0.0
  %1791 = vmatpush1.msra.mxu0 %v1716
  %1792 = vmatprep.subr.mxu0 0.0
  %1793 = vmatpush1.msra.mxu0 %v1715
  %1794 = vmatprep.subr.mxu0 0.0
  %1795 = vmatpush1.msra.mxu0 %v1714
  %1796 = vmatprep.subr.mxu0 0.0
  %1797 = vmatpush1.msra.mxu0 %v1713
  %1798 = vmatprep.subr.mxu0 0.0
  %1799 = vmatpush1.msra.mxu0 %v1712
  %1800 = vmatprep.subr.mxu0 0.0
  %1801 = vmatpush1.msra.mxu0 %v1711
  %1802 = vmatprep.subr.mxu0 0.0
  %1803 = vmatpush1.msra.mxu0 %v1710
  %1804 = vmatprep.subr.mxu0 0.0
  %1805 = vmatpush1.msra.mxu0 %v1709
  %1806 = vmatprep.subr.mxu0 0.0
  %1807 = vmatpush1.msra.mxu0 %v1708
  %1808 = vmatprep.subr.mxu0 0.0
  %1809 = vmatpush1.msra.mxu0 %v1707
  %1810 = vmatprep.subr.mxu0 0.0
  %1811 = vmatpush2.msra.mxu0 %v1738
  %1812 = vmatprep.subr.mxu0 0.0
  %1813 = vmatpush2.msra.mxu0 %v1737
  %1814 = vmatprep.subr.mxu0 0.0
  %1815 = vmatpush2.msra.mxu0 %v1736
  %1816 = vmatprep.subr.mxu0 0.0
  %1817 = vmatpush2.msra.mxu0 %v1735
  %1818 = vmatprep.subr.mxu0 0.0
  %1819 = vmatpush2.msra.mxu0 %v1734
  %1820 = vmatprep.subr.mxu0 0.0
  %1821 = vmatpush2.msra.mxu0 %v1733
  %1822 = vmatprep.subr.mxu0 0.0
  %1823 = vmatpush2.msra.mxu0 %v1732
  %1824 = vmatprep.subr.mxu0 0.0
  %1825 = vmatpush2.msra.mxu0 %v1731
  %1826 = vmatprep.subr.mxu0 0.0
  %1827 = vmatpush2.msra.mxu0 %v1730
  %1828 = vmatprep.subr.mxu0 0.0
  %1829 = vmatpush2.msra.mxu0 %v1729
  %1830 = vmatprep.subr.mxu0 0.0
  %1831 = vmatpush2.msra.mxu0 %v1728
  %1832 = vmatprep.subr.mxu0 0.0
  %1833 = vmatpush2.msra.mxu0 %v1727
  %1834 = vmatprep.subr.mxu0 0.0
  %1835 = vmatpush2.msra.mxu0 %v1726
  %1836 = vmatprep.subr.mxu0 0.0
  %1837 = vmatpush2.msra.mxu0 %v1725
  %1838 = vmatprep.subr.mxu0 0.0
  %1839 = vmatpush2.msra.mxu0 %v1724
  %1840 = vmatprep.subr.mxu0 0.0
  %1841 = vmatpush2.msra.mxu0 %v1723
  %1842 = vmatprep.mubr.f32.mxu0 %v1681
  %1843 = vmatmul.mubr.f32.gmra.mxu0 %v1663
  %v1844 = vpop.f32.mrf.mxu0
  %v1845 = vadd.f32 0.0, %v1844
  %v1846 = vpop.f32.mrf.mxu0
  %1847 = vmatprep.mubr.f32.mxu0 %v1682
  %1848 = vmatmul.mubr.f32.gmra.mxu0 %v1664
  %v1849 = vpop.f32.mrf.mxu0
  %v1850 = vadd.f32 0.0, %v1849
  %v1851 = vpop.f32.mrf.mxu0
  %1852 = vmatprep.mubr.f32.mxu0 %v1683
  %1853 = vmatmul.mubr.f32.gmra.mxu0 %v1665
  %v1854 = vpop.f32.mrf.mxu0
  %v1855 = vadd.f32 0.0, %v1854
  %v1856 = vpop.f32.mrf.mxu0
  %1857 = vmatprep.mubr.f32.mxu0 %v1684
  %1858 = vmatmul.mubr.f32.gmra.mxu0 %v1666
  %v1859 = vpop.f32.mrf.mxu0
  %v1860 = vadd.f32 0.0, %v1859
  %v1861 = vpop.f32.mrf.mxu0
  %1862 = vmatprep.mubr.f32.mxu0 %v1685
  %1863 = vmatmul.mubr.f32.gmra.mxu0 %v1667
  %v1864 = vpop.f32.mrf.mxu0
  %v1865 = vadd.f32 0.0, %v1864
  %v1866 = vpop.f32.mrf.mxu0
  %1867 = vmatprep.mubr.f32.mxu0 %v1686
  %1868 = vmatmul.mubr.f32.gmra.mxu0 %v1668
  %v1869 = vpop.f32.mrf.mxu0
  %v1870 = vadd.f32 0.0, %v1869
  %v1871 = vpop.f32.mrf.mxu0
  %1872 = vmatprep.mubr.f32.mxu0 %v1687
  %1873 = vmatmul.mubr.f32.gmra.mxu0 %v1669
  %v1874 = vpop.f32.mrf.mxu0
  %v1875 = vadd.f32 0.0, %v1874
  %v1876 = vpop.f32.mrf.mxu0
  %1877 = vmatprep.mubr.f32.mxu0 %v1688
  %1878 = vmatmul.mubr.f32.gmra.mxu0 %v1670
  %v1879 = vpop.f32.mrf.mxu0
  %v1880 = vadd.f32 0.0, %v1879
  %v1881 = vpop.f32.mrf.mxu0
  %1882 = vdwg.mxu0
  %1883 = vmatprep.subr.mxu0 0.0
  %1884 = vmatpush1.msra.mxu0 %v1754
  %1885 = vmatprep.subr.mxu0 0.0
  %1886 = vmatpush1.msra.mxu0 %v1753
  %1887 = vmatprep.subr.mxu0 0.0
  %1888 = vmatpush1.msra.mxu0 %v1752
  %1889 = vmatprep.subr.mxu0 0.0
  %1890 = vmatpush1.msra.mxu0 %v1751
  %1891 = vmatprep.subr.mxu0 0.0
  %1892 = vmatpush1.msra.mxu0 %v1750
  %1893 = vmatprep.subr.mxu0 0.0
  %1894 = vmatpush1.msra.mxu0 %v1749
  %1895 = vmatprep.subr.mxu0 0.0
  %1896 = vmatpush1.msra.mxu0 %v1748
  %1897 = vmatprep.subr.mxu0 0.0
  %1898 = vmatpush1.msra.mxu0 %v1747
  %1899 = vmatprep.subr.mxu0 0.0
  %1900 = vmatpush1.msra.mxu0 %v1746
  %1901 = vmatprep.subr.mxu0 0.0
  %1902 = vmatpush1.msra.mxu0 %v1745
  %1903 = vmatprep.subr.mxu0 0.0
  %1904 = vmatpush1.msra.mxu0 %v1744
  %1905 = vmatprep.subr.mxu0 0.0
  %1906 = vmatpush1.msra.mxu0 %v1743
  %1907 = vmatprep.subr.mxu0 0.0
  %1908 = vmatpush1.msra.mxu0 %v1742
  %1909 = vmatprep.subr.mxu0 0.0
  %1910 = vmatpush1.msra.mxu0 %v1741
  %1911 = vmatprep.subr.mxu0 0.0
  %1912 = vmatpush1.msra.mxu0 %v1740
  %1913 = vmatprep.subr.mxu0 0.0
  %1914 = vmatpush1.msra.mxu0 %v1739
  %1915 = vmatprep.subr.mxu0 0.0
  %1916 = vmatpush2.msra.mxu0 0.0
  %1917 = vmatprep.subr.mxu0 0.0
  %1918 = vmatpush2.msra.mxu0 0.0
  %1919 = vmatprep.subr.mxu0 0.0
  %1920 = vmatpush2.msra.mxu0 0.0
  %1921 = vmatprep.subr.mxu0 0.0
  %1922 = vmatpush2.msra.mxu0 0.0
  %1923 = vmatprep.subr.mxu0 0.0
  %1924 = vmatpush2.msra.mxu0 0.0
  %1925 = vmatprep.subr.mxu0 0.0
  %1926 = vmatpush2.msra.mxu0 0.0
  %1927 = vmatprep.subr.mxu0 0.0
  %1928 = vmatpush2.msra.mxu0 0.0
  %1929 = vmatprep.subr.mxu0 0.0
  %1930 = vmatpush2.msra.mxu0 0.0
  %1931 = vmatprep.subr.mxu0 0.0
  %1932 = vmatpush2.msra.mxu0 0.0
  %1933 = vmatprep.subr.mxu0 0.0
  %1934 = vmatpush2.msra.mxu0 0.0
  %1935 = vmatprep.subr.mxu0 0.0
  %1936 = vmatpush2.msra.mxu0 %v1760
  %1937 = vmatprep.subr.mxu0 0.0
  %1938 = vmatpush2.msra.mxu0 %v1759
  %1939 = vmatprep.subr.mxu0 0.0
  %1940 = vmatpush2.msra.mxu0 %v1758
  %1941 = vmatprep.subr.mxu0 0.0
  %1942 = vmatpush2.msra.mxu0 %v1757
  %1943 = vmatprep.subr.mxu0 0.0
  %1944 = vmatpush2.msra.mxu0 %v1756
  %1945 = vmatprep.subr.mxu0 0.0
  %1946 = vmatpush2.msra.mxu0 %v1755
  %1947 = vmatprep.mubr.f32.mxu0 %v1762
  %1948 = vmatmul.mubr.f32.gmra.mxu0 %v1699
  %v1949 = vpop.f32.mrf.mxu0
  %v1950 = vadd.f32 %v1845, %v1949
  %v1951 = vpop.f32.mrf.mxu0
  %1952 = vmatprep.mubr.f32.mxu0 %v1764
  %1953 = vmatmul.mubr.f32.gmra.mxu0 %v1700
  %v1954 = vpop.f32.mrf.mxu0
  %v1955 = vadd.f32 %v1850, %v1954
  %v1956 = vpop.f32.mrf.mxu0
  %1957 = vmatprep.mubr.f32.mxu0 %v1766
  %1958 = vmatmul.mubr.f32.gmra.mxu0 %v1701
  %v1959 = vpop.f32.mrf.mxu0
  %v1960 = vadd.f32 %v1855, %v1959
  %v1961 = vpop.f32.mrf.mxu0
  %1962 = vmatprep.mubr.f32.mxu0 %v1768
  %1963 = vmatmul.mubr.f32.gmra.mxu0 %v1702
  %v1964 = vpop.f32.mrf.mxu0
  %v1965 = vadd.f32 %v1860, %v1964
  %v1966 = vpop.f32.mrf.mxu0
  %1967 = vmatprep.mubr.f32.mxu0 %v1770
  %1968 = vmatmul.mubr.f32.gmra.mxu0 %v1703
  %v1969 = vpop.f32.mrf.mxu0
  %v1970 = vadd.f32 %v1865, %v1969
  %v1971 = vpop.f32.mrf.mxu0
  %1972 = vmatprep.mubr.f32.mxu0 %v1772
  %1973 = vmatmul.mubr.f32.gmra.mxu0 %v1704
  %v1974 = vpop.f32.mrf.mxu0
  %v1975 = vadd.f32 %v1870, %v1974
  %v1976 = vpop.f32.mrf.mxu0
  %1977 = vmatprep.mubr.f32.mxu0 %v1774
  %1978 = vmatmul.mubr.f32.gmra.mxu0 %v1705
  %v1979 = vpop.f32.mrf.mxu0
  %v1980 = vadd.f32 %v1875, %v1979
  %v1981 = vpop.f32.mrf.mxu0
  %1982 = vmatprep.mubr.f32.mxu0 %v1776
  %1983 = vmatmul.mubr.f32.gmra.mxu0 %v1706
  %v1984 = vpop.f32.mrf.mxu0
  %v1985 = vadd.f32 %v1880, %v1984
  %v1986 = vpop.f32.mrf.mxu0
  %1987 = vdwg.mxu0
  %s1988 = scalar_lea.vmem %s3, 432
  %v1989 = vld [vmem:[%s1988] sm:$0xff]
  %v1990 = vld [vmem:[%s1988 + $0x8] sm:$0xff]
  %v1991 = vld [vmem:[%s1988 + $0x10] sm:$0xff]
  %v1992 = vld [vmem:[%s1988 + $0x18] sm:$0xff]
  %v1993 = vld [vmem:[%s1988 + $0x20] sm:$0xff]
  %v1994 = vld [vmem:[%s1988 + $0x28] sm:$0xff]
  %v1995 = vld [vmem:[%s1988 + $0x30] sm:$0xff]
  %v1996 = vld [vmem:[%s1988 + $0x38] sm:$0xff]
  %v1997 = vld [vmem:[%s1988 + $0x40] sm:$0xff]
  %v1998 = vld [vmem:[%s1988 + $0x48] sm:$0xff]
  %v1999 = vld [vmem:[%s1988 + $0x50] sm:$0xff]
  %v2000 = vld [vmem:[%s1988 + $0x58] sm:$0xff]
  %v2001 = vld [vmem:[%s1988 + $0x60] sm:$0xff]
  %v2002 = vld [vmem:[%s1988 + $0x68] sm:$0xff]
  %v2003 = vld [vmem:[%s1988 + $0x70] sm:$0xff]
  %v2004 = vld [vmem:[%s1988 + $0x78] sm:$0xff]
  %v2005 = vld [vmem:[%s1988 + $0x80] sm:$0xff]
  %v2006 = vld [vmem:[%s1988 + $0x88] sm:$0xff]
  %v2007 = vld [vmem:[%s1988 + $0x90] sm:$0xff]
  %v2008 = vld [vmem:[%s1988 + $0x98] sm:$0xff]
  %v2009 = vld [vmem:[%s1988 + $0xa0] sm:$0xff]
  %v2010 = vld [vmem:[%s1988 + $0xa8] sm:$0xff]
  %v2011 = vld [vmem:[%s1988 + $0xb0] sm:$0xff]
  %v2012 = vld [vmem:[%s1988 + $0xb8] sm:$0xff]
  %v2013 = vld [vmem:[%s1988 + $0xc0] sm:$0xff]
  %v2014 = vld [vmem:[%s1988 + $0xc8] sm:$0xff]
  %v2015 = vld [vmem:[%s1988 + $0xd0] sm:$0xff]
  %v2016 = vld [vmem:[%s1988 + $0xd8] sm:$0xff]
  %v2017 = vld [vmem:[%s1988 + $0xe0] sm:$0xff]
  %v2018 = vld [vmem:[%s1988 + $0xe8] sm:$0xff]
  %v2019 = vld [vmem:[%s1988 + $0xf0] sm:$0xff]
  %v2020 = vld [vmem:[%s1988 + $0xf8] sm:$0xff]
  %v2021 = vld [vmem:[%s1988 + $0x100] sm:$0xff]
  %v2022 = vld [vmem:[%s1988 + $0x108] sm:$0xff]
  %v2023 = vld [vmem:[%s1988 + $0x110] sm:$0xff]
  %v2024 = vld [vmem:[%s1988 + $0x118] sm:$0xff]
  %v2025 = vld [vmem:[%s1988 + $0x120] sm:$0xff]
  %v2026 = vld [vmem:[%s1988 + $0x128] sm:$0xff]
  %v2027 = vld [vmem:[%s1988 + $0x130] sm:$0xff]
  %v2028 = vld [vmem:[%s1988 + $0x138] sm:$0xff]
  %v2029 = vld [vmem:[%s1988 + $0x140] sm:$0xff]
  %v2030 = vld [vmem:[%s1988 + $0x148] sm:$0xff]
  %v2031 = vld [vmem:[%s1988 + $0x150] sm:$0xff]
  %v2032 = vld [vmem:[%s1988 + $0x158] sm:$0xff]
  %v2033 = vld [vmem:[%s1988 + $0x160] sm:$0xff]
  %v2034 = vld [vmem:[%s1988 + $0x168] sm:$0xff]
  %v2035 = vld [vmem:[%s1988 + $0x170] sm:$0xff]
  %v2036 = vld [vmem:[%s1988 + $0x178] sm:$0xff]
  %v2037 = vld [vmem:[%s1988 + $0x180] sm:$0xff]
  %v2038 = vld [vmem:[%s1988 + $0x188] sm:$0xff]
  %v2039 = vld [vmem:[%s1988 + $0x190] sm:$0xff]
  %v2040 = vld [vmem:[%s1988 + $0x198] sm:$0xff]
  %v2041 = vld [vmem:[%s1988 + $0x1a0] sm:$0xff]
  %v2042 = vld [vmem:[%s1988 + $0x1a8] sm:$0xff]
  %2043 = vmatprep.subr.mxu0 0.0
  %2044 = vmatpush1.msra.mxu0 %v2004
  %2045 = vmatprep.subr.mxu0 0.0
  %2046 = vmatpush1.msra.mxu0 %v2003
  %2047 = vmatprep.subr.mxu0 0.0
  %2048 = vmatpush1.msra.mxu0 %v2002
  %2049 = vmatprep.subr.mxu0 0.0
  %2050 = vmatpush1.msra.mxu0 %v2001
  %2051 = vmatprep.subr.mxu0 0.0
  %2052 = vmatpush1.msra.mxu0 %v2000
  %2053 = vmatprep.subr.mxu0 0.0
  %2054 = vmatpush1.msra.mxu0 %v1999
  %2055 = vmatprep.subr.mxu0 0.0
  %2056 = vmatpush1.msra.mxu0 %v1998
  %2057 = vmatprep.subr.mxu0 0.0
  %2058 = vmatpush1.msra.mxu0 %v1997
  %2059 = vmatprep.subr.mxu0 0.0
  %2060 = vmatpush1.msra.mxu0 %v1996
  %2061 = vmatprep.subr.mxu0 0.0
  %2062 = vmatpush1.msra.mxu0 %v1995
  %2063 = vmatprep.subr.mxu0 0.0
  %2064 = vmatpush1.msra.mxu0 %v1994
  %2065 = vmatprep.subr.mxu0 0.0
  %2066 = vmatpush1.msra.mxu0 %v1993
  %2067 = vmatprep.subr.mxu0 0.0
  %2068 = vmatpush1.msra.mxu0 %v1992
  %2069 = vmatprep.subr.mxu0 0.0
  %2070 = vmatpush1.msra.mxu0 %v1991
  %2071 = vmatprep.subr.mxu0 0.0
  %2072 = vmatpush1.msra.mxu0 %v1990
  %2073 = vmatprep.subr.mxu0 0.0
  %2074 = vmatpush1.msra.mxu0 %v1989
  %2075 = vmatprep.subr.mxu0 0.0
  %2076 = vmatpush2.msra.mxu0 %v2020
  %2077 = vmatprep.subr.mxu0 0.0
  %2078 = vmatpush2.msra.mxu0 %v2019
  %2079 = vmatprep.subr.mxu0 0.0
  %2080 = vmatpush2.msra.mxu0 %v2018
  %2081 = vmatprep.subr.mxu0 0.0
  %2082 = vmatpush2.msra.mxu0 %v2017
  %2083 = vmatprep.subr.mxu0 0.0
  %2084 = vmatpush2.msra.mxu0 %v2016
  %2085 = vmatprep.subr.mxu0 0.0
  %2086 = vmatpush2.msra.mxu0 %v2015
  %2087 = vmatprep.subr.mxu0 0.0
  %2088 = vmatpush2.msra.mxu0 %v2014
  %2089 = vmatprep.subr.mxu0 0.0
  %2090 = vmatpush2.msra.mxu0 %v2013
  %2091 = vmatprep.subr.mxu0 0.0
  %2092 = vmatpush2.msra.mxu0 %v2012
  %2093 = vmatprep.subr.mxu0 0.0
  %2094 = vmatpush2.msra.mxu0 %v2011
  %2095 = vmatprep.subr.mxu0 0.0
  %2096 = vmatpush2.msra.mxu0 %v2010
  %2097 = vmatprep.subr.mxu0 0.0
  %2098 = vmatpush2.msra.mxu0 %v2009
  %2099 = vmatprep.subr.mxu0 0.0
  %2100 = vmatpush2.msra.mxu0 %v2008
  %2101 = vmatprep.subr.mxu0 0.0
  %2102 = vmatpush2.msra.mxu0 %v2007
  %2103 = vmatprep.subr.mxu0 0.0
  %2104 = vmatpush2.msra.mxu0 %v2006
  %2105 = vmatprep.subr.mxu0 0.0
  %2106 = vmatpush2.msra.mxu0 %v2005
  %2107 = vmatprep.mubr.f32.mxu0 %v1681
  %2108 = vmatmul.mubr.f32.gmra.mxu0 %v1663
  %v2109 = vpop.f32.mrf.mxu0
  %v2110 = vadd.f32 0.0, %v2109
  %v2111 = vpop.f32.mrf.mxu0
  %2112 = vmatprep.mubr.f32.mxu0 %v1682
  %2113 = vmatmul.mubr.f32.gmra.mxu0 %v1664
  %v2114 = vpop.f32.mrf.mxu0
  %v2115 = vadd.f32 0.0, %v2114
  %v2116 = vpop.f32.mrf.mxu0
  %2117 = vmatprep.mubr.f32.mxu0 %v1683
  %2118 = vmatmul.mubr.f32.gmra.mxu0 %v1665
  %v2119 = vpop.f32.mrf.mxu0
  %v2120 = vadd.f32 0.0, %v2119
  %v2121 = vpop.f32.mrf.mxu0
  %2122 = vmatprep.mubr.f32.mxu0 %v1684
  %2123 = vmatmul.mubr.f32.gmra.mxu0 %v1666
  %v2124 = vpop.f32.mrf.mxu0
  %v2125 = vadd.f32 0.0, %v2124
  %v2126 = vpop.f32.mrf.mxu0
  %2127 = vmatprep.mubr.f32.mxu0 %v1685
  %2128 = vmatmul.mubr.f32.gmra.mxu0 %v1667
  %v2129 = vpop.f32.mrf.mxu0
  %v2130 = vadd.f32 0.0, %v2129
  %v2131 = vpop.f32.mrf.mxu0
  %2132 = vmatprep.mubr.f32.mxu0 %v1686
  %2133 = vmatmul.mubr.f32.gmra.mxu0 %v1668
  %v2134 = vpop.f32.mrf.mxu0
  %v2135 = vadd.f32 0.0, %v2134
  %v2136 = vpop.f32.mrf.mxu0
  %2137 = vmatprep.mubr.f32.mxu0 %v1687
  %2138 = vmatmul.mubr.f32.gmra.mxu0 %v1669
  %v2139 = vpop.f32.mrf.mxu0
  %v2140 = vadd.f32 0.0, %v2139
  %v2141 = vpop.f32.mrf.mxu0
  %2142 = vmatprep.mubr.f32.mxu0 %v1688
  %2143 = vmatmul.mubr.f32.gmra.mxu0 %v1670
  %v2144 = vpop.f32.mrf.mxu0
  %v2145 = vadd.f32 0.0, %v2144
  %v2146 = vpop.f32.mrf.mxu0
  %2147 = vdwg.mxu0
  %2148 = vmatprep.subr.mxu0 0.0
  %2149 = vmatpush1.msra.mxu0 %v2036
  %2150 = vmatprep.subr.mxu0 0.0
  %2151 = vmatpush1.msra.mxu0 %v2035
  %2152 = vmatprep.subr.mxu0 0.0
  %2153 = vmatpush1.msra.mxu0 %v2034
  %2154 = vmatprep.subr.mxu0 0.0
  %2155 = vmatpush1.msra.mxu0 %v2033
  %2156 = vmatprep.subr.mxu0 0.0
  %2157 = vmatpush1.msra.mxu0 %v2032
  %2158 = vmatprep.subr.mxu0 0.0
  %2159 = vmatpush1.msra.mxu0 %v2031
  %2160 = vmatprep.subr.mxu0 0.0
  %2161 = vmatpush1.msra.mxu0 %v2030
  %2162 = vmatprep.subr.mxu0 0.0
  %2163 = vmatpush1.msra.mxu0 %v2029
  %2164 = vmatprep.subr.mxu0 0.0
  %2165 = vmatpush1.msra.mxu0 %v2028
  %2166 = vmatprep.subr.mxu0 0.0
  %2167 = vmatpush1.msra.mxu0 %v2027
  %2168 = vmatprep.subr.mxu0 0.0
  %2169 = vmatpush1.msra.mxu0 %v2026
  %2170 = vmatprep.subr.mxu0 0.0
  %2171 = vmatpush1.msra.mxu0 %v2025
  %2172 = vmatprep.subr.mxu0 0.0
  %2173 = vmatpush1.msra.mxu0 %v2024
  %2174 = vmatprep.subr.mxu0 0.0
  %2175 = vmatpush1.msra.mxu0 %v2023
  %2176 = vmatprep.subr.mxu0 0.0
  %2177 = vmatpush1.msra.mxu0 %v2022
  %2178 = vmatprep.subr.mxu0 0.0
  %2179 = vmatpush1.msra.mxu0 %v2021
  %2180 = vmatprep.subr.mxu0 0.0
  %2181 = vmatpush2.msra.mxu0 0.0
  %2182 = vmatprep.subr.mxu0 0.0
  %2183 = vmatpush2.msra.mxu0 0.0
  %2184 = vmatprep.subr.mxu0 0.0
  %2185 = vmatpush2.msra.mxu0 0.0
  %2186 = vmatprep.subr.mxu0 0.0
  %2187 = vmatpush2.msra.mxu0 0.0
  %2188 = vmatprep.subr.mxu0 0.0
  %2189 = vmatpush2.msra.mxu0 0.0
  %2190 = vmatprep.subr.mxu0 0.0
  %2191 = vmatpush2.msra.mxu0 0.0
  %2192 = vmatprep.subr.mxu0 0.0
  %2193 = vmatpush2.msra.mxu0 0.0
  %2194 = vmatprep.subr.mxu0 0.0
  %2195 = vmatpush2.msra.mxu0 0.0
  %2196 = vmatprep.subr.mxu0 0.0
  %2197 = vmatpush2.msra.mxu0 0.0
  %2198 = vmatprep.subr.mxu0 0.0
  %2199 = vmatpush2.msra.mxu0 0.0
  %2200 = vmatprep.subr.mxu0 0.0
  %2201 = vmatpush2.msra.mxu0 %v2042
  %2202 = vmatprep.subr.mxu0 0.0
  %2203 = vmatpush2.msra.mxu0 %v2041
  %2204 = vmatprep.subr.mxu0 0.0
  %2205 = vmatpush2.msra.mxu0 %v2040
  %2206 = vmatprep.subr.mxu0 0.0
  %2207 = vmatpush2.msra.mxu0 %v2039
  %2208 = vmatprep.subr.mxu0 0.0
  %2209 = vmatpush2.msra.mxu0 %v2038
  %2210 = vmatprep.subr.mxu0 0.0
  %2211 = vmatpush2.msra.mxu0 %v2037
  %2212 = vmatprep.mubr.f32.mxu0 %v1762
  %2213 = vmatmul.mubr.f32.gmra.mxu0 %v1699
  %v2214 = vpop.f32.mrf.mxu0
  %v2215 = vadd.f32 %v2110, %v2214
  %v2216 = vpop.f32.mrf.mxu0
  %2217 = vmatprep.mubr.f32.mxu0 %v1764
  %2218 = vmatmul.mubr.f32.gmra.mxu0 %v1700
  %v2219 = vpop.f32.mrf.mxu0
  %v2220 = vadd.f32 %v2115, %v2219
  %v2221 = vpop.f32.mrf.mxu0
  %2222 = vmatprep.mubr.f32.mxu0 %v1766
  %2223 = vmatmul.mubr.f32.gmra.mxu0 %v1701
  %v2224 = vpop.f32.mrf.mxu0
  %v2225 = vadd.f32 %v2120, %v2224
  %v2226 = vpop.f32.mrf.mxu0
  %2227 = vmatprep.mubr.f32.mxu0 %v1768
  %2228 = vmatmul.mubr.f32.gmra.mxu0 %v1702
  %v2229 = vpop.f32.mrf.mxu0
  %v2230 = vadd.f32 %v2125, %v2229
  %v2231 = vpop.f32.mrf.mxu0
  %2232 = vmatprep.mubr.f32.mxu0 %v1770
  %2233 = vmatmul.mubr.f32.gmra.mxu0 %v1703
  %v2234 = vpop.f32.mrf.mxu0
  %v2235 = vadd.f32 %v2130, %v2234
  %v2236 = vpop.f32.mrf.mxu0
  %2237 = vmatprep.mubr.f32.mxu0 %v1772
  %2238 = vmatmul.mubr.f32.gmra.mxu0 %v1704
  %v2239 = vpop.f32.mrf.mxu0
  %v2240 = vadd.f32 %v2135, %v2239
  %v2241 = vpop.f32.mrf.mxu0
  %2242 = vmatprep.mubr.f32.mxu0 %v1774
  %2243 = vmatmul.mubr.f32.gmra.mxu0 %v1705
  %v2244 = vpop.f32.mrf.mxu0
  %v2245 = vadd.f32 %v2140, %v2244
  %v2246 = vpop.f32.mrf.mxu0
  %2247 = vmatprep.mubr.f32.mxu0 %v1776
  %2248 = vmatmul.mubr.f32.gmra.mxu0 %v1706
  %v2249 = vpop.f32.mrf.mxu0
  %v2250 = vadd.f32 %v2145, %v2249
  %v2251 = vpop.f32.mrf.mxu0
  %2252 = vdwg.mxu0
  %v2253 = vmax.f32 %v1950, %v2215
  %v2254 = vmax.f32 %v1955, %v2220
  %v2255 = vmax.f32 %v1960, %v2225
  %v2256 = vmax.f32 %v1965, %v2230
  %v2257 = vmax.f32 %v1970, %v2235
  %v2258 = vmax.f32 %v1975, %v2240
  %v2259 = vmax.f32 %v1980, %v2245
  %v2260 = vmax.f32 %v1985, %v2250
  %s2261 = scalar_lea.vmem %s3, 864
  %v2262 = vld [vmem:[%s2261] sm:$0xff]
  %v2263 = vld [vmem:[%s2261 + $0x8] sm:$0xff]
  %v2264 = vld [vmem:[%s2261 + $0x10] sm:$0xff]
  %v2265 = vld [vmem:[%s2261 + $0x18] sm:$0xff]
  %v2266 = vld [vmem:[%s2261 + $0x20] sm:$0xff]
  %v2267 = vld [vmem:[%s2261 + $0x28] sm:$0xff]
  %v2268 = vld [vmem:[%s2261 + $0x30] sm:$0xff]
  %v2269 = vld [vmem:[%s2261 + $0x38] sm:$0xff]
  %v2270 = vld [vmem:[%s2261 + $0x40] sm:$0xff]
  %v2271 = vld [vmem:[%s2261 + $0x48] sm:$0xff]
  %v2272 = vld [vmem:[%s2261 + $0x50] sm:$0xff]
  %v2273 = vld [vmem:[%s2261 + $0x58] sm:$0xff]
  %v2274 = vld [vmem:[%s2261 + $0x60] sm:$0xff]
  %v2275 = vld [vmem:[%s2261 + $0x68] sm:$0xff]
  %v2276 = vld [vmem:[%s2261 + $0x70] sm:$0xff]
  %v2277 = vld [vmem:[%s2261 + $0x78] sm:$0xff]
  %v2278 = vld [vmem:[%s2261 + $0x80] sm:$0xff]
  %v2279 = vld [vmem:[%s2261 + $0x88] sm:$0xff]
  %v2280 = vld [vmem:[%s2261 + $0x90] sm:$0xff]
  %v2281 = vld [vmem:[%s2261 + $0x98] sm:$0xff]
  %v2282 = vld [vmem:[%s2261 + $0xa0] sm:$0xff]
  %v2283 = vld [vmem:[%s2261 + $0xa8] sm:$0xff]
  %v2284 = vld [vmem:[%s2261 + $0xb0] sm:$0xff]
  %v2285 = vld [vmem:[%s2261 + $0xb8] sm:$0xff]
  %v2286 = vld [vmem:[%s2261 + $0xc0] sm:$0xff]
  %v2287 = vld [vmem:[%s2261 + $0xc8] sm:$0xff]
  %v2288 = vld [vmem:[%s2261 + $0xd0] sm:$0xff]
  %v2289 = vld [vmem:[%s2261 + $0xd8] sm:$0xff]
  %v2290 = vld [vmem:[%s2261 + $0xe0] sm:$0xff]
  %v2291 = vld [vmem:[%s2261 + $0xe8] sm:$0xff]
  %v2292 = vld [vmem:[%s2261 + $0xf0] sm:$0xff]
  %v2293 = vld [vmem:[%s2261 + $0xf8] sm:$0xff]
  %v2294 = vld [vmem:[%s2261 + $0x100] sm:$0xff]
  %v2295 = vld [vmem:[%s2261 + $0x108] sm:$0xff]
  %v2296 = vld [vmem:[%s2261 + $0x110] sm:$0xff]
  %v2297 = vld [vmem:[%s2261 + $0x118] sm:$0xff]
  %v2298 = vld [vmem:[%s2261 + $0x120] sm:$0xff]
  %v2299 = vld [vmem:[%s2261 + $0x128] sm:$0xff]
  %v2300 = vld [vmem:[%s2261 + $0x130] sm:$0xff]
  %v2301 = vld [vmem:[%s2261 + $0x138] sm:$0xff]
  %v2302 = vld [vmem:[%s2261 + $0x140] sm:$0xff]
  %v2303 = vld [vmem:[%s2261 + $0x148] sm:$0xff]
  %v2304 = vld [vmem:[%s2261 + $0x150] sm:$0xff]
  %v2305 = vld [vmem:[%s2261 + $0x158] sm:$0xff]
  %v2306 = vld [vmem:[%s2261 + $0x160] sm:$0xff]
  %v2307 = vld [vmem:[%s2261 + $0x168] sm:$0xff]
  %v2308 = vld [vmem:[%s2261 + $0x170] sm:$0xff]
  %v2309 = vld [vmem:[%s2261 + $0x178] sm:$0xff]
  %v2310 = vld [vmem:[%s2261 + $0x180] sm:$0xff]
  %v2311 = vld [vmem:[%s2261 + $0x188] sm:$0xff]
  %v2312 = vld [vmem:[%s2261 + $0x190] sm:$0xff]
  %v2313 = vld [vmem:[%s2261 + $0x198] sm:$0xff]
  %v2314 = vld [vmem:[%s2261 + $0x1a0] sm:$0xff]
  %v2315 = vld [vmem:[%s2261 + $0x1a8] sm:$0xff]
  %2316 = vmatprep.subr.mxu0 0.0
  %2317 = vmatpush1.msra.mxu0 %v2277
  %2318 = vmatprep.subr.mxu0 0.0
  %2319 = vmatpush1.msra.mxu0 %v2276
  %2320 = vmatprep.subr.mxu0 0.0
  %2321 = vmatpush1.msra.mxu0 %v2275
  %2322 = vmatprep.subr.mxu0 0.0
  %2323 = vmatpush1.msra.mxu0 %v2274
  %2324 = vmatprep.subr.mxu0 0.0
  %2325 = vmatpush1.msra.mxu0 %v2273
  %2326 = vmatprep.subr.mxu0 0.0
  %2327 = vmatpush1.msra.mxu0 %v2272
  %2328 = vmatprep.subr.mxu0 0.0
  %2329 = vmatpush1.msra.mxu0 %v2271
  %2330 = vmatprep.subr.mxu0 0.0
  %2331 = vmatpush1.msra.mxu0 %v2270
  %2332 = vmatprep.subr.mxu0 0.0
  %2333 = vmatpush1.msra.mxu0 %v2269
  %2334 = vmatprep.subr.mxu0 0.0
  %2335 = vmatpush1.msra.mxu0 %v2268
  %2336 = vmatprep.subr.mxu0 0.0
  %2337 = vmatpush1.msra.mxu0 %v2267
  %2338 = vmatprep.subr.mxu0 0.0
  %2339 = vmatpush1.msra.mxu0 %v2266
  %2340 = vmatprep.subr.mxu0 0.0
  %2341 = vmatpush1.msra.mxu0 %v2265
  %2342 = vmatprep.subr.mxu0 0.0
  %2343 = vmatpush1.msra.mxu0 %v2264
  %2344 = vmatprep.subr.mxu0 0.0
  %2345 = vmatpush1.msra.mxu0 %v2263
  %2346 = vmatprep.subr.mxu0 0.0
  %2347 = vmatpush1.msra.mxu0 %v2262
  %2348 = vmatprep.subr.mxu0 0.0
  %2349 = vmatpush2.msra.mxu0 %v2293
  %2350 = vmatprep.subr.mxu0 0.0
  %2351 = vmatpush2.msra.mxu0 %v2292
  %2352 = vmatprep.subr.mxu0 0.0
  %2353 = vmatpush2.msra.mxu0 %v2291
  %2354 = vmatprep.subr.mxu0 0.0
  %2355 = vmatpush2.msra.mxu0 %v2290
  %2356 = vmatprep.subr.mxu0 0.0
  %2357 = vmatpush2.msra.mxu0 %v2289
  %2358 = vmatprep.subr.mxu0 0.0
  %2359 = vmatpush2.msra.mxu0 %v2288
  %2360 = vmatprep.subr.mxu0 0.0
  %2361 = vmatpush2.msra.mxu0 %v2287
  %2362 = vmatprep.subr.mxu0 0.0
  %2363 = vmatpush2.msra.mxu0 %v2286
  %2364 = vmatprep.subr.mxu0 0.0
  %2365 = vmatpush2.msra.mxu0 %v2285
  %2366 = vmatprep.subr.mxu0 0.0
  %2367 = vmatpush2.msra.mxu0 %v2284
  %2368 = vmatprep.subr.mxu0 0.0
  %2369 = vmatpush2.msra.mxu0 %v2283
  %2370 = vmatprep.subr.mxu0 0.0
  %2371 = vmatpush2.msra.mxu0 %v2282
  %2372 = vmatprep.subr.mxu0 0.0
  %2373 = vmatpush2.msra.mxu0 %v2281
  %2374 = vmatprep.subr.mxu0 0.0
  %2375 = vmatpush2.msra.mxu0 %v2280
  %2376 = vmatprep.subr.mxu0 0.0
  %2377 = vmatpush2.msra.mxu0 %v2279
  %2378 = vmatprep.subr.mxu0 0.0
  %2379 = vmatpush2.msra.mxu0 %v2278
  %2380 = vmatprep.mubr.f32.mxu0 %v1681
  %2381 = vmatmul.mubr.f32.gmra.mxu0 %v1663
  %v2382 = vpop.f32.mrf.mxu0
  %v2383 = vadd.f32 0.0, %v2382
  %v2384 = vpop.f32.mrf.mxu0
  %2385 = vmatprep.mubr.f32.mxu0 %v1682
  %2386 = vmatmul.mubr.f32.gmra.mxu0 %v1664
  %v2387 = vpop.f32.mrf.mxu0
  %v2388 = vadd.f32 0.0, %v2387
  %v2389 = vpop.f32.mrf.mxu0
  %2390 = vmatprep.mubr.f32.mxu0 %v1683
  %2391 = vmatmul.mubr.f32.gmra.mxu0 %v1665
  %v2392 = vpop.f32.mrf.mxu0
  %v2393 = vadd.f32 0.0, %v2392
  %v2394 = vpop.f32.mrf.mxu0
  %2395 = vmatprep.mubr.f32.mxu0 %v1684
  %2396 = vmatmul.mubr.f32.gmra.mxu0 %v1666
  %v2397 = vpop.f32.mrf.mxu0
  %v2398 = vadd.f32 0.0, %v2397
  %v2399 = vpop.f32.mrf.mxu0
  %2400 = vmatprep.mubr.f32.mxu0 %v1685
  %2401 = vmatmul.mubr.f32.gmra.mxu0 %v1667
  %v2402 = vpop.f32.mrf.mxu0
  %v2403 = vadd.f32 0.0, %v2402
  %v2404 = vpop.f32.mrf.mxu0
  %2405 = vmatprep.mubr.f32.mxu0 %v1686
  %2406 = vmatmul.mubr.f32.gmra.mxu0 %v1668
  %v2407 = vpop.f32.mrf.mxu0
  %v2408 = vadd.f32 0.0, %v2407
  %v2409 = vpop.f32.mrf.mxu0
  %2410 = vmatprep.mubr.f32.mxu0 %v1687
  %2411 = vmatmul.mubr.f32.gmra.mxu0 %v1669
  %v2412 = vpop.f32.mrf.mxu0
  %v2413 = vadd.f32 0.0, %v2412
  %v2414 = vpop.f32.mrf.mxu0
  %2415 = vmatprep.mubr.f32.mxu0 %v1688
  %2416 = vmatmul.mubr.f32.gmra.mxu0 %v1670
  %v2417 = vpop.f32.mrf.mxu0
  %v2418 = vadd.f32 0.0, %v2417
  %v2419 = vpop.f32.mrf.mxu0
  %2420 = vdwg.mxu0
  %2421 = vmatprep.subr.mxu0 0.0
  %2422 = vmatpush1.msra.mxu0 %v2309
  %2423 = vmatprep.subr.mxu0 0.0
  %2424 = vmatpush1.msra.mxu0 %v2308
  %2425 = vmatprep.subr.mxu0 0.0
  %2426 = vmatpush1.msra.mxu0 %v2307
  %2427 = vmatprep.subr.mxu0 0.0
  %2428 = vmatpush1.msra.mxu0 %v2306
  %2429 = vmatprep.subr.mxu0 0.0
  %2430 = vmatpush1.msra.mxu0 %v2305
  %2431 = vmatprep.subr.mxu0 0.0
  %2432 = vmatpush1.msra.mxu0 %v2304
  %2433 = vmatprep.subr.mxu0 0.0
  %2434 = vmatpush1.msra.mxu0 %v2303
  %2435 = vmatprep.subr.mxu0 0.0
  %2436 = vmatpush1.msra.mxu0 %v2302
  %2437 = vmatprep.subr.mxu0 0.0
  %2438 = vmatpush1.msra.mxu0 %v2301
  %2439 = vmatprep.subr.mxu0 0.0
  %2440 = vmatpush1.msra.mxu0 %v2300
  %2441 = vmatprep.subr.mxu0 0.0
  %2442 = vmatpush1.msra.mxu0 %v2299
  %2443 = vmatprep.subr.mxu0 0.0
  %2444 = vmatpush1.msra.mxu0 %v2298
  %2445 = vmatprep.subr.mxu0 0.0
  %2446 = vmatpush1.msra.mxu0 %v2297
  %2447 = vmatprep.subr.mxu0 0.0
  %2448 = vmatpush1.msra.mxu0 %v2296
  %2449 = vmatprep.subr.mxu0 0.0
  %2450 = vmatpush1.msra.mxu0 %v2295
  %2451 = vmatprep.subr.mxu0 0.0
  %2452 = vmatpush1.msra.mxu0 %v2294
  %2453 = vmatprep.subr.mxu0 0.0
  %2454 = vmatpush2.msra.mxu0 0.0
  %2455 = vmatprep.subr.mxu0 0.0
  %2456 = vmatpush2.msra.mxu0 0.0
  %2457 = vmatprep.subr.mxu0 0.0
  %2458 = vmatpush2.msra.mxu0 0.0
  %2459 = vmatprep.subr.mxu0 0.0
  %2460 = vmatpush2.msra.mxu0 0.0
  %2461 = vmatprep.subr.mxu0 0.0
  %2462 = vmatpush2.msra.mxu0 0.0
  %2463 = vmatprep.subr.mxu0 0.0
  %2464 = vmatpush2.msra.mxu0 0.0
  %2465 = vmatprep.subr.mxu0 0.0
  %2466 = vmatpush2.msra.mxu0 0.0
  %2467 = vmatprep.subr.mxu0 0.0
  %2468 = vmatpush2.msra.mxu0 0.0
  %2469 = vmatprep.subr.mxu0 0.0
  %2470 = vmatpush2.msra.mxu0 0.0
  %2471 = vmatprep.subr.mxu0 0.0
  %2472 = vmatpush2.msra.mxu0 0.0
  %2473 = vmatprep.subr.mxu0 0.0
  %2474 = vmatpush2.msra.mxu0 %v2315
  %2475 = vmatprep.subr.mxu0 0.0
  %2476 = vmatpush2.msra.mxu0 %v2314
  %2477 = vmatprep.subr.mxu0 0.0
  %2478 = vmatpush2.msra.mxu0 %v2313
  %2479 = vmatprep.subr.mxu0 0.0
  %2480 = vmatpush2.msra.mxu0 %v2312
  %2481 = vmatprep.subr.mxu0 0.0
  %2482 = vmatpush2.msra.mxu0 %v2311
  %2483 = vmatprep.subr.mxu0 0.0
  %2484 = vmatpush2.msra.mxu0 %v2310
  %2485 = vmatprep.mubr.f32.mxu0 %v1762
  %2486 = vmatmul.mubr.f32.gmra.mxu0 %v1699
  %v2487 = vpop.f32.mrf.mxu0
  %v2488 = vadd.f32 %v2383, %v2487
  %v2489 = vpop.f32.mrf.mxu0
  %2490 = vmatprep.mubr.f32.mxu0 %v1764
  %2491 = vmatmul.mubr.f32.gmra.mxu0 %v1700
  %v2492 = vpop.f32.mrf.mxu0
  %v2493 = vadd.f32 %v2388, %v2492
  %v2494 = vpop.f32.mrf.mxu0
  %2495 = vmatprep.mubr.f32.mxu0 %v1766
  %2496 = vmatmul.mubr.f32.gmra.mxu0 %v1701
  %v2497 = vpop.f32.mrf.mxu0
  %v2498 = vadd.f32 %v2393, %v2497
  %v2499 = vpop.f32.mrf.mxu0
  %2500 = vmatprep.mubr.f32.mxu0 %v1768
  %2501 = vmatmul.mubr.f32.gmra.mxu0 %v1702
  %v2502 = vpop.f32.mrf.mxu0
  %v2503 = vadd.f32 %v2398, %v2502
  %v2504 = vpop.f32.mrf.mxu0
  %2505 = vmatprep.mubr.f32.mxu0 %v1770
  %2506 = vmatmul.mubr.f32.gmra.mxu0 %v1703
  %v2507 = vpop.f32.mrf.mxu0
  %v2508 = vadd.f32 %v2403, %v2507
  %v2509 = vpop.f32.mrf.mxu0
  %2510 = vmatprep.mubr.f32.mxu0 %v1772
  %2511 = vmatmul.mubr.f32.gmra.mxu0 %v1704
  %v2512 = vpop.f32.mrf.mxu0
  %v2513 = vadd.f32 %v2408, %v2512
  %v2514 = vpop.f32.mrf.mxu0
  %2515 = vmatprep.mubr.f32.mxu0 %v1774
  %2516 = vmatmul.mubr.f32.gmra.mxu0 %v1705
  %v2517 = vpop.f32.mrf.mxu0
  %v2518 = vadd.f32 %v2413, %v2517
  %v2519 = vpop.f32.mrf.mxu0
  %2520 = vmatprep.mubr.f32.mxu0 %v1776
  %2521 = vmatmul.mubr.f32.gmra.mxu0 %v1706
  %v2522 = vpop.f32.mrf.mxu0
  %v2523 = vadd.f32 %v2418, %v2522
  %v2524 = vpop.f32.mrf.mxu0
  %2525 = vdwg.mxu0
  %v2526 = vmax.f32 %v2253, %v2488
  %v2527 = vmax.f32 %v2254, %v2493
  %v2528 = vmax.f32 %v2255, %v2498
  %v2529 = vmax.f32 %v2256, %v2503
  %v2530 = vmax.f32 %v2257, %v2508
  %v2531 = vmax.f32 %v2258, %v2513
  %v2532 = vmax.f32 %v2259, %v2518
  %v2533 = vmax.f32 %v2260, %v2523
  %s2534 = scalar_lea.vmem %s3, 1296
  %v2535 = vld [vmem:[%s2534] sm:$0xff]
  %v2536 = vld [vmem:[%s2534 + $0x8] sm:$0xff]
  %v2537 = vld [vmem:[%s2534 + $0x10] sm:$0xff]
  %v2538 = vld [vmem:[%s2534 + $0x18] sm:$0xff]
  %v2539 = vld [vmem:[%s2534 + $0x20] sm:$0xff]
  %v2540 = vld [vmem:[%s2534 + $0x28] sm:$0xff]
  %v2541 = vld [vmem:[%s2534 + $0x30] sm:$0xff]
  %v2542 = vld [vmem:[%s2534 + $0x38] sm:$0xff]
  %v2543 = vld [vmem:[%s2534 + $0x40] sm:$0xff]
  %v2544 = vld [vmem:[%s2534 + $0x48] sm:$0xff]
  %v2545 = vld [vmem:[%s2534 + $0x50] sm:$0xff]
  %v2546 = vld [vmem:[%s2534 + $0x58] sm:$0xff]
  %v2547 = vld [vmem:[%s2534 + $0x60] sm:$0xff]
  %v2548 = vld [vmem:[%s2534 + $0x68] sm:$0xff]
  %v2549 = vld [vmem:[%s2534 + $0x70] sm:$0xff]
  %v2550 = vld [vmem:[%s2534 + $0x78] sm:$0xff]
  %v2551 = vld [vmem:[%s2534 + $0x80] sm:$0xff]
  %v2552 = vld [vmem:[%s2534 + $0x88] sm:$0xff]
  %v2553 = vld [vmem:[%s2534 + $0x90] sm:$0xff]
  %v2554 = vld [vmem:[%s2534 + $0x98] sm:$0xff]
  %v2555 = vld [vmem:[%s2534 + $0xa0] sm:$0xff]
  %v2556 = vld [vmem:[%s2534 + $0xa8] sm:$0xff]
  %v2557 = vld [vmem:[%s2534 + $0xb0] sm:$0xff]
  %v2558 = vld [vmem:[%s2534 + $0xb8] sm:$0xff]
  %v2559 = vld [vmem:[%s2534 + $0xc0] sm:$0xff]
  %v2560 = vld [vmem:[%s2534 + $0xc8] sm:$0xff]
  %v2561 = vld [vmem:[%s2534 + $0xd0] sm:$0xff]
  %v2562 = vld [vmem:[%s2534 + $0xd8] sm:$0xff]
  %v2563 = vld [vmem:[%s2534 + $0xe0] sm:$0xff]
  %v2564 = vld [vmem:[%s2534 + $0xe8] sm:$0xff]
  %v2565 = vld [vmem:[%s2534 + $0xf0] sm:$0xff]
  %v2566 = vld [vmem:[%s2534 + $0xf8] sm:$0xff]
  %v2567 = vld [vmem:[%s2534 + $0x100] sm:$0xff]
  %v2568 = vld [vmem:[%s2534 + $0x108] sm:$0xff]
  %v2569 = vld [vmem:[%s2534 + $0x110] sm:$0xff]
  %v2570 = vld [vmem:[%s2534 + $0x118] sm:$0xff]
  %v2571 = vld [vmem:[%s2534 + $0x120] sm:$0xff]
  %v2572 = vld [vmem:[%s2534 + $0x128] sm:$0xff]
  %v2573 = vld [vmem:[%s2534 + $0x130] sm:$0xff]
  %v2574 = vld [vmem:[%s2534 + $0x138] sm:$0xff]
  %v2575 = vld [vmem:[%s2534 + $0x140] sm:$0xff]
  %v2576 = vld [vmem:[%s2534 + $0x148] sm:$0xff]
  %v2577 = vld [vmem:[%s2534 + $0x150] sm:$0xff]
  %v2578 = vld [vmem:[%s2534 + $0x158] sm:$0xff]
  %v2579 = vld [vmem:[%s2534 + $0x160] sm:$0xff]
  %v2580 = vld [vmem:[%s2534 + $0x168] sm:$0xff]
  %v2581 = vld [vmem:[%s2534 + $0x170] sm:$0xff]
  %v2582 = vld [vmem:[%s2534 + $0x178] sm:$0xff]
  %v2583 = vld [vmem:[%s2534 + $0x180] sm:$0xff]
  %v2584 = vld [vmem:[%s2534 + $0x188] sm:$0xff]
  %v2585 = vld [vmem:[%s2534 + $0x190] sm:$0xff]
  %v2586 = vld [vmem:[%s2534 + $0x198] sm:$0xff]
  %v2587 = vld [vmem:[%s2534 + $0x1a0] sm:$0xff]
  %v2588 = vld [vmem:[%s2534 + $0x1a8] sm:$0xff]
  %2589 = vmatprep.subr.mxu0 0.0
  %2590 = vmatpush1.msra.mxu0 %v2550
  %2591 = vmatprep.subr.mxu0 0.0
  %2592 = vmatpush1.msra.mxu0 %v2549
  %2593 = vmatprep.subr.mxu0 0.0
  %2594 = vmatpush1.msra.mxu0 %v2548
  %2595 = vmatprep.subr.mxu0 0.0
  %2596 = vmatpush1.msra.mxu0 %v2547
  %2597 = vmatprep.subr.mxu0 0.0
  %2598 = vmatpush1.msra.mxu0 %v2546
  %2599 = vmatprep.subr.mxu0 0.0
  %2600 = vmatpush1.msra.mxu0 %v2545
  %2601 = vmatprep.subr.mxu0 0.0
  %2602 = vmatpush1.msra.mxu0 %v2544
  %2603 = vmatprep.subr.mxu0 0.0
  %2604 = vmatpush1.msra.mxu0 %v2543
  %2605 = vmatprep.subr.mxu0 0.0
  %2606 = vmatpush1.msra.mxu0 %v2542
  %2607 = vmatprep.subr.mxu0 0.0
  %2608 = vmatpush1.msra.mxu0 %v2541
  %2609 = vmatprep.subr.mxu0 0.0
  %2610 = vmatpush1.msra.mxu0 %v2540
  %2611 = vmatprep.subr.mxu0 0.0
  %2612 = vmatpush1.msra.mxu0 %v2539
  %2613 = vmatprep.subr.mxu0 0.0
  %2614 = vmatpush1.msra.mxu0 %v2538
  %2615 = vmatprep.subr.mxu0 0.0
  %2616 = vmatpush1.msra.mxu0 %v2537
  %2617 = vmatprep.subr.mxu0 0.0
  %2618 = vmatpush1.msra.mxu0 %v2536
  %2619 = vmatprep.subr.mxu0 0.0
  %2620 = vmatpush1.msra.mxu0 %v2535
  %2621 = vmatprep.subr.mxu0 0.0
  %2622 = vmatpush2.msra.mxu0 %v2566
  %2623 = vmatprep.subr.mxu0 0.0
  %2624 = vmatpush2.msra.mxu0 %v2565
  %2625 = vmatprep.subr.mxu0 0.0
  %2626 = vmatpush2.msra.mxu0 %v2564
  %2627 = vmatprep.subr.mxu0 0.0
  %2628 = vmatpush2.msra.mxu0 %v2563
  %2629 = vmatprep.subr.mxu0 0.0
  %2630 = vmatpush2.msra.mxu0 %v2562
  %2631 = vmatprep.subr.mxu0 0.0
  %2632 = vmatpush2.msra.mxu0 %v2561
  %2633 = vmatprep.subr.mxu0 0.0
  %2634 = vmatpush2.msra.mxu0 %v2560
  %2635 = vmatprep.subr.mxu0 0.0
  %2636 = vmatpush2.msra.mxu0 %v2559
  %2637 = vmatprep.subr.mxu0 0.0
  %2638 = vmatpush2.msra.mxu0 %v2558
  %2639 = vmatprep.subr.mxu0 0.0
  %2640 = vmatpush2.msra.mxu0 %v2557
  %2641 = vmatprep.subr.mxu0 0.0
  %2642 = vmatpush2.msra.mxu0 %v2556
  %2643 = vmatprep.subr.mxu0 0.0
  %2644 = vmatpush2.msra.mxu0 %v2555
  %2645 = vmatprep.subr.mxu0 0.0
  %2646 = vmatpush2.msra.mxu0 %v2554
  %2647 = vmatprep.subr.mxu0 0.0
  %2648 = vmatpush2.msra.mxu0 %v2553
  %2649 = vmatprep.subr.mxu0 0.0
  %2650 = vmatpush2.msra.mxu0 %v2552
  %2651 = vmatprep.subr.mxu0 0.0
  %2652 = vmatpush2.msra.mxu0 %v2551
  %2653 = vmatprep.mubr.f32.mxu0 %v1681
  %2654 = vmatmul.mubr.f32.gmra.mxu0 %v1663
  %v2655 = vpop.f32.mrf.mxu0
  %v2656 = vadd.f32 0.0, %v2655
  %v2657 = vpop.f32.mrf.mxu0
  %2658 = vmatprep.mubr.f32.mxu0 %v1682
  %2659 = vmatmul.mubr.f32.gmra.mxu0 %v1664
  %v2660 = vpop.f32.mrf.mxu0
  %v2661 = vadd.f32 0.0, %v2660
  %v2662 = vpop.f32.mrf.mxu0
  %2663 = vmatprep.mubr.f32.mxu0 %v1683
  %2664 = vmatmul.mubr.f32.gmra.mxu0 %v1665
  %v2665 = vpop.f32.mrf.mxu0
  %v2666 = vadd.f32 0.0, %v2665
  %v2667 = vpop.f32.mrf.mxu0
  %2668 = vmatprep.mubr.f32.mxu0 %v1684
  %2669 = vmatmul.mubr.f32.gmra.mxu0 %v1666
  %v2670 = vpop.f32.mrf.mxu0
  %v2671 = vadd.f32 0.0, %v2670
  %v2672 = vpop.f32.mrf.mxu0
  %2673 = vmatprep.mubr.f32.mxu0 %v1685
  %2674 = vmatmul.mubr.f32.gmra.mxu0 %v1667
  %v2675 = vpop.f32.mrf.mxu0
  %v2676 = vadd.f32 0.0, %v2675
  %v2677 = vpop.f32.mrf.mxu0
  %2678 = vmatprep.mubr.f32.mxu0 %v1686
  %2679 = vmatmul.mubr.f32.gmra.mxu0 %v1668
  %v2680 = vpop.f32.mrf.mxu0
  %v2681 = vadd.f32 0.0, %v2680
  %v2682 = vpop.f32.mrf.mxu0
  %2683 = vmatprep.mubr.f32.mxu0 %v1687
  %2684 = vmatmul.mubr.f32.gmra.mxu0 %v1669
  %v2685 = vpop.f32.mrf.mxu0
  %v2686 = vadd.f32 0.0, %v2685
  %v2687 = vpop.f32.mrf.mxu0
  %2688 = vmatprep.mubr.f32.mxu0 %v1688
  %2689 = vmatmul.mubr.f32.gmra.mxu0 %v1670
  %v2690 = vpop.f32.mrf.mxu0
  %v2691 = vadd.f32 0.0, %v2690
  %v2692 = vpop.f32.mrf.mxu0
  %2693 = vdwg.mxu0
  %2694 = vmatprep.subr.mxu0 0.0
  %2695 = vmatpush1.msra.mxu0 %v2582
  %2696 = vmatprep.subr.mxu0 0.0
  %2697 = vmatpush1.msra.mxu0 %v2581
  %2698 = vmatprep.subr.mxu0 0.0
  %2699 = vmatpush1.msra.mxu0 %v2580
  %2700 = vmatprep.subr.mxu0 0.0
  %2701 = vmatpush1.msra.mxu0 %v2579
  %2702 = vmatprep.subr.mxu0 0.0
  %2703 = vmatpush1.msra.mxu0 %v2578
  %2704 = vmatprep.subr.mxu0 0.0
  %2705 = vmatpush1.msra.mxu0 %v2577
  %2706 = vmatprep.subr.mxu0 0.0
  %2707 = vmatpush1.msra.mxu0 %v2576
  %2708 = vmatprep.subr.mxu0 0.0
  %2709 = vmatpush1.msra.mxu0 %v2575
  %2710 = vmatprep.subr.mxu0 0.0
  %2711 = vmatpush1.msra.mxu0 %v2574
  %2712 = vmatprep.subr.mxu0 0.0
  %2713 = vmatpush1.msra.mxu0 %v2573
  %2714 = vmatprep.subr.mxu0 0.0
  %2715 = vmatpush1.msra.mxu0 %v2572
  %2716 = vmatprep.subr.mxu0 0.0
  %2717 = vmatpush1.msra.mxu0 %v2571
  %2718 = vmatprep.subr.mxu0 0.0
  %2719 = vmatpush1.msra.mxu0 %v2570
  %2720 = vmatprep.subr.mxu0 0.0
  %2721 = vmatpush1.msra.mxu0 %v2569
  %2722 = vmatprep.subr.mxu0 0.0
  %2723 = vmatpush1.msra.mxu0 %v2568
  %2724 = vmatprep.subr.mxu0 0.0
  %2725 = vmatpush1.msra.mxu0 %v2567
  %2726 = vmatprep.subr.mxu0 0.0
  %2727 = vmatpush2.msra.mxu0 0.0
  %2728 = vmatprep.subr.mxu0 0.0
  %2729 = vmatpush2.msra.mxu0 0.0
  %2730 = vmatprep.subr.mxu0 0.0
  %2731 = vmatpush2.msra.mxu0 0.0
  %2732 = vmatprep.subr.mxu0 0.0
  %2733 = vmatpush2.msra.mxu0 0.0
  %2734 = vmatprep.subr.mxu0 0.0
  %2735 = vmatpush2.msra.mxu0 0.0
  %2736 = vmatprep.subr.mxu0 0.0
  %2737 = vmatpush2.msra.mxu0 0.0
  %2738 = vmatprep.subr.mxu0 0.0
  %2739 = vmatpush2.msra.mxu0 0.0
  %2740 = vmatprep.subr.mxu0 0.0
  %2741 = vmatpush2.msra.mxu0 0.0
  %2742 = vmatprep.subr.mxu0 0.0
  %2743 = vmatpush2.msra.mxu0 0.0
  %2744 = vmatprep.subr.mxu0 0.0
  %2745 = vmatpush2.msra.mxu0 0.0
  %2746 = vmatprep.subr.mxu0 0.0
  %2747 = vmatpush2.msra.mxu0 %v2588
  %2748 = vmatprep.subr.mxu0 0.0
  %2749 = vmatpush2.msra.mxu0 %v2587
  %2750 = vmatprep.subr.mxu0 0.0
  %2751 = vmatpush2.msra.mxu0 %v2586
  %2752 = vmatprep.subr.mxu0 0.0
  %2753 = vmatpush2.msra.mxu0 %v2585
  %2754 = vmatprep.subr.mxu0 0.0
  %2755 = vmatpush2.msra.mxu0 %v2584
  %2756 = vmatprep.subr.mxu0 0.0
  %2757 = vmatpush2.msra.mxu0 %v2583
  %2758 = vmatprep.mubr.f32.mxu0 %v1762
  %2759 = vmatmul.mubr.f32.gmra.mxu0 %v1699
  %v2760 = vpop.f32.mrf.mxu0
  %v2761 = vadd.f32 %v2656, %v2760
  %v2762 = vpop.f32.mrf.mxu0
  %2763 = vmatprep.mubr.f32.mxu0 %v1764
  %2764 = vmatmul.mubr.f32.gmra.mxu0 %v1700
  %v2765 = vpop.f32.mrf.mxu0
  %v2766 = vadd.f32 %v2661, %v2765
  %v2767 = vpop.f32.mrf.mxu0
  %2768 = vmatprep.mubr.f32.mxu0 %v1766
  %2769 = vmatmul.mubr.f32.gmra.mxu0 %v1701
  %v2770 = vpop.f32.mrf.mxu0
  %v2771 = vadd.f32 %v2666, %v2770
  %v2772 = vpop.f32.mrf.mxu0
  %2773 = vmatprep.mubr.f32.mxu0 %v1768
  %2774 = vmatmul.mubr.f32.gmra.mxu0 %v1702
  %v2775 = vpop.f32.mrf.mxu0
  %v2776 = vadd.f32 %v2671, %v2775
  %v2777 = vpop.f32.mrf.mxu0
  %2778 = vmatprep.mubr.f32.mxu0 %v1770
  %2779 = vmatmul.mubr.f32.gmra.mxu0 %v1703
  %v2780 = vpop.f32.mrf.mxu0
  %v2781 = vadd.f32 %v2676, %v2780
  %v2782 = vpop.f32.mrf.mxu0
  %2783 = vmatprep.mubr.f32.mxu0 %v1772
  %2784 = vmatmul.mubr.f32.gmra.mxu0 %v1704
  %v2785 = vpop.f32.mrf.mxu0
  %v2786 = vadd.f32 %v2681, %v2785
  %v2787 = vpop.f32.mrf.mxu0
  %2788 = vmatprep.mubr.f32.mxu0 %v1774
  %2789 = vmatmul.mubr.f32.gmra.mxu0 %v1705
  %v2790 = vpop.f32.mrf.mxu0
  %v2791 = vadd.f32 %v2686, %v2790
  %v2792 = vpop.f32.mrf.mxu0
  %2793 = vmatprep.mubr.f32.mxu0 %v1776
  %2794 = vmatmul.mubr.f32.gmra.mxu0 %v1706
  %v2795 = vpop.f32.mrf.mxu0
  %v2796 = vadd.f32 %v2691, %v2795
  %v2797 = vpop.f32.mrf.mxu0
  %2798 = vdwg.mxu0
  %v2799 = vmax.f32 %v2526, %v2761
  %v2800 = vmax.f32 %v2527, %v2766
  %v2801 = vmax.f32 %v2528, %v2771
  %v2802 = vmax.f32 %v2529, %v2776
  %v2803 = vmax.f32 %v2530, %v2781
  %v2804 = vmax.f32 %v2531, %v2786
  %v2805 = vmax.f32 %v2532, %v2791
  %v2806 = vmax.f32 %v2533, %v2796
  %v2807 = vld [vmem:[%s4] sm:$0x1]
  %v2809 = vlaneseq
  %v2810 = vshrl.u32 %v2809, 7
  %v2811 = vsub.s32 0, %v2810
  %v2812 = vrot.slane %v2807, %v2811
  %v2814 = vadd.f32 %v2799, %v2812
  %v2815 = vadd.f32 %v2800, %v2812
  %v2816 = vadd.f32 %v2801, %v2812
  %v2817 = vadd.f32 %v2802, %v2812
  %v2818 = vadd.f32 %v2803, %v2812
  %v2819 = vadd.f32 %v2804, %v2812
  %v2820 = vadd.f32 %v2805, %v2812
  %v2821 = vadd.f32 %v2806, %v2812
  %v2822 = vmax.f32 %v2814, 0.0
  %v2823 = vmax.f32 %v2815, 0.0
  %v2824 = vmax.f32 %v2816, 0.0
  %v2825 = vmax.f32 %v2817, 0.0
  %v2826 = vmax.f32 %v2818, 0.0
  %v2827 = vmax.f32 %v2819, 0.0
  %v2828 = vmax.f32 %v2820, 0.0
  %v2829 = vmax.f32 %v2821, 0.0
  %vm2830 = vcmask 523264
  %2831 = vst.msk [vmem:[#allocation3] sm:$0xff] %vm2830, %v2822
  %2832 = vst.msk [vmem:[#allocation3 + $0x8] sm:$0xff] %vm2830, %v2823
  %2833 = vst.msk [vmem:[#allocation3 + $0x10] sm:$0xff] %vm2830, %v2824
  %2834 = vst.msk [vmem:[#allocation3 + $0x18] sm:$0xff] %vm2830, %v2825
  %2835 = vst.msk [vmem:[#allocation3 + $0x20] sm:$0xff] %vm2830, %v2826
  %2836 = vst.msk [vmem:[#allocation3 + $0x28] sm:$0xff] %vm2830, %v2827
  %2837 = vst.msk [vmem:[#allocation3 + $0x30] sm:$0xff] %vm2830, %v2828
  %2838 = vst.msk [vmem:[#allocation3 + $0x38] sm:$0xff] %vm2830, %v2829
  %v2839 = vld [vmem:[#allocation3] ss:$8 sm:$0xf]
  %v2840 = vld [vmem:[#allocation3] ss:$8 sm:$0xf0]
  %v2841 = vor.u32 %v2839, %v2840
  %s2842 = scalar_lea.vmem [#allocation3], 1
  %v2843 = vld [vmem:[%s2842] ss:$8 sm:$0xf]
  %v2844 = vld [vmem:[%s2842] ss:$8 sm:$0xf0]
  %v2845 = vor.u32 %v2843, %v2844
  %s2846 = scalar_lea.vmem [#allocation3], 2
  %v2847 = vld [vmem:[%s2846] ss:$8 sm:$0xf]
  %v2848 = vld [vmem:[%s2846] ss:$8 sm:$0xf0]
  %v2849 = vor.u32 %v2847, %v2848
  %s2850 = scalar_lea.vmem [#allocation3], 3
  %v2851 = vld [vmem:[%s2850] ss:$8 sm:$0xf]
  %v2852 = vld [vmem:[%s2850] ss:$8 sm:$0xf0]
  %v2853 = vor.u32 %v2851, %v2852
  %2855 = vrot.lane.b32.xlu0 %v2845, 64
  %v2856 = vpop.permute.xlu0 %2855
  %2859 = vrot.lane.b32.xlu0 %v2853, 64
  %v2860 = vpop.permute.xlu0 %2859
  %v2862 = vsel %vm2830, %v2841, %v2856
  %v2863 = vsel %vm2830, %v2849, %v2860
  %v2864 = vld [vmem:[%s5] sm:$0xff]
  %v2865 = vld [vmem:[%s5 + $0x8] sm:$0xff]
  %v2866 = vld [vmem:[%s5 + $0x10] sm:$0xff]
  %v2867 = vld [vmem:[%s5 + $0x18] sm:$0xff]
  %v2868 = vld [vmem:[%s5 + $0x20] sm:$0xff]
  %v2869 = vld [vmem:[%s5 + $0x28] sm:$0xff]
  %v2870 = vld [vmem:[%s5 + $0x30] sm:$0xff]
  %v2871 = vld [vmem:[%s5 + $0x38] sm:$0xff]
  %v2872 = vld [vmem:[%s5 + $0x40] sm:$0xff]
  %v2873 = vld [vmem:[%s5 + $0x48] sm:$0xff]
  %v2874 = vld [vmem:[%s5 + $0x50] sm:$0xff]
  %v2875 = vld [vmem:[%s5 + $0x58] sm:$0xff]
  %v2876 = vld [vmem:[%s5 + $0x60] sm:$0xff]
  %v2877 = vld [vmem:[%s5 + $0x68] sm:$0xff]
  %v2878 = vld [vmem:[%s5 + $0x70] sm:$0xff]
  %v2879 = vld [vmem:[%s5 + $0x78] sm:$0xff]
  %v2880 = vld [vmem:[%s5 + $0x80] sm:$0xff]
  %v2881 = vld [vmem:[%s5 + $0x88] sm:$0xff]
  %v2882 = vld [vmem:[%s5 + $0x90] sm:$0xff]
  %v2883 = vld [vmem:[%s5 + $0x98] sm:$0xff]
  %v2884 = vld [vmem:[%s5 + $0xa0] sm:$0xff]
  %v2885 = vld [vmem:[%s5 + $0xa8] sm:$0xff]
  %v2886 = vld [vmem:[%s5 + $0xb0] sm:$0xff]
  %v2887 = vld [vmem:[%s5 + $0xb8] sm:$0xff]
  %v2888 = vld [vmem:[%s5 + $0xc0] sm:$0xff]
  %v2889 = vld [vmem:[%s5 + $0xc8] sm:$0xff]
  %v2890 = vld [vmem:[%s5 + $0xd0] sm:$0xff]
  %v2891 = vld [vmem:[%s5 + $0xd8] sm:$0xff]
  %v2892 = vld [vmem:[%s5 + $0xe0] sm:$0xff]
  %v2893 = vld [vmem:[%s5 + $0xe8] sm:$0xff]
  %v2894 = vld [vmem:[%s5 + $0xf0] sm:$0xff]
  %v2895 = vld [vmem:[%s5 + $0xf8] sm:$0xff]
  %v2896 = vld [vmem:[%s6] sm:$0x1]
  %v2898 = vlaneseq
  %v2899 = vshrl.u32 %v2898, 7
  %v2900 = vsub.s32 0, %v2899
  %v2901 = vrot.slane %v2896, %v2900
  %2903 = vmatprep.subr.mxu0 0.0
  %2904 = vmatpush1.msra.mxu0 %v2879
  %2905 = vmatprep.subr.mxu0 0.0
  %2906 = vmatpush1.msra.mxu0 %v2878
  %2907 = vmatprep.subr.mxu0 0.0
  %2908 = vmatpush1.msra.mxu0 %v2877
  %2909 = vmatprep.subr.mxu0 0.0
  %2910 = vmatpush1.msra.mxu0 %v2876
  %2911 = vmatprep.subr.mxu0 0.0
  %2912 = vmatpush1.msra.mxu0 %v2875
  %2913 = vmatprep.subr.mxu0 0.0
  %2914 = vmatpush1.msra.mxu0 %v2874
  %2915 = vmatprep.subr.mxu0 0.0
  %2916 = vmatpush1.msra.mxu0 %v2873
  %2917 = vmatprep.subr.mxu0 0.0
  %2918 = vmatpush1.msra.mxu0 %v2872
  %2919 = vmatprep.subr.mxu0 0.0
  %2920 = vmatpush1.msra.mxu0 %v2871
  %2921 = vmatprep.subr.mxu0 0.0
  %2922 = vmatpush1.msra.mxu0 %v2870
  %2923 = vmatprep.subr.mxu0 0.0
  %2924 = vmatpush1.msra.mxu0 %v2869
  %2925 = vmatprep.subr.mxu0 0.0
  %2926 = vmatpush1.msra.mxu0 %v2868
  %2927 = vmatprep.subr.mxu0 0.0
  %2928 = vmatpush1.msra.mxu0 %v2867
  %2929 = vmatprep.subr.mxu0 0.0
  %2930 = vmatpush1.msra.mxu0 %v2866
  %2931 = vmatprep.subr.mxu0 0.0
  %2932 = vmatpush1.msra.mxu0 %v2865
  %2933 = vmatprep.subr.mxu0 0.0
  %2934 = vmatpush1.msra.mxu0 %v2864
  %2935 = vmatprep.subr.mxu0 0.0
  %2936 = vmatpush2.msra.mxu0 %v2895
  %2937 = vmatprep.subr.mxu0 0.0
  %2938 = vmatpush2.msra.mxu0 %v2894
  %2939 = vmatprep.subr.mxu0 0.0
  %2940 = vmatpush2.msra.mxu0 %v2893
  %2941 = vmatprep.subr.mxu0 0.0
  %2942 = vmatpush2.msra.mxu0 %v2892
  %2943 = vmatprep.subr.mxu0 0.0
  %2944 = vmatpush2.msra.mxu0 %v2891
  %2945 = vmatprep.subr.mxu0 0.0
  %2946 = vmatpush2.msra.mxu0 %v2890
  %2947 = vmatprep.subr.mxu0 0.0
  %2948 = vmatpush2.msra.mxu0 %v2889
  %2949 = vmatprep.subr.mxu0 0.0
  %2950 = vmatpush2.msra.mxu0 %v2888
  %2951 = vmatprep.subr.mxu0 0.0
  %2952 = vmatpush2.msra.mxu0 %v2887
  %2953 = vmatprep.subr.mxu0 0.0
  %2954 = vmatpush2.msra.mxu0 %v2886
  %2955 = vmatprep.subr.mxu0 0.0
  %2956 = vmatpush2.msra.mxu0 %v2885
  %2957 = vmatprep.subr.mxu0 0.0
  %2958 = vmatpush2.msra.mxu0 %v2884
  %2959 = vmatprep.subr.mxu0 0.0
  %2960 = vmatpush2.msra.mxu0 %v2883
  %2961 = vmatprep.subr.mxu0 0.0
  %2962 = vmatpush2.msra.mxu0 %v2882
  %2963 = vmatprep.subr.mxu0 0.0
  %2964 = vmatpush2.msra.mxu0 %v2881
  %2965 = vmatprep.subr.mxu0 0.0
  %2966 = vmatpush2.msra.mxu0 %v2880
  %2967 = vmatprep.mubr.f32.mxu0 %v2863
  %2968 = vmatmul.mubr.f32.gmra.mxu0 %v2862
  %v2969 = vpop.f32.mrf.mxu0
  %v2970 = vadd.f32 %v2901, %v2969
  %v2971 = vpop.f32.mrf.mxu0
  %2972 = vdwg.mxu0
  %v2973 = vmax.f32 %v2970, 0.0
  %v2974 = vld [vmem:[%s7] sm:$0xff]
  %v2975 = vld [vmem:[%s7 + $0x8] sm:$0xff]
  %v2976 = vld [vmem:[%s7 + $0x10] sm:$0xff]
  %v2977 = vld [vmem:[%s7 + $0x18] sm:$0xff]
  %v2978 = vld [vmem:[%s7 + $0x20] sm:$0xff]
  %v2979 = vld [vmem:[%s7 + $0x28] sm:$0xff]
  %v2980 = vld [vmem:[%s7 + $0x30] sm:$0xff]
  %v2981 = vld [vmem:[%s7 + $0x38] sm:$0xff]
  %v2982 = vld [vmem:[%s7 + $0x40] sm:$0xff]
  %v2983 = vld [vmem:[%s7 + $0x48] sm:$0xff]
  %v2984 = vld [vmem:[%s7 + $0x50] sm:$0xff]
  %v2985 = vld [vmem:[%s7 + $0x58] sm:$0xff]
  %v2986 = vld [vmem:[%s7 + $0x60] sm:$0xff]
  %v2987 = vld [vmem:[%s7 + $0x68] sm:$0xff]
  %v2988 = vld [vmem:[%s7 + $0x70] sm:$0xff]
  %v2989 = vld [vmem:[%s8] sm:$0x1]
  %v2991 = vlaneseq
  %v2992 = vshrl.u32 %v2991, 7
  %v2993 = vsub.s32 0, %v2992
  %v2994 = vrot.slane %v2989, %v2993
  %vm2996 = vcmask 982016
  %v2998 = vsel %vm2996, %v2973, 0
  %3000 = vmatprep.subr.mxu0 0.0
  %3001 = vmatpush1.msra.mxu0 0.0
  %3002 = vmatprep.subr.mxu0 0.0
  %3003 = vmatpush1.msra.mxu0 %v2988
  %3004 = vmatprep.subr.mxu0 0.0
  %3005 = vmatpush1.msra.mxu0 %v2987
  %3006 = vmatprep.subr.mxu0 0.0
  %3007 = vmatpush1.msra.mxu0 %v2986
  %3008 = vmatprep.subr.mxu0 0.0
  %3009 = vmatpush1.msra.mxu0 %v2985
  %3010 = vmatprep.subr.mxu0 0.0
  %3011 = vmatpush1.msra.mxu0 %v2984
  %3012 = vmatprep.subr.mxu0 0.0
  %3013 = vmatpush1.msra.mxu0 %v2983
  %3014 = vmatprep.subr.mxu0 0.0
  %3015 = vmatpush1.msra.mxu0 %v2982
  %3016 = vmatprep.subr.mxu0 0.0
  %3017 = vmatpush1.msra.mxu0 %v2981
  %3018 = vmatprep.subr.mxu0 0.0
  %3019 = vmatpush1.msra.mxu0 %v2980
  %3020 = vmatprep.subr.mxu0 0.0
  %3021 = vmatpush1.msra.mxu0 %v2979
  %3022 = vmatprep.subr.mxu0 0.0
  %3023 = vmatpush1.msra.mxu0 %v2978
  %3024 = vmatprep.subr.mxu0 0.0
  %3025 = vmatpush1.msra.mxu0 %v2977
  %3026 = vmatprep.subr.mxu0 0.0
  %3027 = vmatpush1.msra.mxu0 %v2976
  %3028 = vmatprep.subr.mxu0 0.0
  %3029 = vmatpush1.msra.mxu0 %v2975
  %3030 = vmatprep.subr.mxu0 0.0
  %3031 = vmatpush1.msra.mxu0 %v2974
  %3032 = vmatprep.subr.mxu0 0.0
  %3033 = vmatpush2.msra.mxu0 0.0
  %3034 = vmatprep.subr.mxu0 0.0
  %3035 = vmatpush2.msra.mxu0 0.0
  %3036 = vmatprep.subr.mxu0 0.0
  %3037 = vmatpush2.msra.mxu0 0.0
  %3038 = vmatprep.subr.mxu0 0.0
  %3039 = vmatpush2.msra.mxu0 0.0
  %3040 = vmatprep.subr.mxu0 0.0
  %3041 = vmatpush2.msra.mxu0 0.0
  %3042 = vmatprep.subr.mxu0 0.0
  %3043 = vmatpush2.msra.mxu0 0.0
  %3044 = vmatprep.subr.mxu0 0.0
  %3045 = vmatpush2.msra.mxu0 0.0
  %3046 = vmatprep.subr.mxu0 0.0
  %3047 = vmatpush2.msra.mxu0 0.0
  %3048 = vmatprep.subr.mxu0 0.0
  %3049 = vmatpush2.msra.mxu0 0.0
  %3050 = vmatprep.subr.mxu0 0.0
  %3051 = vmatpush2.msra.mxu0 0.0
  %3052 = vmatprep.subr.mxu0 0.0
  %3053 = vmatpush2.msra.mxu0 0.0
  %3054 = vmatprep.subr.mxu0 0.0
  %3055 = vmatpush2.msra.mxu0 0.0
  %3056 = vmatprep.subr.mxu0 0.0
  %3057 = vmatpush2.msra.mxu0 0.0
  %3058 = vmatprep.subr.mxu0 0.0
  %3059 = vmatpush2.msra.mxu0 0.0
  %3060 = vmatprep.subr.mxu0 0.0
  %3061 = vmatpush2.msra.mxu0 0.0
  %3062 = vmatprep.subr.mxu0 0.0
  %3063 = vmatpush2.msra.mxu0 0.0
  %3064 = vmatprep.mubr.f32.mxu0 0.0
  %3065 = vmatmul.mubr.f32.gmra.mxu0 %v2998
  %v3066 = vpop.f32.mrf.mxu0
  %v3067 = vadd.f32 %v2994, %v3066
  %v3068 = vpop.f32.mrf.mxu0
  %3069 = vdwg.mxu0
  %v3070 = vmax.f32 %v3067, 0.0
  %v3071 = vld [vmem:[%s9] sm:$0xff]
  %v3072 = vld [vmem:[%s9 + $0x8] sm:$0xff]
  %v3073 = vld [vmem:[%s9 + $0x10] sm:$0xff]
  %v3074 = vld [vmem:[%s9 + $0x18] sm:$0xff]
  %v3075 = vld [vmem:[%s9 + $0x20] sm:$0xff]
  %v3076 = vld [vmem:[%s9 + $0x28] sm:$0xff]
  %v3077 = vld [vmem:[%s9 + $0x30] sm:$0xff]
  %v3078 = vld [vmem:[%s9 + $0x38] sm:$0xff]
  %v3079 = vld [vmem:[%s9 + $0x40] sm:$0xff]
  %v3080 = vld [vmem:[%s9 + $0x48] sm:$0xff]
  %v3081 = vld [vmem:[%s9 + $0x50] sm:$0xf]
  %v3082 = vld [vmem:[%s10] sm:$0x1]
  %v3084 = vlaneseq
  %v3085 = vshrl.u32 %v3084, 7
  %v3086 = vsub.s32 0, %v3085
  %v3087 = vrot.slane %v3082, %v3086
  %v3090 = vsel %vm549, %v3070, 0
  %vm3092 = vcmask 1043456
  %v3094 = vsel %vm3092, %v3081, 0
  %3096 = vmatprep.subr.mxu0 0.0
  %3097 = vmatpush1.msra.mxu0 0.0
  %3098 = vmatprep.subr.mxu0 0.0
  %3099 = vmatpush1.msra.mxu0 0.0
  %3100 = vmatprep.subr.mxu0 0.0
  %3101 = vmatpush1.msra.mxu0 0.0
  %3102 = vmatprep.subr.mxu0 0.0
  %3103 = vmatpush1.msra.mxu0 0.0
  %3104 = vmatprep.subr.mxu0 0.0
  %3105 = vmatpush1.msra.mxu0 0.0
  %3106 = vmatprep.subr.mxu0 0.0
  %3107 = vmatpush1.msra.mxu0 %v3094
  %3108 = vmatprep.subr.mxu0 0.0
  %3109 = vmatpush1.msra.mxu0 %v3080
  %3110 = vmatprep.subr.mxu0 0.0
  %3111 = vmatpush1.msra.mxu0 %v3079
  %3112 = vmatprep.subr.mxu0 0.0
  %3113 = vmatpush1.msra.mxu0 %v3078
  %3114 = vmatprep.subr.mxu0 0.0
  %3115 = vmatpush1.msra.mxu0 %v3077
  %3116 = vmatprep.subr.mxu0 0.0
  %3117 = vmatpush1.msra.mxu0 %v3076
  %3118 = vmatprep.subr.mxu0 0.0
  %3119 = vmatpush1.msra.mxu0 %v3075
  %3120 = vmatprep.subr.mxu0 0.0
  %3121 = vmatpush1.msra.mxu0 %v3074
  %3122 = vmatprep.subr.mxu0 0.0
  %3123 = vmatpush1.msra.mxu0 %v3073
  %3124 = vmatprep.subr.mxu0 0.0
  %3125 = vmatpush1.msra.mxu0 %v3072
  %3126 = vmatprep.subr.mxu0 0.0
  %3127 = vmatpush1.msra.mxu0 %v3071
  %3128 = vmatprep.subr.mxu0 0.0
  %3129 = vmatpush2.msra.mxu0 0.0
  %3130 = vmatprep.subr.mxu0 0.0
  %3131 = vmatpush2.msra.mxu0 0.0
  %3132 = vmatprep.subr.mxu0 0.0
  %3133 = vmatpush2.msra.mxu0 0.0
  %3134 = vmatprep.subr.mxu0 0.0
  %3135 = vmatpush2.msra.mxu0 0.0
  %3136 = vmatprep.subr.mxu0 0.0
  %3137 = vmatpush2.msra.mxu0 0.0
  %3138 = vmatprep.subr.mxu0 0.0
  %3139 = vmatpush2.msra.mxu0 0.0
  %3140 = vmatprep.subr.mxu0 0.0
  %3141 = vmatpush2.msra.mxu0 0.0
  %3142 = vmatprep.subr.mxu0 0.0
  %3143 = vmatpush2.msra.mxu0 0.0
  %3144 = vmatprep.subr.mxu0 0.0
  %3145 = vmatpush2.msra.mxu0 0.0
  %3146 = vmatprep.subr.mxu0 0.0
  %3147 = vmatpush2.msra.mxu0 0.0
  %3148 = vmatprep.subr.mxu0 0.0
  %3149 = vmatpush2.msra.mxu0 0.0
  %3150 = vmatprep.subr.mxu0 0.0
  %3151 = vmatpush2.msra.mxu0 0.0
  %3152 = vmatprep.subr.mxu0 0.0
  %3153 = vmatpush2.msra.mxu0 0.0
  %3154 = vmatprep.subr.mxu0 0.0
  %3155 = vmatpush2.msra.mxu0 0.0
  %3156 = vmatprep.subr.mxu0 0.0
  %3157 = vmatpush2.msra.mxu0 0.0
  %3158 = vmatprep.subr.mxu0 0.0
  %3159 = vmatpush2.msra.mxu0 0.0
  %3160 = vmatprep.mubr.f32.mxu0 0.0
  %3161 = vmatmul.mubr.f32.gmra.mxu0 %v3090
  %v3162 = vpop.f32.mrf.mxu0
  %v3163 = vadd.f32 %v3087, %v3162
  %v3164 = vpop.f32.mrf.mxu0
  %3165 = vdwg.mxu0
  %vm3166 = vcmask 80896
  %3167 = vst.msk [vmem:[%s11] sm:$0xff] %vm3166, %v3163
  // Predicated region
  $region46: #{convnet_forward.1} parent=0 // pred_check
    _
  $region47: #{convnet_forward.1} parent=0 // pred_check_branch
    %3169 = sbr.rel (0) target = $region49
  $region48: #{convnet_forward.1} parent=0 // pred_region
    _
  $region49: #{convnet_forward.1} parent=0 // pred_fallthru
    _
  // Predicated region
  $region50: #{convnet_forward.1} parent=0 // pred_check
    _
  $region51: #{convnet_forward.1} parent=0 // pred_check_branch
    %3171 = sbr.rel (0) target = $region53
  $region52: #{convnet_forward.1} parent=0 // pred_region
    _
  $region53: #{convnet_forward.1} parent=0 // pred_fallthru
    _

</llo_original>
